<compile_context>
chip_gen: v7x
topology: tpu7x:2x2x1
jax: 0.10.0
libtpu: 0.0.40
codegen_flags: <defaults>
</compile_context>

<pallas_src>
import functools

import jax
import jax.numpy as jnp
from jax.experimental import pallas as pl
from jax.experimental.pallas import tpu as pltpu

_LANE = 128


def _round_up(n, m):
    return ((n + m - 1) // m) * m


def _mlp_kernel(x_ref, w1_ref, b1_ref, w2_ref, b2_ref, w3_ref, b3_ref, o_ref):
    # x_ref: (TILE_B, D_in) f32, natural layout straight from HBM.
    # Weights are PyTorch (out, in); biases are (out, 1) columns.
    # Activations are carried lane-dense as (features, TILE_B).
    x = x_ref[...]                                               # (TB, D_in) f32

    # Layer 1: contract the last dims of w1 (4, D_in) and x (TB, D_in) -> (4, TB).
    # This is w1 @ x^T without any host-side transpose of x.
    h1 = jax.lax.dot_general(
        w1_ref[...], x,
        dimension_numbers=(((1,), (1,)), ((), ())),
        preferred_element_type=jnp.float32,
        precision=jax.lax.Precision.HIGHEST)                     # (4, TB)
    h1 = jax.nn.sigmoid(h1 + b1_ref[...])

    h2 = jnp.dot(w2_ref[...], h1,
                 preferred_element_type=jnp.float32,
                 precision=jax.lax.Precision.HIGHEST)            # (8, TB)
    h2 = jax.nn.sigmoid(h2 + b2_ref[...])

    y = jnp.dot(w3_ref[...], h2,
                preferred_element_type=jnp.float32,
                precision=jax.lax.Precision.HIGHEST)             # (n_out, TB)
    y = jax.nn.sigmoid(y + b3_ref[...])

    o_ref[...] = y.astype(o_ref.dtype)


def mlp_forward(x, params, *, tile_b=16384):
    """x: (B, nb_input) f32.  params in PyTorch layout: w (out, in), b (out,).

    Returns (B,) when nb_output == 1, else (B, nb_output) — mirrors the module's
    conditional `squeeze(1)`.
    """
    w1, b1 = params["w1"], params["b1"]   # (4, D_in), (4,)
    w2, b2 = params["w2"], params["b2"]   # (8, 4),    (8,)
    w3, b3 = params["w3"], params["b3"]   # (n_out, 8), (n_out,)

    B, d_in = x.shape
    n_out = w3.shape[0]

    # Lane-dense batch tiling: single grid step for small B, 16K-sample tiles
    # (multiple of 128) for large B so per-step pipeline overhead is amortized.
    tb = min(_round_up(max(tile_b, 1), _LANE), _round_up(B, _LANE))
    grid = (pl.cdiv(B, tb),)

    # Tiny host-side prep only (no per-sample passes over x).
    w1f = w1.astype(jnp.float32)
    w2f = w2.astype(jnp.float32)
    w3f = w3.astype(jnp.float32)
    b1c = b1.reshape(-1, 1).astype(jnp.float32)
    b2c = b2.reshape(-1, 1).astype(jnp.float32)
    b3c = b3.reshape(-1, 1).astype(jnp.float32)

    const = lambda i: (0, 0)   # weights/biases: same block every step -> VMEM-resident

    out = pl.pallas_call(
        _mlp_kernel,
        out_shape=jax.ShapeDtypeStruct((n_out, B), jnp.float32),
        grid=grid,
        in_specs=[
            # x streamed in its natural (B, d_in) layout; BlockSpec double-buffers.
            pl.BlockSpec((tb, d_in), lambda i: (i, 0)),
            pl.BlockSpec(w1f.shape, const),
            pl.BlockSpec(b1c.shape, const),
            pl.BlockSpec(w2f.shape, const),
            pl.BlockSpec(b2c.shape, const),
            pl.BlockSpec(w3f.shape, const),
            pl.BlockSpec(b3c.shape, const),
        ],
        # Lane-dense output block: batch on the 128-wide lane axis.
        out_specs=pl.BlockSpec((n_out, tb), lambda i: (0, i)),
        compiler_params=pltpu.CompilerParams(
            dimension_semantics=("parallel",),      # shard batch tiles across TCs
            vmem_limit_bytes=32 * 1024 * 1024,      # headroom for the x window on v5e
        ),
    )(x.astype(jnp.float32), w1f, b1c, w2f, b2c, w3f, b3c)

    # PyTorch: `if output.shape != torch.Size([1]): output = output.squeeze(1)`
    if n_out == 1:
        return out[0]           # (B,) — plain slice, no transpose pass
    return jnp.transpose(out)   # (B, n_out); squeeze(1) is a no-op when n_out > 1


def init_params(key, nb_input, nb_output):
    """Deterministic init mimicking nn.Linear default (U[-1/sqrt(fan_in), +1/sqrt(fan_in)]),
    stored in PyTorch layout: weight (out, in), bias (out,)."""
    def linear(k, fan_in, fan_out):
        kw, kb = jax.random.split(k)
        bound = 1.0 / jnp.sqrt(float(fan_in))
        w = jax.random.uniform(kw, (fan_out, fan_in), jnp.float32, -bound, bound)
        b = jax.random.uniform(kb, (fan_out,), jnp.float32, -bound, bound)
        return w, b

    k1, k2, k3 = jax.random.split(key, 3)
    w1, b1 = linear(k1, nb_input, 4)
    w2, b2 = linear(k2, 4, 8)
    w3, b3 = linear(k3, 8, nb_output)
    return {"w1": w1, "b1": b1, "w2": w2, "b2": b2, "w3": w3, "b3": b3}


if __name__ == "__main__":
    key = jax.random.PRNGKey(0)
    k_params, k_x = jax.random.split(key)

    nb_input, nb_output = 16, 1
    batch = 512                       # small demo -> single grid step

    params = init_params(k_params, nb_input, nb_output)
    x = jax.random.normal(k_x, (batch, nb_input), jnp.float32)

    fwd = jax.jit(functools.partial(mlp_forward, tile_b=16384))
    y = fwd(x, params)
    jax.block_until_ready(y)

    # Pure-JAX f32 reference (kernel is f32 end-to-end with HIGHEST-precision dots,
    # so this tolerance is very conservative).
    h1 = jax.nn.sigmoid(x @ params["w1"].T + params["b1"])
    h2 = jax.nn.sigmoid(h1 @ params["w2"].T + params["b2"])
    y_ref = jnp.squeeze(jax.nn.sigmoid(h2 @ params["w3"].T + params["b3"]), axis=1)

    assert y.shape == (batch,), y.shape
    assert float(jnp.max(jnp.abs(y - y_ref))) < 2e-2

    print("KERNEL_OK")
</pallas_src>

<mosaic_0001>
module attributes {stable_mosaic.version = 11 : i64} {
  func.func @_mlp_kernel(%arg0: i32, %arg1: memref<512x16xf32, #tpu.memory_space<vmem>>, %arg2: memref<4x16xf32, #tpu.memory_space<vmem>>, %arg3: memref<4x1xf32, #tpu.memory_space<vmem>>, %arg4: memref<8x4xf32, #tpu.memory_space<vmem>>, %arg5: memref<8x1xf32, #tpu.memory_space<vmem>>, %arg6: memref<1x8xf32, #tpu.memory_space<vmem>>, %arg7: memref<1x1xf32, #tpu.memory_space<vmem>>, %arg8: memref<1x512xf32, #tpu.memory_space<vmem>>) attributes {dimension_semantics = [#tpu.dimension_semantics<parallel>], iteration_bounds = array<i64: 1>, scalar_prefetch = 0 : i64, scratch_operands = 0 : i64, tpu.core_type = #tpu.core_type<tc>, window_params = [{transform_indices = @transform_0, window_bounds = array<i64: 512, 16>}, {pipeline_mode = #tpu.pipeline_mode<synchronous>, transform_indices = @transform_1, window_bounds = array<i64: 4, 16>}, {pipeline_mode = #tpu.pipeline_mode<synchronous>, transform_indices = @transform_2, window_bounds = array<i64: 4, 1>}, {pipeline_mode = #tpu.pipeline_mode<synchronous>, transform_indices = @transform_3, window_bounds = array<i64: 8, 4>}, {pipeline_mode = #tpu.pipeline_mode<synchronous>, transform_indices = @transform_4, window_bounds = array<i64: 8, 1>}, {pipeline_mode = #tpu.pipeline_mode<synchronous>, transform_indices = @transform_5, window_bounds = array<i64: 1, 8>}, {pipeline_mode = #tpu.pipeline_mode<synchronous>, transform_indices = @transform_6, window_bounds = array<i64: 1, 1>}, {transform_indices = @transform_7, window_bounds = array<i64: 1, 512>}]} {
    %c0 = arith.constant 0 : index
    %c0_0 = arith.constant 0 : index
    %0 = vector.load %arg1[%c0, %c0_0] : memref<512x16xf32, #tpu.memory_space<vmem>>, vector<512x16xf32>
    %c0_1 = arith.constant 0 : index
    %c0_2 = arith.constant 0 : index
    %1 = vector.load %arg2[%c0_1, %c0_2] : memref<4x16xf32, #tpu.memory_space<vmem>>, vector<4x16xf32>
    %cst = arith.constant dense<0.000000e+00> : vector<4x512xf32>
    %2 = tpu.matmul %1, %0, %cst {dimension_numbers = #tpu.dot_dimension_numbers<[1], [1], [0], [0], [0, 0, 1, 0], [], []>, precision = #tpu.contract_precision<fp32>} : vector<4x16xf32>, vector<512x16xf32>, vector<4x512xf32> -> vector<4x512xf32>
    %c0_3 = arith.constant 0 : index
    %c0_4 = arith.constant 0 : index
    %3 = vector.load %arg3[%c0_3, %c0_4] : memref<4x1xf32, #tpu.memory_space<vmem>>, vector<4x1xf32>
    %4 = vector.broadcast %3 : vector<4x1xf32> to vector<4x512xf32>
    %5 = arith.addf %2, %4 : vector<4x512xf32>
    %6 = arith.negf %5 : vector<4x512xf32>
    %7 = math.exp %6 : vector<4x512xf32>
    %cst_5 = arith.constant 1.000000e+00 : f32
    %8 = vector.broadcast %cst_5 : f32 to vector<4x512xf32>
    %9 = arith.addf %8, %7 : vector<4x512xf32>
    %10 = arith.divf %8, %9 : vector<4x512xf32>
    %c0_6 = arith.constant 0 : index
    %c0_7 = arith.constant 0 : index
    %11 = vector.load %arg4[%c0_6, %c0_7] : memref<8x4xf32, #tpu.memory_space<vmem>>, vector<8x4xf32>
    %cst_8 = arith.constant dense<0.000000e+00> : vector<8x512xf32>
    %12 = tpu.matmul %11, %10, %cst_8 {dimension_numbers = #tpu.dot_dimension_numbers<[1], [0], [0], [1], [0, 0, 1, 1], [], []>, precision = #tpu.contract_precision<fp32>} : vector<8x4xf32>, vector<4x512xf32>, vector<8x512xf32> -> vector<8x512xf32>
    %c0_9 = arith.constant 0 : index
    %c0_10 = arith.constant 0 : index
    %13 = vector.load %arg5[%c0_9, %c0_10] : memref<8x1xf32, #tpu.memory_space<vmem>>, vector<8x1xf32>
    %14 = vector.broadcast %13 : vector<8x1xf32> to vector<8x512xf32>
    %15 = arith.addf %12, %14 : vector<8x512xf32>
    %16 = arith.negf %15 : vector<8x512xf32>
    %17 = math.exp %16 : vector<8x512xf32>
    %cst_11 = arith.constant 1.000000e+00 : f32
    %18 = vector.broadcast %cst_11 : f32 to vector<8x512xf32>
    %19 = arith.addf %18, %17 : vector<8x512xf32>
    %20 = arith.divf %18, %19 : vector<8x512xf32>
    %c0_12 = arith.constant 0 : index
    %c0_13 = arith.constant 0 : index
    %21 = vector.load %arg6[%c0_12, %c0_13] : memref<1x8xf32, #tpu.memory_space<vmem>>, vector<1x8xf32>
    %cst_14 = arith.constant dense<0.000000e+00> : vector<1x512xf32>
    %22 = tpu.matmul %21, %20, %cst_14 {dimension_numbers = #tpu.dot_dimension_numbers<[1], [0], [0], [1], [0, 0, 1, 1], [], []>, precision = #tpu.contract_precision<fp32>} : vector<1x8xf32>, vector<8x512xf32>, vector<1x512xf32> -> vector<1x512xf32>
    %c0_15 = arith.constant 0 : index
    %c0_16 = arith.constant 0 : index
    %23 = vector.load %arg7[%c0_15, %c0_16] : memref<1x1xf32, #tpu.memory_space<vmem>>, vector<1x1xf32>
    %24 = vector.broadcast %23 : vector<1x1xf32> to vector<1x512xf32>
    %25 = arith.addf %22, %24 : vector<1x512xf32>
    %26 = arith.negf %25 : vector<1x512xf32>
    %27 = math.exp %26 : vector<1x512xf32>
    %cst_17 = arith.constant 1.000000e+00 : f32
    %28 = vector.broadcast %cst_17 : f32 to vector<1x512xf32>
    %29 = arith.addf %28, %27 : vector<1x512xf32>
    %30 = arith.divf %28, %29 : vector<1x512xf32>
    %c0_18 = arith.constant 0 : index
    %c0_19 = arith.constant 0 : index
    %31 = vector.load %arg8[%c0_18, %c0_19] : memref<1x512xf32, #tpu.memory_space<vmem>>, vector<1x512xf32>
    tpu.vector_store %arg8[%c0_18, %c0_19], %30 {strides = array<i32>} : memref<1x512xf32, #tpu.memory_space<vmem>>, vector<1x512xf32>,
    return
  }
  func.func @transform_0(%arg0: i32) -> (i32, i32) {
    %c0_i32 = arith.constant 0 : i32
    %c0_i32_0 = arith.constant 0 : i32
    return %arg0, %c0_i32 : i32, i32
  }
  func.func @transform_1(%arg0: i32) -> (i32, i32) {
    %c0_i32 = arith.constant 0 : i32
    %c0_i32_0 = arith.constant 0 : i32
    %c0_i32_1 = arith.constant 0 : i32
    return %c0_i32, %c0_i32_0 : i32, i32
  }
  func.func @transform_2(%arg0: i32) -> (i32, i32) {
    %c0_i32 = arith.constant 0 : i32
    %c0_i32_0 = arith.constant 0 : i32
    %c0_i32_1 = arith.constant 0 : i32
    return %c0_i32, %c0_i32_0 : i32, i32
  }
  func.func @transform_3(%arg0: i32) -> (i32, i32) {
    %c0_i32 = arith.constant 0 : i32
    %c0_i32_0 = arith.constant 0 : i32
    %c0_i32_1 = arith.constant 0 : i32
    return %c0_i32, %c0_i32_0 : i32, i32
  }
  func.func @transform_4(%arg0: i32) -> (i32, i32) {
    %c0_i32 = arith.constant 0 : i32
    %c0_i32_0 = arith.constant 0 : i32
    %c0_i32_1 = arith.constant 0 : i32
    return %c0_i32, %c0_i32_0 : i32, i32
  }
  func.func @transform_5(%arg0: i32) -> (i32, i32) {
    %c0_i32 = arith.constant 0 : i32
    %c0_i32_0 = arith.constant 0 : i32
    %c0_i32_1 = arith.constant 0 : i32
    return %c0_i32, %c0_i32_0 : i32, i32
  }
  func.func @transform_6(%arg0: i32) -> (i32, i32) {
    %c0_i32 = arith.constant 0 : i32
    %c0_i32_0 = arith.constant 0 : i32
    %c0_i32_1 = arith.constant 0 : i32
    return %c0_i32, %c0_i32_0 : i32, i32
  }
  func.func @transform_7(%arg0: i32) -> (i32, i32) {
    %c0_i32 = arith.constant 0 : i32
    %c0_i32_0 = arith.constant 0 : i32
    return %c0_i32, %arg0 : i32, i32
  }
}

</mosaic_0001>

<llo_original>
// kernel: mlp_forward.1
$region0: #{mlp_forward.1}
  #allocation0 [shape = 'u32[]', space=smem, size = 0x4, offset = 0x4, fixed_abs, tag = 'smem constant byte address 0x4 - core index']
  #allocation1 [shape = 'u32[144,128]{1,0:T(1,128)}', space=vmem, size = 0x12000, scoped, tag = 'internal scratch']
  #allocation2 [shape = 'f32[1,1]{1,0:T(1,128)S(1)}', space=vmem, size = 0x200, scoped, tag = 'scoped memory for mlp_forward.1']
  %s0 = inlined_call_operand.vmem [shape: f32[512,16], index: 0, kind: input, shape index: {}]
  %s1 = inlined_call_operand.vmem [shape: f32[4,16], index: 1, kind: input, shape index: {}]
  %s2 = inlined_call_operand.vmem [shape: f32[4,1], index: 2, kind: input, shape index: {}]
  %s3 = inlined_call_operand.vmem [shape: f32[8,4], index: 3, kind: input, shape index: {}]
  %s4 = inlined_call_operand.vmem [shape: f32[8,1], index: 4, kind: input, shape index: {}]
  %s5 = inlined_call_operand.vmem [shape: f32[1,8], index: 5, kind: input, shape index: {}]
  %s6 = inlined_call_operand.<no memory space> [shape: f32[1,1], index: 6, kind: input, shape index: {}]
  %s7 = inlined_call_operand.hbm [shape: f32[1,512], index: 7, kind: output, shape index: {}]
  %s8 = sld [smem:[#allocation0]]
  $region38: #{mlp_forward.1} parent=0
    _
  %s10 = ssub.s32 1, %s8
  %s11 = scalar_select 0, %s10, %s8
  %v12 = vstv %s6
  %13 = vst [vmem:[#allocation2] sm:$0x1] %v12
  $region1: #{mlp_forward.1} parent=0
    #allocation3 [shape = 'u8[2048]{0}', space=vmem, size = 0x800, scoped, tag = 'output window, operand 0, single buffered']
    #allocation4 [shape = 's32[1]{0}', space=sflag, size = 0x4, scoped, tag = 'scoped memory for mlp_forward.1']
    %14 = vsyncpa [#allocation4], 0
    // Predicated region
    $region2: #{mlp_forward.1} parent=1 // pred_check
      _
    $region3: #{mlp_forward.1} parent=1 // pred_check_branch
      %16 = sbr.rel (0) target = $region5
    $region4: #{mlp_forward.1} parent=1 // pred_region
      _
    $region5: #{mlp_forward.1} parent=1 // pred_fallthru
      _
    // Predicated region
    $region6: #{mlp_forward.1} parent=1 // pred_check
      _
    $region7: #{mlp_forward.1} parent=1 // pred_check_branch
      %18 = sbr.rel (0) target = $region9
    $region8: #{mlp_forward.1} parent=1 // pred_region
      _
    $region9: #{mlp_forward.1} parent=1 // pred_fallthru
      _
    // Predicated region
    $region10: #{mlp_forward.1} parent=1 // pred_check
      _
    $region11: #{mlp_forward.1} parent=1 // pred_check_branch
      %20 = sbr.rel (0) target = $region13
    $region12: #{mlp_forward.1} parent=1 // pred_region
      _
    $region13: #{mlp_forward.1} parent=1 // pred_fallthru
      _
    // Predicated region
    $region14: #{mlp_forward.1} parent=1 // pred_check
      _
    $region15: #{mlp_forward.1} parent=1 // pred_check_branch
      %22 = sbr.rel (0) target = $region17
    $region16: #{mlp_forward.1} parent=1 // pred_region
      _
    $region17: #{mlp_forward.1} parent=1 // pred_fallthru
      _
    // Predicated region
    $region18: #{mlp_forward.1} parent=1 // pred_check
      _
    $region19: #{mlp_forward.1} parent=1 // pred_check_branch
      %24 = sbr.rel (0) target = $region21
    $region20: #{mlp_forward.1} parent=1 // pred_region
      _
    $region21: #{mlp_forward.1} parent=1 // pred_fallthru
      _
    // Predicated region
    $region22: #{mlp_forward.1} parent=1 // pred_check
      _
    $region23: #{mlp_forward.1} parent=1 // pred_check_branch
      %26 = sbr.rel (0) target = $region25
    $region24: #{mlp_forward.1} parent=1 // pred_region
      _
    $region25: #{mlp_forward.1} parent=1 // pred_fallthru
      _
    // Predicated region
    $region26: #{mlp_forward.1} parent=1 // pred_check
      _
    $region27: #{mlp_forward.1} parent=1 // pred_check_branch
      %28 = sbr.rel (0) target = $region29
    $region28: #{mlp_forward.1} parent=1 // pred_region
      _
    $region29: #{mlp_forward.1} parent=1 // pred_fallthru
      _
    %v29 = vld [vmem:[%s0] sm:$0xff]
    %v30 = vld [vmem:[%s0 + $0x8] sm:$0xff]
    %v31 = vld [vmem:[%s0 + $0x10] sm:$0xff]
    %v32 = vld [vmem:[%s0 + $0x18] sm:$0xff]
    %v33 = vld [vmem:[%s0 + $0x20] sm:$0xff]
    %v34 = vld [vmem:[%s0 + $0x28] sm:$0xff]
    %v35 = vld [vmem:[%s0 + $0x30] sm:$0xff]
    %v36 = vld [vmem:[%s0 + $0x38] sm:$0xff]
    %v37 = vld [vmem:[%s0 + $0x40] sm:$0xff]
    %v38 = vld [vmem:[%s0 + $0x48] sm:$0xff]
    %v39 = vld [vmem:[%s0 + $0x50] sm:$0xff]
    %v40 = vld [vmem:[%s0 + $0x58] sm:$0xff]
    %v41 = vld [vmem:[%s0 + $0x60] sm:$0xff]
    %v42 = vld [vmem:[%s0 + $0x68] sm:$0xff]
    %v43 = vld [vmem:[%s0 + $0x70] sm:$0xff]
    %v44 = vld [vmem:[%s0 + $0x78] sm:$0xff]
    %v45 = vld [vmem:[%s0 + $0x80] sm:$0xff]
    %v46 = vld [vmem:[%s0 + $0x88] sm:$0xff]
    %v47 = vld [vmem:[%s0 + $0x90] sm:$0xff]
    %v48 = vld [vmem:[%s0 + $0x98] sm:$0xff]
    %v49 = vld [vmem:[%s0 + $0xa0] sm:$0xff]
    %v50 = vld [vmem:[%s0 + $0xa8] sm:$0xff]
    %v51 = vld [vmem:[%s0 + $0xb0] sm:$0xff]
    %v52 = vld [vmem:[%s0 + $0xb8] sm:$0xff]
    %v53 = vld [vmem:[%s0 + $0xc0] sm:$0xff]
    %v54 = vld [vmem:[%s0 + $0xc8] sm:$0xff]
    %v55 = vld [vmem:[%s0 + $0xd0] sm:$0xff]
    %v56 = vld [vmem:[%s0 + $0xd8] sm:$0xff]
    %v57 = vld [vmem:[%s0 + $0xe0] sm:$0xff]
    %v58 = vld [vmem:[%s0 + $0xe8] sm:$0xff]
    %v59 = vld [vmem:[%s0 + $0xf0] sm:$0xff]
    %v60 = vld [vmem:[%s0 + $0xf8] sm:$0xff]
    %v61 = vld [vmem:[%s0 + $0x100] sm:$0xff]
    %v62 = vld [vmem:[%s0 + $0x108] sm:$0xff]
    %v63 = vld [vmem:[%s0 + $0x110] sm:$0xff]
    %v64 = vld [vmem:[%s0 + $0x118] sm:$0xff]
    %v65 = vld [vmem:[%s0 + $0x120] sm:$0xff]
    %v66 = vld [vmem:[%s0 + $0x128] sm:$0xff]
    %v67 = vld [vmem:[%s0 + $0x130] sm:$0xff]
    %v68 = vld [vmem:[%s0 + $0x138] sm:$0xff]
    %v69 = vld [vmem:[%s0 + $0x140] sm:$0xff]
    %v70 = vld [vmem:[%s0 + $0x148] sm:$0xff]
    %v71 = vld [vmem:[%s0 + $0x150] sm:$0xff]
    %v72 = vld [vmem:[%s0 + $0x158] sm:$0xff]
    %v73 = vld [vmem:[%s0 + $0x160] sm:$0xff]
    %v74 = vld [vmem:[%s0 + $0x168] sm:$0xff]
    %v75 = vld [vmem:[%s0 + $0x170] sm:$0xff]
    %v76 = vld [vmem:[%s0 + $0x178] sm:$0xff]
    %v77 = vld [vmem:[%s0 + $0x180] sm:$0xff]
    %v78 = vld [vmem:[%s0 + $0x188] sm:$0xff]
    %v79 = vld [vmem:[%s0 + $0x190] sm:$0xff]
    %v80 = vld [vmem:[%s0 + $0x198] sm:$0xff]
    %v81 = vld [vmem:[%s0 + $0x1a0] sm:$0xff]
    %v82 = vld [vmem:[%s0 + $0x1a8] sm:$0xff]
    %v83 = vld [vmem:[%s0 + $0x1b0] sm:$0xff]
    %v84 = vld [vmem:[%s0 + $0x1b8] sm:$0xff]
    %v85 = vld [vmem:[%s0 + $0x1c0] sm:$0xff]
    %v86 = vld [vmem:[%s0 + $0x1c8] sm:$0xff]
    %v87 = vld [vmem:[%s0 + $0x1d0] sm:$0xff]
    %v88 = vld [vmem:[%s0 + $0x1d8] sm:$0xff]
    %v89 = vld [vmem:[%s0 + $0x1e0] sm:$0xff]
    %v90 = vld [vmem:[%s0 + $0x1e8] sm:$0xff]
    %v91 = vld [vmem:[%s0 + $0x1f0] sm:$0xff]
    %v92 = vld [vmem:[%s0 + $0x1f8] sm:$0xff]
    %v93 = vld [vmem:[%s1] sm:$0xf]
    %v94 = vld [vmem:[%s2] sm:$0xf]
    %96 = vset.pattern.permute.xlu0 0
    %97 = vperm.xlu0 %96, %v94
    %v98 = vpop.permute.xlu0 %97
    %vm100 = vcmask 130048
    %v102 = vsel %vm100, %v93, 0
    %v105 = vsel %vm100, %v29, 0
    %v108 = vsel %vm100, %v30, 0
    %v111 = vsel %vm100, %v31, 0
    %v114 = vsel %vm100, %v32, 0
    %v117 = vsel %vm100, %v33, 0
    %v120 = vsel %vm100, %v34, 0
    %v123 = vsel %vm100, %v35, 0
    %v126 = vsel %vm100, %v36, 0
    %v129 = vsel %vm100, %v37, 0
    %v132 = vsel %vm100, %v38, 0
    %v135 = vsel %vm100, %v39, 0
    %v138 = vsel %vm100, %v40, 0
    %v141 = vsel %vm100, %v41, 0
    %v144 = vsel %vm100, %v42, 0
    %v147 = vsel %vm100, %v43, 0
    %v150 = vsel %vm100, %v44, 0
    %v153 = vsel %vm100, %v45, 0
    %v156 = vsel %vm100, %v46, 0
    %v159 = vsel %vm100, %v47, 0
    %v162 = vsel %vm100, %v48, 0
    %v165 = vsel %vm100, %v49, 0
    %v168 = vsel %vm100, %v50, 0
    %v171 = vsel %vm100, %v51, 0
    %v174 = vsel %vm100, %v52, 0
    %v177 = vsel %vm100, %v53, 0
    %v180 = vsel %vm100, %v54, 0
    %v183 = vsel %vm100, %v55, 0
    %v186 = vsel %vm100, %v56, 0
    %v189 = vsel %vm100, %v57, 0
    %v192 = vsel %vm100, %v58, 0
    %v195 = vsel %vm100, %v59, 0
    %v198 = vsel %vm100, %v60, 0
    %v201 = vsel %vm100, %v61, 0
    %v204 = vsel %vm100, %v62, 0
    %v207 = vsel %vm100, %v63, 0
    %v210 = vsel %vm100, %v64, 0
    %v213 = vsel %vm100, %v65, 0
    %v216 = vsel %vm100, %v66, 0
    %v219 = vsel %vm100, %v67, 0
    %v222 = vsel %vm100, %v68, 0
    %v225 = vsel %vm100, %v69, 0
    %v228 = vsel %vm100, %v70, 0
    %v231 = vsel %vm100, %v71, 0
    %v234 = vsel %vm100, %v72, 0
    %v237 = vsel %vm100, %v73, 0
    %v240 = vsel %vm100, %v74, 0
    %v243 = vsel %vm100, %v75, 0
    %v246 = vsel %vm100, %v76, 0
    %v249 = vsel %vm100, %v77, 0
    %v252 = vsel %vm100, %v78, 0
    %v255 = vsel %vm100, %v79, 0
    %v258 = vsel %vm100, %v80, 0
    %v261 = vsel %vm100, %v81, 0
    %v264 = vsel %vm100, %v82, 0
    %v267 = vsel %vm100, %v83, 0
    %v270 = vsel %vm100, %v84, 0
    %v273 = vsel %vm100, %v85, 0
    %v276 = vsel %vm100, %v86, 0
    %v279 = vsel %vm100, %v87, 0
    %v282 = vsel %vm100, %v88, 0
    %v285 = vsel %vm100, %v89, 0
    %v288 = vsel %vm100, %v90, 0
    %v291 = vsel %vm100, %v91, 0
    %v294 = vsel %vm100, %v92, 0
    %296 = vmatprep.subr.mxu0 0.0
    %v297 = vand.u32 %v105, 4294901760
    %298 = vmatpush1.xpose.msra.mxu0 %v297
    %299 = vmatprep.subr.mxu0 0.0
    %v300 = vand.u32 %v108, 4294901760
    %301 = vmatpush1.xpose.msra.mxu0 %v300
    %302 = vmatprep.subr.mxu0 0.0
    %v303 = vand.u32 %v111, 4294901760
    %304 = vmatpush1.xpose.msra.mxu0 %v303
    %305 = vmatprep.subr.mxu0 0.0
    %v306 = vand.u32 %v114, 4294901760
    %307 = vmatpush1.xpose.msra.mxu0 %v306
    %308 = vmatprep.subr.mxu0 0.0
    %v309 = vand.u32 %v117, 4294901760
    %310 = vmatpush1.xpose.msra.mxu0 %v309
    %311 = vmatprep.subr.mxu0 0.0
    %v312 = vand.u32 %v120, 4294901760
    %313 = vmatpush1.xpose.msra.mxu0 %v312
    %314 = vmatprep.subr.mxu0 0.0
    %v315 = vand.u32 %v123, 4294901760
    %316 = vmatpush1.xpose.msra.mxu0 %v315
    %317 = vmatprep.subr.mxu0 0.0
    %v318 = vand.u32 %v126, 4294901760
    %319 = vmatpush1.xpose.msra.mxu0 %v318
    %320 = vmatprep.subr.mxu0 0.0
    %v321 = vand.u32 %v129, 4294901760
    %322 = vmatpush1.xpose.msra.mxu0 %v321
    %323 = vmatprep.subr.mxu0 0.0
    %v324 = vand.u32 %v132, 4294901760
    %325 = vmatpush1.xpose.msra.mxu0 %v324
    %326 = vmatprep.subr.mxu0 0.0
    %v327 = vand.u32 %v135, 4294901760
    %328 = vmatpush1.xpose.msra.mxu0 %v327
    %329 = vmatprep.subr.mxu0 0.0
    %v330 = vand.u32 %v138, 4294901760
    %331 = vmatpush1.xpose.msra.mxu0 %v330
    %332 = vmatprep.subr.mxu0 0.0
    %v333 = vand.u32 %v141, 4294901760
    %334 = vmatpush1.xpose.msra.mxu0 %v333
    %335 = vmatprep.subr.mxu0 0.0
    %v336 = vand.u32 %v144, 4294901760
    %337 = vmatpush1.xpose.msra.mxu0 %v336
    %338 = vmatprep.subr.mxu0 0.0
    %v339 = vand.u32 %v147, 4294901760
    %340 = vmatpush1.xpose.msra.mxu0 %v339
    %341 = vmatprep.subr.mxu0 0.0
    %v342 = vand.u32 %v150, 4294901760
    %343 = vmatpush1.xpose.msra.mxu0 %v342
    %344 = vmatprep.subr.mxu0 0.0
    %v345 = vand.u32 %v153, 4294901760
    %346 = vmatpush1.xpose.msra.mxu0 %v345
    %347 = vmatprep.subr.mxu0 0.0
    %v348 = vand.u32 %v156, 4294901760
    %349 = vmatpush1.xpose.msra.mxu0 %v348
    %350 = vmatprep.subr.mxu0 0.0
    %v351 = vand.u32 %v159, 4294901760
    %352 = vmatpush1.xpose.msra.mxu0 %v351
    %353 = vmatprep.subr.mxu0 0.0
    %v354 = vand.u32 %v162, 4294901760
    %355 = vmatpush1.xpose.msra.mxu0 %v354
    %356 = vmatprep.subr.mxu0 0.0
    %v357 = vand.u32 %v165, 4294901760
    %358 = vmatpush1.xpose.msra.mxu0 %v357
    %359 = vmatprep.subr.mxu0 0.0
    %v360 = vand.u32 %v168, 4294901760
    %361 = vmatpush1.xpose.msra.mxu0 %v360
    %362 = vmatprep.subr.mxu0 0.0
    %v363 = vand.u32 %v171, 4294901760
    %364 = vmatpush1.xpose.msra.mxu0 %v363
    %365 = vmatprep.subr.mxu0 0.0
    %v366 = vand.u32 %v174, 4294901760
    %367 = vmatpush1.xpose.msra.mxu0 %v366
    %368 = vmatprep.subr.mxu0 0.0
    %v369 = vand.u32 %v177, 4294901760
    %370 = vmatpush1.xpose.msra.mxu0 %v369
    %371 = vmatprep.subr.mxu0 0.0
    %v372 = vand.u32 %v180, 4294901760
    %373 = vmatpush1.xpose.msra.mxu0 %v372
    %374 = vmatprep.subr.mxu0 0.0
    %v375 = vand.u32 %v183, 4294901760
    %376 = vmatpush1.xpose.msra.mxu0 %v375
    %377 = vmatprep.subr.mxu0 0.0
    %v378 = vand.u32 %v186, 4294901760
    %379 = vmatpush1.xpose.msra.mxu0 %v378
    %380 = vmatprep.subr.mxu0 0.0
    %v381 = vand.u32 %v189, 4294901760
    %382 = vmatpush1.xpose.msra.mxu0 %v381
    %383 = vmatprep.subr.mxu0 0.0
    %v384 = vand.u32 %v192, 4294901760
    %385 = vmatpush1.xpose.msra.mxu0 %v384
    %386 = vmatprep.subr.mxu0 0.0
    %v387 = vand.u32 %v195, 4294901760
    %388 = vmatpush1.xpose.msra.mxu0 %v387
    %389 = vmatprep.subr.mxu0 0.0
    %v390 = vand.u32 %v198, 4294901760
    %391 = vmatpush1.xpose.msra.mxu0 %v390
    %392 = vmatprep.mubr.f32.mxu0 0.0
    %v393 = vand.u32 %v102, 4294901760
    %v394 = vsub.f32 %v102, %v393
    %v395 = vand.u32 %v394, 4294901760
    %v396 = vsub.f32 %v394, %v395
    %v397 = vand.u32 %v396, 4294901760
    %398 = vmatmul.mubr.f32.gmra.mrb[0].mxu0 %v397
    %v399 = vpop.f32.mrb[0].mxu0
    %v400 = vadd.f32 %v98, %v399
    %v401 = vpop.f32.mrb[0].mxu0
    %v402 = vadd.f32 %v98, %v401
    %403 = vdwg.mxu0
    %404 = vmatprep.subr.mxu0 0.0
    %v405 = vand.u32 %v105, 4294901760
    %v406 = vsub.f32 %v105, %v405
    %v407 = vand.u32 %v406, 4294901760
    %v408 = vsub.f32 %v406, %v407
    %v409 = vand.u32 %v408, 4294901760
    %410 = vmatpush1.xpose.msra.mxu0 %v409
    %411 = vmatprep.subr.mxu0 0.0
    %v412 = vand.u32 %v108, 4294901760
    %v413 = vsub.f32 %v108, %v412
    %v414 = vand.u32 %v413, 4294901760
    %v415 = vsub.f32 %v413, %v414
    %v416 = vand.u32 %v415, 4294901760
    %417 = vmatpush1.xpose.msra.mxu0 %v416
    %418 = vmatprep.subr.mxu0 0.0
    %v419 = vand.u32 %v111, 4294901760
    %v420 = vsub.f32 %v111, %v419
    %v421 = vand.u32 %v420, 4294901760
    %v422 = vsub.f32 %v420, %v421
    %v423 = vand.u32 %v422, 4294901760
    %424 = vmatpush1.xpose.msra.mxu0 %v423
    %425 = vmatprep.subr.mxu0 0.0
    %v426 = vand.u32 %v114, 4294901760
    %v427 = vsub.f32 %v114, %v426
    %v428 = vand.u32 %v427, 4294901760
    %v429 = vsub.f32 %v427, %v428
    %v430 = vand.u32 %v429, 4294901760
    %431 = vmatpush1.xpose.msra.mxu0 %v430
    %432 = vmatprep.subr.mxu0 0.0
    %v433 = vand.u32 %v117, 4294901760
    %v434 = vsub.f32 %v117, %v433
    %v435 = vand.u32 %v434, 4294901760
    %v436 = vsub.f32 %v434, %v435
    %v437 = vand.u32 %v436, 4294901760
    %438 = vmatpush1.xpose.msra.mxu0 %v437
    %439 = vmatprep.subr.mxu0 0.0
    %v440 = vand.u32 %v120, 4294901760
    %v441 = vsub.f32 %v120, %v440
    %v442 = vand.u32 %v441, 4294901760
    %v443 = vsub.f32 %v441, %v442
    %v444 = vand.u32 %v443, 4294901760
    %445 = vmatpush1.xpose.msra.mxu0 %v444
    %446 = vmatprep.subr.mxu0 0.0
    %v447 = vand.u32 %v123, 4294901760
    %v448 = vsub.f32 %v123, %v447
    %v449 = vand.u32 %v448, 4294901760
    %v450 = vsub.f32 %v448, %v449
    %v451 = vand.u32 %v450, 4294901760
    %452 = vmatpush1.xpose.msra.mxu0 %v451
    %453 = vmatprep.subr.mxu0 0.0
    %v454 = vand.u32 %v126, 4294901760
    %v455 = vsub.f32 %v126, %v454
    %v456 = vand.u32 %v455, 4294901760
    %v457 = vsub.f32 %v455, %v456
    %v458 = vand.u32 %v457, 4294901760
    %459 = vmatpush1.xpose.msra.mxu0 %v458
    %460 = vmatprep.subr.mxu0 0.0
    %v461 = vand.u32 %v129, 4294901760
    %v462 = vsub.f32 %v129, %v461
    %v463 = vand.u32 %v462, 4294901760
    %v464 = vsub.f32 %v462, %v463
    %v465 = vand.u32 %v464, 4294901760
    %466 = vmatpush1.xpose.msra.mxu0 %v465
    %467 = vmatprep.subr.mxu0 0.0
    %v468 = vand.u32 %v132, 4294901760
    %v469 = vsub.f32 %v132, %v468
    %v470 = vand.u32 %v469, 4294901760
    %v471 = vsub.f32 %v469, %v470
    %v472 = vand.u32 %v471, 4294901760
    %473 = vmatpush1.xpose.msra.mxu0 %v472
    %474 = vmatprep.subr.mxu0 0.0
    %v475 = vand.u32 %v135, 4294901760
    %v476 = vsub.f32 %v135, %v475
    %v477 = vand.u32 %v476, 4294901760
    %v478 = vsub.f32 %v476, %v477
    %v479 = vand.u32 %v478, 4294901760
    %480 = vmatpush1.xpose.msra.mxu0 %v479
    %481 = vmatprep.subr.mxu0 0.0
    %v482 = vand.u32 %v138, 4294901760
    %v483 = vsub.f32 %v138, %v482
    %v484 = vand.u32 %v483, 4294901760
    %v485 = vsub.f32 %v483, %v484
    %v486 = vand.u32 %v485, 4294901760
    %487 = vmatpush1.xpose.msra.mxu0 %v486
    %488 = vmatprep.subr.mxu0 0.0
    %v489 = vand.u32 %v141, 4294901760
    %v490 = vsub.f32 %v141, %v489
    %v491 = vand.u32 %v490, 4294901760
    %v492 = vsub.f32 %v490, %v491
    %v493 = vand.u32 %v492, 4294901760
    %494 = vmatpush1.xpose.msra.mxu0 %v493
    %495 = vmatprep.subr.mxu0 0.0
    %v496 = vand.u32 %v144, 4294901760
    %v497 = vsub.f32 %v144, %v496
    %v498 = vand.u32 %v497, 4294901760
    %v499 = vsub.f32 %v497, %v498
    %v500 = vand.u32 %v499, 4294901760
    %501 = vmatpush1.xpose.msra.mxu0 %v500
    %502 = vmatprep.subr.mxu0 0.0
    %v503 = vand.u32 %v147, 4294901760
    %v504 = vsub.f32 %v147, %v503
    %v505 = vand.u32 %v504, 4294901760
    %v506 = vsub.f32 %v504, %v505
    %v507 = vand.u32 %v506, 4294901760
    %508 = vmatpush1.xpose.msra.mxu0 %v507
    %509 = vmatprep.subr.mxu0 0.0
    %v510 = vand.u32 %v150, 4294901760
    %v511 = vsub.f32 %v150, %v510
    %v512 = vand.u32 %v511, 4294901760
    %v513 = vsub.f32 %v511, %v512
    %v514 = vand.u32 %v513, 4294901760
    %515 = vmatpush1.xpose.msra.mxu0 %v514
    %516 = vmatprep.subr.mxu0 0.0
    %v517 = vand.u32 %v153, 4294901760
    %v518 = vsub.f32 %v153, %v517
    %v519 = vand.u32 %v518, 4294901760
    %v520 = vsub.f32 %v518, %v519
    %v521 = vand.u32 %v520, 4294901760
    %522 = vmatpush1.xpose.msra.mxu0 %v521
    %523 = vmatprep.subr.mxu0 0.0
    %v524 = vand.u32 %v156, 4294901760
    %v525 = vsub.f32 %v156, %v524
    %v526 = vand.u32 %v525, 4294901760
    %v527 = vsub.f32 %v525, %v526
    %v528 = vand.u32 %v527, 4294901760
    %529 = vmatpush1.xpose.msra.mxu0 %v528
    %530 = vmatprep.subr.mxu0 0.0
    %v531 = vand.u32 %v159, 4294901760
    %v532 = vsub.f32 %v159, %v531
    %v533 = vand.u32 %v532, 4294901760
    %v534 = vsub.f32 %v532, %v533
    %v535 = vand.u32 %v534, 4294901760
    %536 = vmatpush1.xpose.msra.mxu0 %v535
    %537 = vmatprep.subr.mxu0 0.0
    %v538 = vand.u32 %v162, 4294901760
    %v539 = vsub.f32 %v162, %v538
    %v540 = vand.u32 %v539, 4294901760
    %v541 = vsub.f32 %v539, %v540
    %v542 = vand.u32 %v541, 4294901760
    %543 = vmatpush1.xpose.msra.mxu0 %v542
    %544 = vmatprep.subr.mxu0 0.0
    %v545 = vand.u32 %v165, 4294901760
    %v546 = vsub.f32 %v165, %v545
    %v547 = vand.u32 %v546, 4294901760
    %v548 = vsub.f32 %v546, %v547
    %v549 = vand.u32 %v548, 4294901760
    %550 = vmatpush1.xpose.msra.mxu0 %v549
    %551 = vmatprep.subr.mxu0 0.0
    %v552 = vand.u32 %v168, 4294901760
    %v553 = vsub.f32 %v168, %v552
    %v554 = vand.u32 %v553, 4294901760
    %v555 = vsub.f32 %v553, %v554
    %v556 = vand.u32 %v555, 4294901760
    %557 = vmatpush1.xpose.msra.mxu0 %v556
    %558 = vmatprep.subr.mxu0 0.0
    %v559 = vand.u32 %v171, 4294901760
    %v560 = vsub.f32 %v171, %v559
    %v561 = vand.u32 %v560, 4294901760
    %v562 = vsub.f32 %v560, %v561
    %v563 = vand.u32 %v562, 4294901760
    %564 = vmatpush1.xpose.msra.mxu0 %v563
    %565 = vmatprep.subr.mxu0 0.0
    %v566 = vand.u32 %v174, 4294901760
    %v567 = vsub.f32 %v174, %v566
    %v568 = vand.u32 %v567, 4294901760
    %v569 = vsub.f32 %v567, %v568
    %v570 = vand.u32 %v569, 4294901760
    %571 = vmatpush1.xpose.msra.mxu0 %v570
    %572 = vmatprep.subr.mxu0 0.0
    %v573 = vand.u32 %v177, 4294901760
    %v574 = vsub.f32 %v177, %v573
    %v575 = vand.u32 %v574, 4294901760
    %v576 = vsub.f32 %v574, %v575
    %v577 = vand.u32 %v576, 4294901760
    %578 = vmatpush1.xpose.msra.mxu0 %v577
    %579 = vmatprep.subr.mxu0 0.0
    %v580 = vand.u32 %v180, 4294901760
    %v581 = vsub.f32 %v180, %v580
    %v582 = vand.u32 %v581, 4294901760
    %v583 = vsub.f32 %v581, %v582
    %v584 = vand.u32 %v583, 4294901760
    %585 = vmatpush1.xpose.msra.mxu0 %v584
    %586 = vmatprep.subr.mxu0 0.0
    %v587 = vand.u32 %v183, 4294901760
    %v588 = vsub.f32 %v183, %v587
    %v589 = vand.u32 %v588, 4294901760
    %v590 = vsub.f32 %v588, %v589
    %v591 = vand.u32 %v590, 4294901760
    %592 = vmatpush1.xpose.msra.mxu0 %v591
    %593 = vmatprep.subr.mxu0 0.0
    %v594 = vand.u32 %v186, 4294901760
    %v595 = vsub.f32 %v186, %v594
    %v596 = vand.u32 %v595, 4294901760
    %v597 = vsub.f32 %v595, %v596
    %v598 = vand.u32 %v597, 4294901760
    %599 = vmatpush1.xpose.msra.mxu0 %v598
    %600 = vmatprep.subr.mxu0 0.0
    %v601 = vand.u32 %v189, 4294901760
    %v602 = vsub.f32 %v189, %v601
    %v603 = vand.u32 %v602, 4294901760
    %v604 = vsub.f32 %v602, %v603
    %v605 = vand.u32 %v604, 4294901760
    %606 = vmatpush1.xpose.msra.mxu0 %v605
    %607 = vmatprep.subr.mxu0 0.0
    %v608 = vand.u32 %v192, 4294901760
    %v609 = vsub.f32 %v192, %v608
    %v610 = vand.u32 %v609, 4294901760
    %v611 = vsub.f32 %v609, %v610
    %v612 = vand.u32 %v611, 4294901760
    %613 = vmatpush1.xpose.msra.mxu0 %v612
    %614 = vmatprep.subr.mxu0 0.0
    %v615 = vand.u32 %v195, 4294901760
    %v616 = vsub.f32 %v195, %v615
    %v617 = vand.u32 %v616, 4294901760
    %v618 = vsub.f32 %v616, %v617
    %v619 = vand.u32 %v618, 4294901760
    %620 = vmatpush1.xpose.msra.mxu0 %v619
    %621 = vmatprep.subr.mxu0 0.0
    %v622 = vand.u32 %v198, 4294901760
    %v623 = vsub.f32 %v198, %v622
    %v624 = vand.u32 %v623, 4294901760
    %v625 = vsub.f32 %v623, %v624
    %v626 = vand.u32 %v625, 4294901760
    %627 = vmatpush1.xpose.msra.mxu0 %v626
    %628 = vmatprep.mubr.f32.mxu0 0.0
    %v629 = vand.u32 %v102, 4294901760
    %630 = vmatmul.mubr.f32.gmra.mrb[0].mxu0 %v629
    %v631 = vpop.f32.mrb[0].mxu0
    %v632 = vadd.f32 %v400, %v631
    %v633 = vpop.f32.mrb[0].mxu0
    %v634 = vadd.f32 %v402, %v633
    %635 = vdwg.mxu0
    %636 = vmatprep.subr.mxu0 0.0
    %v637 = vand.u32 %v105, 4294901760
    %v638 = vsub.f32 %v105, %v637
    %639 = vmatpush1.xpose.msra.mxu0 %v638
    %640 = vmatprep.subr.mxu0 0.0
    %v641 = vand.u32 %v108, 4294901760
    %v642 = vsub.f32 %v108, %v641
    %643 = vmatpush1.xpose.msra.mxu0 %v642
    %644 = vmatprep.subr.mxu0 0.0
    %v645 = vand.u32 %v111, 4294901760
    %v646 = vsub.f32 %v111, %v645
    %647 = vmatpush1.xpose.msra.mxu0 %v646
    %648 = vmatprep.subr.mxu0 0.0
    %v649 = vand.u32 %v114, 4294901760
    %v650 = vsub.f32 %v114, %v649
    %651 = vmatpush1.xpose.msra.mxu0 %v650
    %652 = vmatprep.subr.mxu0 0.0
    %v653 = vand.u32 %v117, 4294901760
    %v654 = vsub.f32 %v117, %v653
    %655 = vmatpush1.xpose.msra.mxu0 %v654
    %656 = vmatprep.subr.mxu0 0.0
    %v657 = vand.u32 %v120, 4294901760
    %v658 = vsub.f32 %v120, %v657
    %659 = vmatpush1.xpose.msra.mxu0 %v658
    %660 = vmatprep.subr.mxu0 0.0
    %v661 = vand.u32 %v123, 4294901760
    %v662 = vsub.f32 %v123, %v661
    %663 = vmatpush1.xpose.msra.mxu0 %v662
    %664 = vmatprep.subr.mxu0 0.0
    %v665 = vand.u32 %v126, 4294901760
    %v666 = vsub.f32 %v126, %v665
    %667 = vmatpush1.xpose.msra.mxu0 %v666
    %668 = vmatprep.subr.mxu0 0.0
    %v669 = vand.u32 %v129, 4294901760
    %v670 = vsub.f32 %v129, %v669
    %671 = vmatpush1.xpose.msra.mxu0 %v670
    %672 = vmatprep.subr.mxu0 0.0
    %v673 = vand.u32 %v132, 4294901760
    %v674 = vsub.f32 %v132, %v673
    %675 = vmatpush1.xpose.msra.mxu0 %v674
    %676 = vmatprep.subr.mxu0 0.0
    %v677 = vand.u32 %v135, 4294901760
    %v678 = vsub.f32 %v135, %v677
    %679 = vmatpush1.xpose.msra.mxu0 %v678
    %680 = vmatprep.subr.mxu0 0.0
    %v681 = vand.u32 %v138, 4294901760
    %v682 = vsub.f32 %v138, %v681
    %683 = vmatpush1.xpose.msra.mxu0 %v682
    %684 = vmatprep.subr.mxu0 0.0
    %v685 = vand.u32 %v141, 4294901760
    %v686 = vsub.f32 %v141, %v685
    %687 = vmatpush1.xpose.msra.mxu0 %v686
    %688 = vmatprep.subr.mxu0 0.0
    %v689 = vand.u32 %v144, 4294901760
    %v690 = vsub.f32 %v144, %v689
    %691 = vmatpush1.xpose.msra.mxu0 %v690
    %692 = vmatprep.subr.mxu0 0.0
    %v693 = vand.u32 %v147, 4294901760
    %v694 = vsub.f32 %v147, %v693
    %695 = vmatpush1.xpose.msra.mxu0 %v694
    %696 = vmatprep.subr.mxu0 0.0
    %v697 = vand.u32 %v150, 4294901760
    %v698 = vsub.f32 %v150, %v697
    %699 = vmatpush1.xpose.msra.mxu0 %v698
    %700 = vmatprep.subr.mxu0 0.0
    %v701 = vand.u32 %v153, 4294901760
    %v702 = vsub.f32 %v153, %v701
    %703 = vmatpush1.xpose.msra.mxu0 %v702
    %704 = vmatprep.subr.mxu0 0.0
    %v705 = vand.u32 %v156, 4294901760
    %v706 = vsub.f32 %v156, %v705
    %707 = vmatpush1.xpose.msra.mxu0 %v706
    %708 = vmatprep.subr.mxu0 0.0
    %v709 = vand.u32 %v159, 4294901760
    %v710 = vsub.f32 %v159, %v709
    %711 = vmatpush1.xpose.msra.mxu0 %v710
    %712 = vmatprep.subr.mxu0 0.0
    %v713 = vand.u32 %v162, 4294901760
    %v714 = vsub.f32 %v162, %v713
    %715 = vmatpush1.xpose.msra.mxu0 %v714
    %716 = vmatprep.subr.mxu0 0.0
    %v717 = vand.u32 %v165, 4294901760
    %v718 = vsub.f32 %v165, %v717
    %719 = vmatpush1.xpose.msra.mxu0 %v718
    %720 = vmatprep.subr.mxu0 0.0
    %v721 = vand.u32 %v168, 4294901760
    %v722 = vsub.f32 %v168, %v721
    %723 = vmatpush1.xpose.msra.mxu0 %v722
    %724 = vmatprep.subr.mxu0 0.0
    %v725 = vand.u32 %v171, 4294901760
    %v726 = vsub.f32 %v171, %v725
    %727 = vmatpush1.xpose.msra.mxu0 %v726
    %728 = vmatprep.subr.mxu0 0.0
    %v729 = vand.u32 %v174, 4294901760
    %v730 = vsub.f32 %v174, %v729
    %731 = vmatpush1.xpose.msra.mxu0 %v730
    %732 = vmatprep.subr.mxu0 0.0
    %v733 = vand.u32 %v177, 4294901760
    %v734 = vsub.f32 %v177, %v733
    %735 = vmatpush1.xpose.msra.mxu0 %v734
    %736 = vmatprep.subr.mxu0 0.0
    %v737 = vand.u32 %v180, 4294901760
    %v738 = vsub.f32 %v180, %v737
    %739 = vmatpush1.xpose.msra.mxu0 %v738
    %740 = vmatprep.subr.mxu0 0.0
    %v741 = vand.u32 %v183, 4294901760
    %v742 = vsub.f32 %v183, %v741
    %743 = vmatpush1.xpose.msra.mxu0 %v742
    %744 = vmatprep.subr.mxu0 0.0
    %v745 = vand.u32 %v186, 4294901760
    %v746 = vsub.f32 %v186, %v745
    %747 = vmatpush1.xpose.msra.mxu0 %v746
    %748 = vmatprep.subr.mxu0 0.0
    %v749 = vand.u32 %v189, 4294901760
    %v750 = vsub.f32 %v189, %v749
    %751 = vmatpush1.xpose.msra.mxu0 %v750
    %752 = vmatprep.subr.mxu0 0.0
    %v753 = vand.u32 %v192, 4294901760
    %v754 = vsub.f32 %v192, %v753
    %755 = vmatpush1.xpose.msra.mxu0 %v754
    %756 = vmatprep.subr.mxu0 0.0
    %v757 = vand.u32 %v195, 4294901760
    %v758 = vsub.f32 %v195, %v757
    %759 = vmatpush1.xpose.msra.mxu0 %v758
    %760 = vmatprep.subr.mxu0 0.0
    %v761 = vand.u32 %v198, 4294901760
    %v762 = vsub.f32 %v198, %v761
    %763 = vmatpush1.xpose.msra.mxu0 %v762
    %764 = vmatprep.mubr.f32.mxu0 0.0
    %v765 = vand.u32 %v102, 4294901760
    %v766 = vsub.f32 %v102, %v765
    %767 = vmatmul.mubr.f32.gmra.mrb[0].mxu0 %v766
    %v768 = vpop.f32.mrb[0].mxu0
    %v769 = vadd.f32 %v632, %v768
    %v770 = vpop.f32.mrb[0].mxu0
    %v771 = vadd.f32 %v634, %v770
    %772 = vdwg.mxu0
    %773 = vmatprep.subr.mxu0 0.0
    %v774 = vand.u32 %v105, 4294901760
    %775 = vmatpush1.xpose.msra.mxu0 %v774
    %776 = vmatprep.subr.mxu0 0.0
    %v777 = vand.u32 %v108, 4294901760
    %778 = vmatpush1.xpose.msra.mxu0 %v777
    %779 = vmatprep.subr.mxu0 0.0
    %v780 = vand.u32 %v111, 4294901760
    %781 = vmatpush1.xpose.msra.mxu0 %v780
    %782 = vmatprep.subr.mxu0 0.0
    %v783 = vand.u32 %v114, 4294901760
    %784 = vmatpush1.xpose.msra.mxu0 %v783
    %785 = vmatprep.subr.mxu0 0.0
    %v786 = vand.u32 %v117, 4294901760
    %787 = vmatpush1.xpose.msra.mxu0 %v786
    %788 = vmatprep.subr.mxu0 0.0
    %v789 = vand.u32 %v120, 4294901760
    %790 = vmatpush1.xpose.msra.mxu0 %v789
    %791 = vmatprep.subr.mxu0 0.0
    %v792 = vand.u32 %v123, 4294901760
    %793 = vmatpush1.xpose.msra.mxu0 %v792
    %794 = vmatprep.subr.mxu0 0.0
    %v795 = vand.u32 %v126, 4294901760
    %796 = vmatpush1.xpose.msra.mxu0 %v795
    %797 = vmatprep.subr.mxu0 0.0
    %v798 = vand.u32 %v129, 4294901760
    %799 = vmatpush1.xpose.msra.mxu0 %v798
    %800 = vmatprep.subr.mxu0 0.0
    %v801 = vand.u32 %v132, 4294901760
    %802 = vmatpush1.xpose.msra.mxu0 %v801
    %803 = vmatprep.subr.mxu0 0.0
    %v804 = vand.u32 %v135, 4294901760
    %805 = vmatpush1.xpose.msra.mxu0 %v804
    %806 = vmatprep.subr.mxu0 0.0
    %v807 = vand.u32 %v138, 4294901760
    %808 = vmatpush1.xpose.msra.mxu0 %v807
    %809 = vmatprep.subr.mxu0 0.0
    %v810 = vand.u32 %v141, 4294901760
    %811 = vmatpush1.xpose.msra.mxu0 %v810
    %812 = vmatprep.subr.mxu0 0.0
    %v813 = vand.u32 %v144, 4294901760
    %814 = vmatpush1.xpose.msra.mxu0 %v813
    %815 = vmatprep.subr.mxu0 0.0
    %v816 = vand.u32 %v147, 4294901760
    %817 = vmatpush1.xpose.msra.mxu0 %v816
    %818 = vmatprep.subr.mxu0 0.0
    %v819 = vand.u32 %v150, 4294901760
    %820 = vmatpush1.xpose.msra.mxu0 %v819
    %821 = vmatprep.subr.mxu0 0.0
    %v822 = vand.u32 %v153, 4294901760
    %823 = vmatpush1.xpose.msra.mxu0 %v822
    %824 = vmatprep.subr.mxu0 0.0
    %v825 = vand.u32 %v156, 4294901760
    %826 = vmatpush1.xpose.msra.mxu0 %v825
    %827 = vmatprep.subr.mxu0 0.0
    %v828 = vand.u32 %v159, 4294901760
    %829 = vmatpush1.xpose.msra.mxu0 %v828
    %830 = vmatprep.subr.mxu0 0.0
    %v831 = vand.u32 %v162, 4294901760
    %832 = vmatpush1.xpose.msra.mxu0 %v831
    %833 = vmatprep.subr.mxu0 0.0
    %v834 = vand.u32 %v165, 4294901760
    %835 = vmatpush1.xpose.msra.mxu0 %v834
    %836 = vmatprep.subr.mxu0 0.0
    %v837 = vand.u32 %v168, 4294901760
    %838 = vmatpush1.xpose.msra.mxu0 %v837
    %839 = vmatprep.subr.mxu0 0.0
    %v840 = vand.u32 %v171, 4294901760
    %841 = vmatpush1.xpose.msra.mxu0 %v840
    %842 = vmatprep.subr.mxu0 0.0
    %v843 = vand.u32 %v174, 4294901760
    %844 = vmatpush1.xpose.msra.mxu0 %v843
    %845 = vmatprep.subr.mxu0 0.0
    %v846 = vand.u32 %v177, 4294901760
    %847 = vmatpush1.xpose.msra.mxu0 %v846
    %848 = vmatprep.subr.mxu0 0.0
    %v849 = vand.u32 %v180, 4294901760
    %850 = vmatpush1.xpose.msra.mxu0 %v849
    %851 = vmatprep.subr.mxu0 0.0
    %v852 = vand.u32 %v183, 4294901760
    %853 = vmatpush1.xpose.msra.mxu0 %v852
    %854 = vmatprep.subr.mxu0 0.0
    %v855 = vand.u32 %v186, 4294901760
    %856 = vmatpush1.xpose.msra.mxu0 %v855
    %857 = vmatprep.subr.mxu0 0.0
    %v858 = vand.u32 %v189, 4294901760
    %859 = vmatpush1.xpose.msra.mxu0 %v858
    %860 = vmatprep.subr.mxu0 0.0
    %v861 = vand.u32 %v192, 4294901760
    %862 = vmatpush1.xpose.msra.mxu0 %v861
    %863 = vmatprep.subr.mxu0 0.0
    %v864 = vand.u32 %v195, 4294901760
    %865 = vmatpush1.xpose.msra.mxu0 %v864
    %866 = vmatprep.subr.mxu0 0.0
    %v867 = vand.u32 %v198, 4294901760
    %868 = vmatpush1.xpose.msra.mxu0 %v867
    %869 = vmatprep.mubr.f32.mxu0 0.0
    %v870 = vand.u32 %v102, 4294901760
    %v871 = vsub.f32 %v102, %v870
    %v872 = vand.u32 %v871, 4294901760
    %873 = vmatmul.mubr.f32.gmra.mrb[0].mxu0 %v872
    %v874 = vpop.f32.mrb[0].mxu0
    %v875 = vadd.f32 %v769, %v874
    %v876 = vpop.f32.mrb[0].mxu0
    %v877 = vadd.f32 %v771, %v876
    %878 = vdwg.mxu0
    %879 = vmatprep.subr.mxu0 0.0
    %v880 = vand.u32 %v105, 4294901760
    %v881 = vsub.f32 %v105, %v880
    %v882 = vand.u32 %v881, 4294901760
    %883 = vmatpush1.xpose.msra.mxu0 %v882
    %884 = vmatprep.subr.mxu0 0.0
    %v885 = vand.u32 %v108, 4294901760
    %v886 = vsub.f32 %v108, %v885
    %v887 = vand.u32 %v886, 4294901760
    %888 = vmatpush1.xpose.msra.mxu0 %v887
    %889 = vmatprep.subr.mxu0 0.0
    %v890 = vand.u32 %v111, 4294901760
    %v891 = vsub.f32 %v111, %v890
    %v892 = vand.u32 %v891, 4294901760
    %893 = vmatpush1.xpose.msra.mxu0 %v892
    %894 = vmatprep.subr.mxu0 0.0
    %v895 = vand.u32 %v114, 4294901760
    %v896 = vsub.f32 %v114, %v895
    %v897 = vand.u32 %v896, 4294901760
    %898 = vmatpush1.xpose.msra.mxu0 %v897
    %899 = vmatprep.subr.mxu0 0.0
    %v900 = vand.u32 %v117, 4294901760
    %v901 = vsub.f32 %v117, %v900
    %v902 = vand.u32 %v901, 4294901760
    %903 = vmatpush1.xpose.msra.mxu0 %v902
    %904 = vmatprep.subr.mxu0 0.0
    %v905 = vand.u32 %v120, 4294901760
    %v906 = vsub.f32 %v120, %v905
    %v907 = vand.u32 %v906, 4294901760
    %908 = vmatpush1.xpose.msra.mxu0 %v907
    %909 = vmatprep.subr.mxu0 0.0
    %v910 = vand.u32 %v123, 4294901760
    %v911 = vsub.f32 %v123, %v910
    %v912 = vand.u32 %v911, 4294901760
    %913 = vmatpush1.xpose.msra.mxu0 %v912
    %914 = vmatprep.subr.mxu0 0.0
    %v915 = vand.u32 %v126, 4294901760
    %v916 = vsub.f32 %v126, %v915
    %v917 = vand.u32 %v916, 4294901760
    %918 = vmatpush1.xpose.msra.mxu0 %v917
    %919 = vmatprep.subr.mxu0 0.0
    %v920 = vand.u32 %v129, 4294901760
    %v921 = vsub.f32 %v129, %v920
    %v922 = vand.u32 %v921, 4294901760
    %923 = vmatpush1.xpose.msra.mxu0 %v922
    %924 = vmatprep.subr.mxu0 0.0
    %v925 = vand.u32 %v132, 4294901760
    %v926 = vsub.f32 %v132, %v925
    %v927 = vand.u32 %v926, 4294901760
    %928 = vmatpush1.xpose.msra.mxu0 %v927
    %929 = vmatprep.subr.mxu0 0.0
    %v930 = vand.u32 %v135, 4294901760
    %v931 = vsub.f32 %v135, %v930
    %v932 = vand.u32 %v931, 4294901760
    %933 = vmatpush1.xpose.msra.mxu0 %v932
    %934 = vmatprep.subr.mxu0 0.0
    %v935 = vand.u32 %v138, 4294901760
    %v936 = vsub.f32 %v138, %v935
    %v937 = vand.u32 %v936, 4294901760
    %938 = vmatpush1.xpose.msra.mxu0 %v937
    %939 = vmatprep.subr.mxu0 0.0
    %v940 = vand.u32 %v141, 4294901760
    %v941 = vsub.f32 %v141, %v940
    %v942 = vand.u32 %v941, 4294901760
    %943 = vmatpush1.xpose.msra.mxu0 %v942
    %944 = vmatprep.subr.mxu0 0.0
    %v945 = vand.u32 %v144, 4294901760
    %v946 = vsub.f32 %v144, %v945
    %v947 = vand.u32 %v946, 4294901760
    %948 = vmatpush1.xpose.msra.mxu0 %v947
    %949 = vmatprep.subr.mxu0 0.0
    %v950 = vand.u32 %v147, 4294901760
    %v951 = vsub.f32 %v147, %v950
    %v952 = vand.u32 %v951, 4294901760
    %953 = vmatpush1.xpose.msra.mxu0 %v952
    %954 = vmatprep.subr.mxu0 0.0
    %v955 = vand.u32 %v150, 4294901760
    %v956 = vsub.f32 %v150, %v955
    %v957 = vand.u32 %v956, 4294901760
    %958 = vmatpush1.xpose.msra.mxu0 %v957
    %959 = vmatprep.subr.mxu0 0.0
    %v960 = vand.u32 %v153, 4294901760
    %v961 = vsub.f32 %v153, %v960
    %v962 = vand.u32 %v961, 4294901760
    %963 = vmatpush1.xpose.msra.mxu0 %v962
    %964 = vmatprep.subr.mxu0 0.0
    %v965 = vand.u32 %v156, 4294901760
    %v966 = vsub.f32 %v156, %v965
    %v967 = vand.u32 %v966, 4294901760
    %968 = vmatpush1.xpose.msra.mxu0 %v967
    %969 = vmatprep.subr.mxu0 0.0
    %v970 = vand.u32 %v159, 4294901760
    %v971 = vsub.f32 %v159, %v970
    %v972 = vand.u32 %v971, 4294901760
    %973 = vmatpush1.xpose.msra.mxu0 %v972
    %974 = vmatprep.subr.mxu0 0.0
    %v975 = vand.u32 %v162, 4294901760
    %v976 = vsub.f32 %v162, %v975
    %v977 = vand.u32 %v976, 4294901760
    %978 = vmatpush1.xpose.msra.mxu0 %v977
    %979 = vmatprep.subr.mxu0 0.0
    %v980 = vand.u32 %v165, 4294901760
    %v981 = vsub.f32 %v165, %v980
    %v982 = vand.u32 %v981, 4294901760
    %983 = vmatpush1.xpose.msra.mxu0 %v982
    %984 = vmatprep.subr.mxu0 0.0
    %v985 = vand.u32 %v168, 4294901760
    %v986 = vsub.f32 %v168, %v985
    %v987 = vand.u32 %v986, 4294901760
    %988 = vmatpush1.xpose.msra.mxu0 %v987
    %989 = vmatprep.subr.mxu0 0.0
    %v990 = vand.u32 %v171, 4294901760
    %v991 = vsub.f32 %v171, %v990
    %v992 = vand.u32 %v991, 4294901760
    %993 = vmatpush1.xpose.msra.mxu0 %v992
    %994 = vmatprep.subr.mxu0 0.0
    %v995 = vand.u32 %v174, 4294901760
    %v996 = vsub.f32 %v174, %v995
    %v997 = vand.u32 %v996, 4294901760
    %998 = vmatpush1.xpose.msra.mxu0 %v997
    %999 = vmatprep.subr.mxu0 0.0
    %v1000 = vand.u32 %v177, 4294901760
    %v1001 = vsub.f32 %v177, %v1000
    %v1002 = vand.u32 %v1001, 4294901760
    %1003 = vmatpush1.xpose.msra.mxu0 %v1002
    %1004 = vmatprep.subr.mxu0 0.0
    %v1005 = vand.u32 %v180, 4294901760
    %v1006 = vsub.f32 %v180, %v1005
    %v1007 = vand.u32 %v1006, 4294901760
    %1008 = vmatpush1.xpose.msra.mxu0 %v1007
    %1009 = vmatprep.subr.mxu0 0.0
    %v1010 = vand.u32 %v183, 4294901760
    %v1011 = vsub.f32 %v183, %v1010
    %v1012 = vand.u32 %v1011, 4294901760
    %1013 = vmatpush1.xpose.msra.mxu0 %v1012
    %1014 = vmatprep.subr.mxu0 0.0
    %v1015 = vand.u32 %v186, 4294901760
    %v1016 = vsub.f32 %v186, %v1015
    %v1017 = vand.u32 %v1016, 4294901760
    %1018 = vmatpush1.xpose.msra.mxu0 %v1017
    %1019 = vmatprep.subr.mxu0 0.0
    %v1020 = vand.u32 %v189, 4294901760
    %v1021 = vsub.f32 %v189, %v1020
    %v1022 = vand.u32 %v1021, 4294901760
    %1023 = vmatpush1.xpose.msra.mxu0 %v1022
    %1024 = vmatprep.subr.mxu0 0.0
    %v1025 = vand.u32 %v192, 4294901760
    %v1026 = vsub.f32 %v192, %v1025
    %v1027 = vand.u32 %v1026, 4294901760
    %1028 = vmatpush1.xpose.msra.mxu0 %v1027
    %1029 = vmatprep.subr.mxu0 0.0
    %v1030 = vand.u32 %v195, 4294901760
    %v1031 = vsub.f32 %v195, %v1030
    %v1032 = vand.u32 %v1031, 4294901760
    %1033 = vmatpush1.xpose.msra.mxu0 %v1032
    %1034 = vmatprep.subr.mxu0 0.0
    %v1035 = vand.u32 %v198, 4294901760
    %v1036 = vsub.f32 %v198, %v1035
    %v1037 = vand.u32 %v1036, 4294901760
    %1038 = vmatpush1.xpose.msra.mxu0 %v1037
    %1039 = vmatprep.mubr.f32.mxu0 0.0
    %v1040 = vand.u32 %v102, 4294901760
    %1041 = vmatmul.mubr.f32.gmra.mrb[0].mxu0 %v1040
    %v1042 = vpop.f32.mrb[0].mxu0
    %v1043 = vadd.f32 %v875, %v1042
    %v1044 = vpop.f32.mrb[0].mxu0
    %v1045 = vadd.f32 %v877, %v1044
    %1046 = vdwg.mxu0
    %1047 = vmatprep.subr.mxu0 0.0
    %v1048 = vand.u32 %v105, 4294901760
    %1049 = vmatpush1.xpose.msra.mxu0 %v1048
    %1050 = vmatprep.subr.mxu0 0.0
    %v1051 = vand.u32 %v108, 4294901760
    %1052 = vmatpush1.xpose.msra.mxu0 %v1051
    %1053 = vmatprep.subr.mxu0 0.0
    %v1054 = vand.u32 %v111, 4294901760
    %1055 = vmatpush1.xpose.msra.mxu0 %v1054
    %1056 = vmatprep.subr.mxu0 0.0
    %v1057 = vand.u32 %v114, 4294901760
    %1058 = vmatpush1.xpose.msra.mxu0 %v1057
    %1059 = vmatprep.subr.mxu0 0.0
    %v1060 = vand.u32 %v117, 4294901760
    %1061 = vmatpush1.xpose.msra.mxu0 %v1060
    %1062 = vmatprep.subr.mxu0 0.0
    %v1063 = vand.u32 %v120, 4294901760
    %1064 = vmatpush1.xpose.msra.mxu0 %v1063
    %1065 = vmatprep.subr.mxu0 0.0
    %v1066 = vand.u32 %v123, 4294901760
    %1067 = vmatpush1.xpose.msra.mxu0 %v1066
    %1068 = vmatprep.subr.mxu0 0.0
    %v1069 = vand.u32 %v126, 4294901760
    %1070 = vmatpush1.xpose.msra.mxu0 %v1069
    %1071 = vmatprep.subr.mxu0 0.0
    %v1072 = vand.u32 %v129, 4294901760
    %1073 = vmatpush1.xpose.msra.mxu0 %v1072
    %1074 = vmatprep.subr.mxu0 0.0
    %v1075 = vand.u32 %v132, 4294901760
    %1076 = vmatpush1.xpose.msra.mxu0 %v1075
    %1077 = vmatprep.subr.mxu0 0.0
    %v1078 = vand.u32 %v135, 4294901760
    %1079 = vmatpush1.xpose.msra.mxu0 %v1078
    %1080 = vmatprep.subr.mxu0 0.0
    %v1081 = vand.u32 %v138, 4294901760
    %1082 = vmatpush1.xpose.msra.mxu0 %v1081
    %1083 = vmatprep.subr.mxu0 0.0
    %v1084 = vand.u32 %v141, 4294901760
    %1085 = vmatpush1.xpose.msra.mxu0 %v1084
    %1086 = vmatprep.subr.mxu0 0.0
    %v1087 = vand.u32 %v144, 4294901760
    %1088 = vmatpush1.xpose.msra.mxu0 %v1087
    %1089 = vmatprep.subr.mxu0 0.0
    %v1090 = vand.u32 %v147, 4294901760
    %1091 = vmatpush1.xpose.msra.mxu0 %v1090
    %1092 = vmatprep.subr.mxu0 0.0
    %v1093 = vand.u32 %v150, 4294901760
    %1094 = vmatpush1.xpose.msra.mxu0 %v1093
    %1095 = vmatprep.subr.mxu0 0.0
    %v1096 = vand.u32 %v153, 4294901760
    %1097 = vmatpush1.xpose.msra.mxu0 %v1096
    %1098 = vmatprep.subr.mxu0 0.0
    %v1099 = vand.u32 %v156, 4294901760
    %1100 = vmatpush1.xpose.msra.mxu0 %v1099
    %1101 = vmatprep.subr.mxu0 0.0
    %v1102 = vand.u32 %v159, 4294901760
    %1103 = vmatpush1.xpose.msra.mxu0 %v1102
    %1104 = vmatprep.subr.mxu0 0.0
    %v1105 = vand.u32 %v162, 4294901760
    %1106 = vmatpush1.xpose.msra.mxu0 %v1105
    %1107 = vmatprep.subr.mxu0 0.0
    %v1108 = vand.u32 %v165, 4294901760
    %1109 = vmatpush1.xpose.msra.mxu0 %v1108
    %1110 = vmatprep.subr.mxu0 0.0
    %v1111 = vand.u32 %v168, 4294901760
    %1112 = vmatpush1.xpose.msra.mxu0 %v1111
    %1113 = vmatprep.subr.mxu0 0.0
    %v1114 = vand.u32 %v171, 4294901760
    %1115 = vmatpush1.xpose.msra.mxu0 %v1114
    %1116 = vmatprep.subr.mxu0 0.0
    %v1117 = vand.u32 %v174, 4294901760
    %1118 = vmatpush1.xpose.msra.mxu0 %v1117
    %1119 = vmatprep.subr.mxu0 0.0
    %v1120 = vand.u32 %v177, 4294901760
    %1121 = vmatpush1.xpose.msra.mxu0 %v1120
    %1122 = vmatprep.subr.mxu0 0.0
    %v1123 = vand.u32 %v180, 4294901760
    %1124 = vmatpush1.xpose.msra.mxu0 %v1123
    %1125 = vmatprep.subr.mxu0 0.0
    %v1126 = vand.u32 %v183, 4294901760
    %1127 = vmatpush1.xpose.msra.mxu0 %v1126
    %1128 = vmatprep.subr.mxu0 0.0
    %v1129 = vand.u32 %v186, 4294901760
    %1130 = vmatpush1.xpose.msra.mxu0 %v1129
    %1131 = vmatprep.subr.mxu0 0.0
    %v1132 = vand.u32 %v189, 4294901760
    %1133 = vmatpush1.xpose.msra.mxu0 %v1132
    %1134 = vmatprep.subr.mxu0 0.0
    %v1135 = vand.u32 %v192, 4294901760
    %1136 = vmatpush1.xpose.msra.mxu0 %v1135
    %1137 = vmatprep.subr.mxu0 0.0
    %v1138 = vand.u32 %v195, 4294901760
    %1139 = vmatpush1.xpose.msra.mxu0 %v1138
    %1140 = vmatprep.subr.mxu0 0.0
    %v1141 = vand.u32 %v198, 4294901760
    %1142 = vmatpush1.xpose.msra.mxu0 %v1141
    %1143 = vmatprep.mubr.f32.mxu0 0.0
    %v1144 = vand.u32 %v102, 4294901760
    %1145 = vmatmul.mubr.f32.gmra.mrb[0].mxu0 %v1144
    %v1146 = vpop.f32.mrb[0].mxu0
    %v1147 = vadd.f32 %v1043, %v1146
    %v1148 = vpop.f32.mrb[0].mxu0
    %v1149 = vadd.f32 %v1045, %v1148
    %1150 = vdwg.mxu0
    %1151 = vmatprep.subr.mxu0 0.0
    %v1152 = vand.u32 %v201, 4294901760
    %1153 = vmatpush1.xpose.msra.mxu0 %v1152
    %1154 = vmatprep.subr.mxu0 0.0
    %v1155 = vand.u32 %v204, 4294901760
    %1156 = vmatpush1.xpose.msra.mxu0 %v1155
    %1157 = vmatprep.subr.mxu0 0.0
    %v1158 = vand.u32 %v207, 4294901760
    %1159 = vmatpush1.xpose.msra.mxu0 %v1158
    %1160 = vmatprep.subr.mxu0 0.0
    %v1161 = vand.u32 %v210, 4294901760
    %1162 = vmatpush1.xpose.msra.mxu0 %v1161
    %1163 = vmatprep.subr.mxu0 0.0
    %v1164 = vand.u32 %v213, 4294901760
    %1165 = vmatpush1.xpose.msra.mxu0 %v1164
    %1166 = vmatprep.subr.mxu0 0.0
    %v1167 = vand.u32 %v216, 4294901760
    %1168 = vmatpush1.xpose.msra.mxu0 %v1167
    %1169 = vmatprep.subr.mxu0 0.0
    %v1170 = vand.u32 %v219, 4294901760
    %1171 = vmatpush1.xpose.msra.mxu0 %v1170
    %1172 = vmatprep.subr.mxu0 0.0
    %v1173 = vand.u32 %v222, 4294901760
    %1174 = vmatpush1.xpose.msra.mxu0 %v1173
    %1175 = vmatprep.subr.mxu0 0.0
    %v1176 = vand.u32 %v225, 4294901760
    %1177 = vmatpush1.xpose.msra.mxu0 %v1176
    %1178 = vmatprep.subr.mxu0 0.0
    %v1179 = vand.u32 %v228, 4294901760
    %1180 = vmatpush1.xpose.msra.mxu0 %v1179
    %1181 = vmatprep.subr.mxu0 0.0
    %v1182 = vand.u32 %v231, 4294901760
    %1183 = vmatpush1.xpose.msra.mxu0 %v1182
    %1184 = vmatprep.subr.mxu0 0.0
    %v1185 = vand.u32 %v234, 4294901760
    %1186 = vmatpush1.xpose.msra.mxu0 %v1185
    %1187 = vmatprep.subr.mxu0 0.0
    %v1188 = vand.u32 %v237, 4294901760
    %1189 = vmatpush1.xpose.msra.mxu0 %v1188
    %1190 = vmatprep.subr.mxu0 0.0
    %v1191 = vand.u32 %v240, 4294901760
    %1192 = vmatpush1.xpose.msra.mxu0 %v1191
    %1193 = vmatprep.subr.mxu0 0.0
    %v1194 = vand.u32 %v243, 4294901760
    %1195 = vmatpush1.xpose.msra.mxu0 %v1194
    %1196 = vmatprep.subr.mxu0 0.0
    %v1197 = vand.u32 %v246, 4294901760
    %1198 = vmatpush1.xpose.msra.mxu0 %v1197
    %1199 = vmatprep.subr.mxu0 0.0
    %v1200 = vand.u32 %v249, 4294901760
    %1201 = vmatpush1.xpose.msra.mxu0 %v1200
    %1202 = vmatprep.subr.mxu0 0.0
    %v1203 = vand.u32 %v252, 4294901760
    %1204 = vmatpush1.xpose.msra.mxu0 %v1203
    %1205 = vmatprep.subr.mxu0 0.0
    %v1206 = vand.u32 %v255, 4294901760
    %1207 = vmatpush1.xpose.msra.mxu0 %v1206
    %1208 = vmatprep.subr.mxu0 0.0
    %v1209 = vand.u32 %v258, 4294901760
    %1210 = vmatpush1.xpose.msra.mxu0 %v1209
    %1211 = vmatprep.subr.mxu0 0.0
    %v1212 = vand.u32 %v261, 4294901760
    %1213 = vmatpush1.xpose.msra.mxu0 %v1212
    %1214 = vmatprep.subr.mxu0 0.0
    %v1215 = vand.u32 %v264, 4294901760
    %1216 = vmatpush1.xpose.msra.mxu0 %v1215
    %1217 = vmatprep.subr.mxu0 0.0
    %v1218 = vand.u32 %v267, 4294901760
    %1219 = vmatpush1.xpose.msra.mxu0 %v1218
    %1220 = vmatprep.subr.mxu0 0.0
    %v1221 = vand.u32 %v270, 4294901760
    %1222 = vmatpush1.xpose.msra.mxu0 %v1221
    %1223 = vmatprep.subr.mxu0 0.0
    %v1224 = vand.u32 %v273, 4294901760
    %1225 = vmatpush1.xpose.msra.mxu0 %v1224
    %1226 = vmatprep.subr.mxu0 0.0
    %v1227 = vand.u32 %v276, 4294901760
    %1228 = vmatpush1.xpose.msra.mxu0 %v1227
    %1229 = vmatprep.subr.mxu0 0.0
    %v1230 = vand.u32 %v279, 4294901760
    %1231 = vmatpush1.xpose.msra.mxu0 %v1230
    %1232 = vmatprep.subr.mxu0 0.0
    %v1233 = vand.u32 %v282, 4294901760
    %1234 = vmatpush1.xpose.msra.mxu0 %v1233
    %1235 = vmatprep.subr.mxu0 0.0
    %v1236 = vand.u32 %v285, 4294901760
    %1237 = vmatpush1.xpose.msra.mxu0 %v1236
    %1238 = vmatprep.subr.mxu0 0.0
    %v1239 = vand.u32 %v288, 4294901760
    %1240 = vmatpush1.xpose.msra.mxu0 %v1239
    %1241 = vmatprep.subr.mxu0 0.0
    %v1242 = vand.u32 %v291, 4294901760
    %1243 = vmatpush1.xpose.msra.mxu0 %v1242
    %1244 = vmatprep.subr.mxu0 0.0
    %v1245 = vand.u32 %v294, 4294901760
    %1246 = vmatpush1.xpose.msra.mxu0 %v1245
    %1247 = vmatprep.mubr.f32.mxu0 0.0
    %v1248 = vand.u32 %v102, 4294901760
    %v1249 = vsub.f32 %v102, %v1248
    %v1250 = vand.u32 %v1249, 4294901760
    %v1251 = vsub.f32 %v1249, %v1250
    %v1252 = vand.u32 %v1251, 4294901760
    %1253 = vmatmul.mubr.f32.gmra.mrb[0].mxu0 %v1252
    %v1254 = vpop.f32.mrb[0].mxu0
    %v1255 = vadd.f32 %v98, %v1254
    %v1256 = vpop.f32.mrb[0].mxu0
    %v1257 = vadd.f32 %v98, %v1256
    %1258 = vdwg.mxu0
    %1259 = vmatprep.subr.mxu0 0.0
    %v1260 = vand.u32 %v201, 4294901760
    %v1261 = vsub.f32 %v201, %v1260
    %v1262 = vand.u32 %v1261, 4294901760
    %v1263 = vsub.f32 %v1261, %v1262
    %v1264 = vand.u32 %v1263, 4294901760
    %1265 = vmatpush1.xpose.msra.mxu0 %v1264
    %1266 = vmatprep.subr.mxu0 0.0
    %v1267 = vand.u32 %v204, 4294901760
    %v1268 = vsub.f32 %v204, %v1267
    %v1269 = vand.u32 %v1268, 4294901760
    %v1270 = vsub.f32 %v1268, %v1269
    %v1271 = vand.u32 %v1270, 4294901760
    %1272 = vmatpush1.xpose.msra.mxu0 %v1271
    %1273 = vmatprep.subr.mxu0 0.0
    %v1274 = vand.u32 %v207, 4294901760
    %v1275 = vsub.f32 %v207, %v1274
    %v1276 = vand.u32 %v1275, 4294901760
    %v1277 = vsub.f32 %v1275, %v1276
    %v1278 = vand.u32 %v1277, 4294901760
    %1279 = vmatpush1.xpose.msra.mxu0 %v1278
    %1280 = vmatprep.subr.mxu0 0.0
    %v1281 = vand.u32 %v210, 4294901760
    %v1282 = vsub.f32 %v210, %v1281
    %v1283 = vand.u32 %v1282, 4294901760
    %v1284 = vsub.f32 %v1282, %v1283
    %v1285 = vand.u32 %v1284, 4294901760
    %1286 = vmatpush1.xpose.msra.mxu0 %v1285
    %1287 = vmatprep.subr.mxu0 0.0
    %v1288 = vand.u32 %v213, 4294901760
    %v1289 = vsub.f32 %v213, %v1288
    %v1290 = vand.u32 %v1289, 4294901760
    %v1291 = vsub.f32 %v1289, %v1290
    %v1292 = vand.u32 %v1291, 4294901760
    %1293 = vmatpush1.xpose.msra.mxu0 %v1292
    %1294 = vmatprep.subr.mxu0 0.0
    %v1295 = vand.u32 %v216, 4294901760
    %v1296 = vsub.f32 %v216, %v1295
    %v1297 = vand.u32 %v1296, 4294901760
    %v1298 = vsub.f32 %v1296, %v1297
    %v1299 = vand.u32 %v1298, 4294901760
    %1300 = vmatpush1.xpose.msra.mxu0 %v1299
    %1301 = vmatprep.subr.mxu0 0.0
    %v1302 = vand.u32 %v219, 4294901760
    %v1303 = vsub.f32 %v219, %v1302
    %v1304 = vand.u32 %v1303, 4294901760
    %v1305 = vsub.f32 %v1303, %v1304
    %v1306 = vand.u32 %v1305, 4294901760
    %1307 = vmatpush1.xpose.msra.mxu0 %v1306
    %1308 = vmatprep.subr.mxu0 0.0
    %v1309 = vand.u32 %v222, 4294901760
    %v1310 = vsub.f32 %v222, %v1309
    %v1311 = vand.u32 %v1310, 4294901760
    %v1312 = vsub.f32 %v1310, %v1311
    %v1313 = vand.u32 %v1312, 4294901760
    %1314 = vmatpush1.xpose.msra.mxu0 %v1313
    %1315 = vmatprep.subr.mxu0 0.0
    %v1316 = vand.u32 %v225, 4294901760
    %v1317 = vsub.f32 %v225, %v1316
    %v1318 = vand.u32 %v1317, 4294901760
    %v1319 = vsub.f32 %v1317, %v1318
    %v1320 = vand.u32 %v1319, 4294901760
    %1321 = vmatpush1.xpose.msra.mxu0 %v1320
    %1322 = vmatprep.subr.mxu0 0.0
    %v1323 = vand.u32 %v228, 4294901760
    %v1324 = vsub.f32 %v228, %v1323
    %v1325 = vand.u32 %v1324, 4294901760
    %v1326 = vsub.f32 %v1324, %v1325
    %v1327 = vand.u32 %v1326, 4294901760
    %1328 = vmatpush1.xpose.msra.mxu0 %v1327
    %1329 = vmatprep.subr.mxu0 0.0
    %v1330 = vand.u32 %v231, 4294901760
    %v1331 = vsub.f32 %v231, %v1330
    %v1332 = vand.u32 %v1331, 4294901760
    %v1333 = vsub.f32 %v1331, %v1332
    %v1334 = vand.u32 %v1333, 4294901760
    %1335 = vmatpush1.xpose.msra.mxu0 %v1334
    %1336 = vmatprep.subr.mxu0 0.0
    %v1337 = vand.u32 %v234, 4294901760
    %v1338 = vsub.f32 %v234, %v1337
    %v1339 = vand.u32 %v1338, 4294901760
    %v1340 = vsub.f32 %v1338, %v1339
    %v1341 = vand.u32 %v1340, 4294901760
    %1342 = vmatpush1.xpose.msra.mxu0 %v1341
    %1343 = vmatprep.subr.mxu0 0.0
    %v1344 = vand.u32 %v237, 4294901760
    %v1345 = vsub.f32 %v237, %v1344
    %v1346 = vand.u32 %v1345, 4294901760
    %v1347 = vsub.f32 %v1345, %v1346
    %v1348 = vand.u32 %v1347, 4294901760
    %1349 = vmatpush1.xpose.msra.mxu0 %v1348
    %1350 = vmatprep.subr.mxu0 0.0
    %v1351 = vand.u32 %v240, 4294901760
    %v1352 = vsub.f32 %v240, %v1351
    %v1353 = vand.u32 %v1352, 4294901760
    %v1354 = vsub.f32 %v1352, %v1353
    %v1355 = vand.u32 %v1354, 4294901760
    %1356 = vmatpush1.xpose.msra.mxu0 %v1355
    %1357 = vmatprep.subr.mxu0 0.0
    %v1358 = vand.u32 %v243, 4294901760
    %v1359 = vsub.f32 %v243, %v1358
    %v1360 = vand.u32 %v1359, 4294901760
    %v1361 = vsub.f32 %v1359, %v1360
    %v1362 = vand.u32 %v1361, 4294901760
    %1363 = vmatpush1.xpose.msra.mxu0 %v1362
    %1364 = vmatprep.subr.mxu0 0.0
    %v1365 = vand.u32 %v246, 4294901760
    %v1366 = vsub.f32 %v246, %v1365
    %v1367 = vand.u32 %v1366, 4294901760
    %v1368 = vsub.f32 %v1366, %v1367
    %v1369 = vand.u32 %v1368, 4294901760
    %1370 = vmatpush1.xpose.msra.mxu0 %v1369
    %1371 = vmatprep.subr.mxu0 0.0
    %v1372 = vand.u32 %v249, 4294901760
    %v1373 = vsub.f32 %v249, %v1372
    %v1374 = vand.u32 %v1373, 4294901760
    %v1375 = vsub.f32 %v1373, %v1374
    %v1376 = vand.u32 %v1375, 4294901760
    %1377 = vmatpush1.xpose.msra.mxu0 %v1376
    %1378 = vmatprep.subr.mxu0 0.0
    %v1379 = vand.u32 %v252, 4294901760
    %v1380 = vsub.f32 %v252, %v1379
    %v1381 = vand.u32 %v1380, 4294901760
    %v1382 = vsub.f32 %v1380, %v1381
    %v1383 = vand.u32 %v1382, 4294901760
    %1384 = vmatpush1.xpose.msra.mxu0 %v1383
    %1385 = vmatprep.subr.mxu0 0.0
    %v1386 = vand.u32 %v255, 4294901760
    %v1387 = vsub.f32 %v255, %v1386
    %v1388 = vand.u32 %v1387, 4294901760
    %v1389 = vsub.f32 %v1387, %v1388
    %v1390 = vand.u32 %v1389, 4294901760
    %1391 = vmatpush1.xpose.msra.mxu0 %v1390
    %1392 = vmatprep.subr.mxu0 0.0
    %v1393 = vand.u32 %v258, 4294901760
    %v1394 = vsub.f32 %v258, %v1393
    %v1395 = vand.u32 %v1394, 4294901760
    %v1396 = vsub.f32 %v1394, %v1395
    %v1397 = vand.u32 %v1396, 4294901760
    %1398 = vmatpush1.xpose.msra.mxu0 %v1397
    %1399 = vmatprep.subr.mxu0 0.0
    %v1400 = vand.u32 %v261, 4294901760
    %v1401 = vsub.f32 %v261, %v1400
    %v1402 = vand.u32 %v1401, 4294901760
    %v1403 = vsub.f32 %v1401, %v1402
    %v1404 = vand.u32 %v1403, 4294901760
    %1405 = vmatpush1.xpose.msra.mxu0 %v1404
    %1406 = vmatprep.subr.mxu0 0.0
    %v1407 = vand.u32 %v264, 4294901760
    %v1408 = vsub.f32 %v264, %v1407
    %v1409 = vand.u32 %v1408, 4294901760
    %v1410 = vsub.f32 %v1408, %v1409
    %v1411 = vand.u32 %v1410, 4294901760
    %1412 = vmatpush1.xpose.msra.mxu0 %v1411
    %1413 = vmatprep.subr.mxu0 0.0
    %v1414 = vand.u32 %v267, 4294901760
    %v1415 = vsub.f32 %v267, %v1414
    %v1416 = vand.u32 %v1415, 4294901760
    %v1417 = vsub.f32 %v1415, %v1416
    %v1418 = vand.u32 %v1417, 4294901760
    %1419 = vmatpush1.xpose.msra.mxu0 %v1418
    %1420 = vmatprep.subr.mxu0 0.0
    %v1421 = vand.u32 %v270, 4294901760
    %v1422 = vsub.f32 %v270, %v1421
    %v1423 = vand.u32 %v1422, 4294901760
    %v1424 = vsub.f32 %v1422, %v1423
    %v1425 = vand.u32 %v1424, 4294901760
    %1426 = vmatpush1.xpose.msra.mxu0 %v1425
    %1427 = vmatprep.subr.mxu0 0.0
    %v1428 = vand.u32 %v273, 4294901760
    %v1429 = vsub.f32 %v273, %v1428
    %v1430 = vand.u32 %v1429, 4294901760
    %v1431 = vsub.f32 %v1429, %v1430
    %v1432 = vand.u32 %v1431, 4294901760
    %1433 = vmatpush1.xpose.msra.mxu0 %v1432
    %1434 = vmatprep.subr.mxu0 0.0
    %v1435 = vand.u32 %v276, 4294901760
    %v1436 = vsub.f32 %v276, %v1435
    %v1437 = vand.u32 %v1436, 4294901760
    %v1438 = vsub.f32 %v1436, %v1437
    %v1439 = vand.u32 %v1438, 4294901760
    %1440 = vmatpush1.xpose.msra.mxu0 %v1439
    %1441 = vmatprep.subr.mxu0 0.0
    %v1442 = vand.u32 %v279, 4294901760
    %v1443 = vsub.f32 %v279, %v1442
    %v1444 = vand.u32 %v1443, 4294901760
    %v1445 = vsub.f32 %v1443, %v1444
    %v1446 = vand.u32 %v1445, 4294901760
    %1447 = vmatpush1.xpose.msra.mxu0 %v1446
    %1448 = vmatprep.subr.mxu0 0.0
    %v1449 = vand.u32 %v282, 4294901760
    %v1450 = vsub.f32 %v282, %v1449
    %v1451 = vand.u32 %v1450, 4294901760
    %v1452 = vsub.f32 %v1450, %v1451
    %v1453 = vand.u32 %v1452, 4294901760
    %1454 = vmatpush1.xpose.msra.mxu0 %v1453
    %1455 = vmatprep.subr.mxu0 0.0
    %v1456 = vand.u32 %v285, 4294901760
    %v1457 = vsub.f32 %v285, %v1456
    %v1458 = vand.u32 %v1457, 4294901760
    %v1459 = vsub.f32 %v1457, %v1458
    %v1460 = vand.u32 %v1459, 4294901760
    %1461 = vmatpush1.xpose.msra.mxu0 %v1460
    %1462 = vmatprep.subr.mxu0 0.0
    %v1463 = vand.u32 %v288, 4294901760
    %v1464 = vsub.f32 %v288, %v1463
    %v1465 = vand.u32 %v1464, 4294901760
    %v1466 = vsub.f32 %v1464, %v1465
    %v1467 = vand.u32 %v1466, 4294901760
    %1468 = vmatpush1.xpose.msra.mxu0 %v1467
    %1469 = vmatprep.subr.mxu0 0.0
    %v1470 = vand.u32 %v291, 4294901760
    %v1471 = vsub.f32 %v291, %v1470
    %v1472 = vand.u32 %v1471, 4294901760
    %v1473 = vsub.f32 %v1471, %v1472
    %v1474 = vand.u32 %v1473, 4294901760
    %1475 = vmatpush1.xpose.msra.mxu0 %v1474
    %1476 = vmatprep.subr.mxu0 0.0
    %v1477 = vand.u32 %v294, 4294901760
    %v1478 = vsub.f32 %v294, %v1477
    %v1479 = vand.u32 %v1478, 4294901760
    %v1480 = vsub.f32 %v1478, %v1479
    %v1481 = vand.u32 %v1480, 4294901760
    %1482 = vmatpush1.xpose.msra.mxu0 %v1481
    %1483 = vmatprep.mubr.f32.mxu0 0.0
    %v1484 = vand.u32 %v102, 4294901760
    %1485 = vmatmul.mubr.f32.gmra.mrb[0].mxu0 %v1484
    %v1486 = vpop.f32.mrb[0].mxu0
    %v1487 = vadd.f32 %v1255, %v1486
    %v1488 = vpop.f32.mrb[0].mxu0
    %v1489 = vadd.f32 %v1257, %v1488
    %1490 = vdwg.mxu0
    %1491 = vmatprep.subr.mxu0 0.0
    %v1492 = vand.u32 %v201, 4294901760
    %v1493 = vsub.f32 %v201, %v1492
    %1494 = vmatpush1.xpose.msra.mxu0 %v1493
    %1495 = vmatprep.subr.mxu0 0.0
    %v1496 = vand.u32 %v204, 4294901760
    %v1497 = vsub.f32 %v204, %v1496
    %1498 = vmatpush1.xpose.msra.mxu0 %v1497
    %1499 = vmatprep.subr.mxu0 0.0
    %v1500 = vand.u32 %v207, 4294901760
    %v1501 = vsub.f32 %v207, %v1500
    %1502 = vmatpush1.xpose.msra.mxu0 %v1501
    %1503 = vmatprep.subr.mxu0 0.0
    %v1504 = vand.u32 %v210, 4294901760
    %v1505 = vsub.f32 %v210, %v1504
    %1506 = vmatpush1.xpose.msra.mxu0 %v1505
    %1507 = vmatprep.subr.mxu0 0.0
    %v1508 = vand.u32 %v213, 4294901760
    %v1509 = vsub.f32 %v213, %v1508
    %1510 = vmatpush1.xpose.msra.mxu0 %v1509
    %1511 = vmatprep.subr.mxu0 0.0
    %v1512 = vand.u32 %v216, 4294901760
    %v1513 = vsub.f32 %v216, %v1512
    %1514 = vmatpush1.xpose.msra.mxu0 %v1513
    %1515 = vmatprep.subr.mxu0 0.0
    %v1516 = vand.u32 %v219, 4294901760
    %v1517 = vsub.f32 %v219, %v1516
    %1518 = vmatpush1.xpose.msra.mxu0 %v1517
    %1519 = vmatprep.subr.mxu0 0.0
    %v1520 = vand.u32 %v222, 4294901760
    %v1521 = vsub.f32 %v222, %v1520
    %1522 = vmatpush1.xpose.msra.mxu0 %v1521
    %1523 = vmatprep.subr.mxu0 0.0
    %v1524 = vand.u32 %v225, 4294901760
    %v1525 = vsub.f32 %v225, %v1524
    %1526 = vmatpush1.xpose.msra.mxu0 %v1525
    %1527 = vmatprep.subr.mxu0 0.0
    %v1528 = vand.u32 %v228, 4294901760
    %v1529 = vsub.f32 %v228, %v1528
    %1530 = vmatpush1.xpose.msra.mxu0 %v1529
    %1531 = vmatprep.subr.mxu0 0.0
    %v1532 = vand.u32 %v231, 4294901760
    %v1533 = vsub.f32 %v231, %v1532
    %1534 = vmatpush1.xpose.msra.mxu0 %v1533
    %1535 = vmatprep.subr.mxu0 0.0
    %v1536 = vand.u32 %v234, 4294901760
    %v1537 = vsub.f32 %v234, %v1536
    %1538 = vmatpush1.xpose.msra.mxu0 %v1537
    %1539 = vmatprep.subr.mxu0 0.0
    %v1540 = vand.u32 %v237, 4294901760
    %v1541 = vsub.f32 %v237, %v1540
    %1542 = vmatpush1.xpose.msra.mxu0 %v1541
    %1543 = vmatprep.subr.mxu0 0.0
    %v1544 = vand.u32 %v240, 4294901760
    %v1545 = vsub.f32 %v240, %v1544
    %1546 = vmatpush1.xpose.msra.mxu0 %v1545
    %1547 = vmatprep.subr.mxu0 0.0
    %v1548 = vand.u32 %v243, 4294901760
    %v1549 = vsub.f32 %v243, %v1548
    %1550 = vmatpush1.xpose.msra.mxu0 %v1549
    %1551 = vmatprep.subr.mxu0 0.0
    %v1552 = vand.u32 %v246, 4294901760
    %v1553 = vsub.f32 %v246, %v1552
    %1554 = vmatpush1.xpose.msra.mxu0 %v1553
    %1555 = vmatprep.subr.mxu0 0.0
    %v1556 = vand.u32 %v249, 4294901760
    %v1557 = vsub.f32 %v249, %v1556
    %1558 = vmatpush1.xpose.msra.mxu0 %v1557
    %1559 = vmatprep.subr.mxu0 0.0
    %v1560 = vand.u32 %v252, 4294901760
    %v1561 = vsub.f32 %v252, %v1560
    %1562 = vmatpush1.xpose.msra.mxu0 %v1561
    %1563 = vmatprep.subr.mxu0 0.0
    %v1564 = vand.u32 %v255, 4294901760
    %v1565 = vsub.f32 %v255, %v1564
    %1566 = vmatpush1.xpose.msra.mxu0 %v1565
    %1567 = vmatprep.subr.mxu0 0.0
    %v1568 = vand.u32 %v258, 4294901760
    %v1569 = vsub.f32 %v258, %v1568
    %1570 = vmatpush1.xpose.msra.mxu0 %v1569
    %1571 = vmatprep.subr.mxu0 0.0
    %v1572 = vand.u32 %v261, 4294901760
    %v1573 = vsub.f32 %v261, %v1572
    %1574 = vmatpush1.xpose.msra.mxu0 %v1573
    %1575 = vmatprep.subr.mxu0 0.0
    %v1576 = vand.u32 %v264, 4294901760
    %v1577 = vsub.f32 %v264, %v1576
    %1578 = vmatpush1.xpose.msra.mxu0 %v1577
    %1579 = vmatprep.subr.mxu0 0.0
    %v1580 = vand.u32 %v267, 4294901760
    %v1581 = vsub.f32 %v267, %v1580
    %1582 = vmatpush1.xpose.msra.mxu0 %v1581
    %1583 = vmatprep.subr.mxu0 0.0
    %v1584 = vand.u32 %v270, 4294901760
    %v1585 = vsub.f32 %v270, %v1584
    %1586 = vmatpush1.xpose.msra.mxu0 %v1585
    %1587 = vmatprep.subr.mxu0 0.0
    %v1588 = vand.u32 %v273, 4294901760
    %v1589 = vsub.f32 %v273, %v1588
    %1590 = vmatpush1.xpose.msra.mxu0 %v1589
    %1591 = vmatprep.subr.mxu0 0.0
    %v1592 = vand.u32 %v276, 4294901760
    %v1593 = vsub.f32 %v276, %v1592
    %1594 = vmatpush1.xpose.msra.mxu0 %v1593
    %1595 = vmatprep.subr.mxu0 0.0
    %v1596 = vand.u32 %v279, 4294901760
    %v1597 = vsub.f32 %v279, %v1596
    %1598 = vmatpush1.xpose.msra.mxu0 %v1597
    %1599 = vmatprep.subr.mxu0 0.0
    %v1600 = vand.u32 %v282, 4294901760
    %v1601 = vsub.f32 %v282, %v1600
    %1602 = vmatpush1.xpose.msra.mxu0 %v1601
    %1603 = vmatprep.subr.mxu0 0.0
    %v1604 = vand.u32 %v285, 4294901760
    %v1605 = vsub.f32 %v285, %v1604
    %1606 = vmatpush1.xpose.msra.mxu0 %v1605
    %1607 = vmatprep.subr.mxu0 0.0
    %v1608 = vand.u32 %v288, 4294901760
    %v1609 = vsub.f32 %v288, %v1608
    %1610 = vmatpush1.xpose.msra.mxu0 %v1609
    %1611 = vmatprep.subr.mxu0 0.0
    %v1612 = vand.u32 %v291, 4294901760
    %v1613 = vsub.f32 %v291, %v1612
    %1614 = vmatpush1.xpose.msra.mxu0 %v1613
    %1615 = vmatprep.subr.mxu0 0.0
    %v1616 = vand.u32 %v294, 4294901760
    %v1617 = vsub.f32 %v294, %v1616
    %1618 = vmatpush1.xpose.msra.mxu0 %v1617
    %1619 = vmatprep.mubr.f32.mxu0 0.0
    %v1620 = vand.u32 %v102, 4294901760
    %v1621 = vsub.f32 %v102, %v1620
    %1622 = vmatmul.mubr.f32.gmra.mrb[0].mxu0 %v1621
    %v1623 = vpop.f32.mrb[0].mxu0
    %v1624 = vadd.f32 %v1487, %v1623
    %v1625 = vpop.f32.mrb[0].mxu0
    %v1626 = vadd.f32 %v1489, %v1625
    %1627 = vdwg.mxu0
    %1628 = vmatprep.subr.mxu0 0.0
    %v1629 = vand.u32 %v201, 4294901760
    %1630 = vmatpush1.xpose.msra.mxu0 %v1629
    %1631 = vmatprep.subr.mxu0 0.0
    %v1632 = vand.u32 %v204, 4294901760
    %1633 = vmatpush1.xpose.msra.mxu0 %v1632
    %1634 = vmatprep.subr.mxu0 0.0
    %v1635 = vand.u32 %v207, 4294901760
    %1636 = vmatpush1.xpose.msra.mxu0 %v1635
    %1637 = vmatprep.subr.mxu0 0.0
    %v1638 = vand.u32 %v210, 4294901760
    %1639 = vmatpush1.xpose.msra.mxu0 %v1638
    %1640 = vmatprep.subr.mxu0 0.0
    %v1641 = vand.u32 %v213, 4294901760
    %1642 = vmatpush1.xpose.msra.mxu0 %v1641
    %1643 = vmatprep.subr.mxu0 0.0
    %v1644 = vand.u32 %v216, 4294901760
    %1645 = vmatpush1.xpose.msra.mxu0 %v1644
    %1646 = vmatprep.subr.mxu0 0.0
    %v1647 = vand.u32 %v219, 4294901760
    %1648 = vmatpush1.xpose.msra.mxu0 %v1647
    %1649 = vmatprep.subr.mxu0 0.0
    %v1650 = vand.u32 %v222, 4294901760
    %1651 = vmatpush1.xpose.msra.mxu0 %v1650
    %1652 = vmatprep.subr.mxu0 0.0
    %v1653 = vand.u32 %v225, 4294901760
    %1654 = vmatpush1.xpose.msra.mxu0 %v1653
    %1655 = vmatprep.subr.mxu0 0.0
    %v1656 = vand.u32 %v228, 4294901760
    %1657 = vmatpush1.xpose.msra.mxu0 %v1656
    %1658 = vmatprep.subr.mxu0 0.0
    %v1659 = vand.u32 %v231, 4294901760
    %1660 = vmatpush1.xpose.msra.mxu0 %v1659
    %1661 = vmatprep.subr.mxu0 0.0
    %v1662 = vand.u32 %v234, 4294901760
    %1663 = vmatpush1.xpose.msra.mxu0 %v1662
    %1664 = vmatprep.subr.mxu0 0.0
    %v1665 = vand.u32 %v237, 4294901760
    %1666 = vmatpush1.xpose.msra.mxu0 %v1665
    %1667 = vmatprep.subr.mxu0 0.0
    %v1668 = vand.u32 %v240, 4294901760
    %1669 = vmatpush1.xpose.msra.mxu0 %v1668
    %1670 = vmatprep.subr.mxu0 0.0
    %v1671 = vand.u32 %v243, 4294901760
    %1672 = vmatpush1.xpose.msra.mxu0 %v1671
    %1673 = vmatprep.subr.mxu0 0.0
    %v1674 = vand.u32 %v246, 4294901760
    %1675 = vmatpush1.xpose.msra.mxu0 %v1674
    %1676 = vmatprep.subr.mxu0 0.0
    %v1677 = vand.u32 %v249, 4294901760
    %1678 = vmatpush1.xpose.msra.mxu0 %v1677
    %1679 = vmatprep.subr.mxu0 0.0
    %v1680 = vand.u32 %v252, 4294901760
    %1681 = vmatpush1.xpose.msra.mxu0 %v1680
    %1682 = vmatprep.subr.mxu0 0.0
    %v1683 = vand.u32 %v255, 4294901760
    %1684 = vmatpush1.xpose.msra.mxu0 %v1683
    %1685 = vmatprep.subr.mxu0 0.0
    %v1686 = vand.u32 %v258, 4294901760
    %1687 = vmatpush1.xpose.msra.mxu0 %v1686
    %1688 = vmatprep.subr.mxu0 0.0
    %v1689 = vand.u32 %v261, 4294901760
    %1690 = vmatpush1.xpose.msra.mxu0 %v1689
    %1691 = vmatprep.subr.mxu0 0.0
    %v1692 = vand.u32 %v264, 4294901760
    %1693 = vmatpush1.xpose.msra.mxu0 %v1692
    %1694 = vmatprep.subr.mxu0 0.0
    %v1695 = vand.u32 %v267, 4294901760
    %1696 = vmatpush1.xpose.msra.mxu0 %v1695
    %1697 = vmatprep.subr.mxu0 0.0
    %v1698 = vand.u32 %v270, 4294901760
    %1699 = vmatpush1.xpose.msra.mxu0 %v1698
    %1700 = vmatprep.subr.mxu0 0.0
    %v1701 = vand.u32 %v273, 4294901760
    %1702 = vmatpush1.xpose.msra.mxu0 %v1701
    %1703 = vmatprep.subr.mxu0 0.0
    %v1704 = vand.u32 %v276, 4294901760
    %1705 = vmatpush1.xpose.msra.mxu0 %v1704
    %1706 = vmatprep.subr.mxu0 0.0
    %v1707 = vand.u32 %v279, 4294901760
    %1708 = vmatpush1.xpose.msra.mxu0 %v1707
    %1709 = vmatprep.subr.mxu0 0.0
    %v1710 = vand.u32 %v282, 4294901760
    %1711 = vmatpush1.xpose.msra.mxu0 %v1710
    %1712 = vmatprep.subr.mxu0 0.0
    %v1713 = vand.u32 %v285, 4294901760
    %1714 = vmatpush1.xpose.msra.mxu0 %v1713
    %1715 = vmatprep.subr.mxu0 0.0
    %v1716 = vand.u32 %v288, 4294901760
    %1717 = vmatpush1.xpose.msra.mxu0 %v1716
    %1718 = vmatprep.subr.mxu0 0.0
    %v1719 = vand.u32 %v291, 4294901760
    %1720 = vmatpush1.xpose.msra.mxu0 %v1719
    %1721 = vmatprep.subr.mxu0 0.0
    %v1722 = vand.u32 %v294, 4294901760
    %1723 = vmatpush1.xpose.msra.mxu0 %v1722
    %1724 = vmatprep.mubr.f32.mxu0 0.0
    %v1725 = vand.u32 %v102, 4294901760
    %v1726 = vsub.f32 %v102, %v1725
    %v1727 = vand.u32 %v1726, 4294901760
    %1728 = vmatmul.mubr.f32.gmra.mrb[0].mxu0 %v1727
    %v1729 = vpop.f32.mrb[0].mxu0
    %v1730 = vadd.f32 %v1624, %v1729
    %v1731 = vpop.f32.mrb[0].mxu0
    %v1732 = vadd.f32 %v1626, %v1731
    %1733 = vdwg.mxu0
    %1734 = vmatprep.subr.mxu0 0.0
    %v1735 = vand.u32 %v201, 4294901760
    %v1736 = vsub.f32 %v201, %v1735
    %v1737 = vand.u32 %v1736, 4294901760
    %1738 = vmatpush1.xpose.msra.mxu0 %v1737
    %1739 = vmatprep.subr.mxu0 0.0
    %v1740 = vand.u32 %v204, 4294901760
    %v1741 = vsub.f32 %v204, %v1740
    %v1742 = vand.u32 %v1741, 4294901760
    %1743 = vmatpush1.xpose.msra.mxu0 %v1742
    %1744 = vmatprep.subr.mxu0 0.0
    %v1745 = vand.u32 %v207, 4294901760
    %v1746 = vsub.f32 %v207, %v1745
    %v1747 = vand.u32 %v1746, 4294901760
    %1748 = vmatpush1.xpose.msra.mxu0 %v1747
    %1749 = vmatprep.subr.mxu0 0.0
    %v1750 = vand.u32 %v210, 4294901760
    %v1751 = vsub.f32 %v210, %v1750
    %v1752 = vand.u32 %v1751, 4294901760
    %1753 = vmatpush1.xpose.msra.mxu0 %v1752
    %1754 = vmatprep.subr.mxu0 0.0
    %v1755 = vand.u32 %v213, 4294901760
    %v1756 = vsub.f32 %v213, %v1755
    %v1757 = vand.u32 %v1756, 4294901760
    %1758 = vmatpush1.xpose.msra.mxu0 %v1757
    %1759 = vmatprep.subr.mxu0 0.0
    %v1760 = vand.u32 %v216, 4294901760
    %v1761 = vsub.f32 %v216, %v1760
    %v1762 = vand.u32 %v1761, 4294901760
    %1763 = vmatpush1.xpose.msra.mxu0 %v1762
    %1764 = vmatprep.subr.mxu0 0.0
    %v1765 = vand.u32 %v219, 4294901760
    %v1766 = vsub.f32 %v219, %v1765
    %v1767 = vand.u32 %v1766, 4294901760
    %1768 = vmatpush1.xpose.msra.mxu0 %v1767
    %1769 = vmatprep.subr.mxu0 0.0
    %v1770 = vand.u32 %v222, 4294901760
    %v1771 = vsub.f32 %v222, %v1770
    %v1772 = vand.u32 %v1771, 4294901760
    %1773 = vmatpush1.xpose.msra.mxu0 %v1772
    %1774 = vmatprep.subr.mxu0 0.0
    %v1775 = vand.u32 %v225, 4294901760
    %v1776 = vsub.f32 %v225, %v1775
    %v1777 = vand.u32 %v1776, 4294901760
    %1778 = vmatpush1.xpose.msra.mxu0 %v1777
    %1779 = vmatprep.subr.mxu0 0.0
    %v1780 = vand.u32 %v228, 4294901760
    %v1781 = vsub.f32 %v228, %v1780
    %v1782 = vand.u32 %v1781, 4294901760
    %1783 = vmatpush1.xpose.msra.mxu0 %v1782
    %1784 = vmatprep.subr.mxu0 0.0
    %v1785 = vand.u32 %v231, 4294901760
    %v1786 = vsub.f32 %v231, %v1785
    %v1787 = vand.u32 %v1786, 4294901760
    %1788 = vmatpush1.xpose.msra.mxu0 %v1787
    %1789 = vmatprep.subr.mxu0 0.0
    %v1790 = vand.u32 %v234, 4294901760
    %v1791 = vsub.f32 %v234, %v1790
    %v1792 = vand.u32 %v1791, 4294901760
    %1793 = vmatpush1.xpose.msra.mxu0 %v1792
    %1794 = vmatprep.subr.mxu0 0.0
    %v1795 = vand.u32 %v237, 4294901760
    %v1796 = vsub.f32 %v237, %v1795
    %v1797 = vand.u32 %v1796, 4294901760
    %1798 = vmatpush1.xpose.msra.mxu0 %v1797
    %1799 = vmatprep.subr.mxu0 0.0
    %v1800 = vand.u32 %v240, 4294901760
    %v1801 = vsub.f32 %v240, %v1800
    %v1802 = vand.u32 %v1801, 4294901760
    %1803 = vmatpush1.xpose.msra.mxu0 %v1802
    %1804 = vmatprep.subr.mxu0 0.0
    %v1805 = vand.u32 %v243, 4294901760
    %v1806 = vsub.f32 %v243, %v1805
    %v1807 = vand.u32 %v1806, 4294901760
    %1808 = vmatpush1.xpose.msra.mxu0 %v1807
    %1809 = vmatprep.subr.mxu0 0.0
    %v1810 = vand.u32 %v246, 4294901760
    %v1811 = vsub.f32 %v246, %v1810
    %v1812 = vand.u32 %v1811, 4294901760
    %1813 = vmatpush1.xpose.msra.mxu0 %v1812
    %1814 = vmatprep.subr.mxu0 0.0
    %v1815 = vand.u32 %v249, 4294901760
    %v1816 = vsub.f32 %v249, %v1815
    %v1817 = vand.u32 %v1816, 4294901760
    %1818 = vmatpush1.xpose.msra.mxu0 %v1817
    %1819 = vmatprep.subr.mxu0 0.0
    %v1820 = vand.u32 %v252, 4294901760
    %v1821 = vsub.f32 %v252, %v1820
    %v1822 = vand.u32 %v1821, 4294901760
    %1823 = vmatpush1.xpose.msra.mxu0 %v1822
    %1824 = vmatprep.subr.mxu0 0.0
    %v1825 = vand.u32 %v255, 4294901760
    %v1826 = vsub.f32 %v255, %v1825
    %v1827 = vand.u32 %v1826, 4294901760
    %1828 = vmatpush1.xpose.msra.mxu0 %v1827
    %1829 = vmatprep.subr.mxu0 0.0
    %v1830 = vand.u32 %v258, 4294901760
    %v1831 = vsub.f32 %v258, %v1830
    %v1832 = vand.u32 %v1831, 4294901760
    %1833 = vmatpush1.xpose.msra.mxu0 %v1832
    %1834 = vmatprep.subr.mxu0 0.0
    %v1835 = vand.u32 %v261, 4294901760
    %v1836 = vsub.f32 %v261, %v1835
    %v1837 = vand.u32 %v1836, 4294901760
    %1838 = vmatpush1.xpose.msra.mxu0 %v1837
    %1839 = vmatprep.subr.mxu0 0.0
    %v1840 = vand.u32 %v264, 4294901760
    %v1841 = vsub.f32 %v264, %v1840
    %v1842 = vand.u32 %v1841, 4294901760
    %1843 = vmatpush1.xpose.msra.mxu0 %v1842
    %1844 = vmatprep.subr.mxu0 0.0
    %v1845 = vand.u32 %v267, 4294901760
    %v1846 = vsub.f32 %v267, %v1845
    %v1847 = vand.u32 %v1846, 4294901760
    %1848 = vmatpush1.xpose.msra.mxu0 %v1847
    %1849 = vmatprep.subr.mxu0 0.0
    %v1850 = vand.u32 %v270, 4294901760
    %v1851 = vsub.f32 %v270, %v1850
    %v1852 = vand.u32 %v1851, 4294901760
    %1853 = vmatpush1.xpose.msra.mxu0 %v1852
    %1854 = vmatprep.subr.mxu0 0.0
    %v1855 = vand.u32 %v273, 4294901760
    %v1856 = vsub.f32 %v273, %v1855
    %v1857 = vand.u32 %v1856, 4294901760
    %1858 = vmatpush1.xpose.msra.mxu0 %v1857
    %1859 = vmatprep.subr.mxu0 0.0
    %v1860 = vand.u32 %v276, 4294901760
    %v1861 = vsub.f32 %v276, %v1860
    %v1862 = vand.u32 %v1861, 4294901760
    %1863 = vmatpush1.xpose.msra.mxu0 %v1862
    %1864 = vmatprep.subr.mxu0 0.0
    %v1865 = vand.u32 %v279, 4294901760
    %v1866 = vsub.f32 %v279, %v1865
    %v1867 = vand.u32 %v1866, 4294901760
    %1868 = vmatpush1.xpose.msra.mxu0 %v1867
    %1869 = vmatprep.subr.mxu0 0.0
    %v1870 = vand.u32 %v282, 4294901760
    %v1871 = vsub.f32 %v282, %v1870
    %v1872 = vand.u32 %v1871, 4294901760
    %1873 = vmatpush1.xpose.msra.mxu0 %v1872
    %1874 = vmatprep.subr.mxu0 0.0
    %v1875 = vand.u32 %v285, 4294901760
    %v1876 = vsub.f32 %v285, %v1875
    %v1877 = vand.u32 %v1876, 4294901760
    %1878 = vmatpush1.xpose.msra.mxu0 %v1877
    %1879 = vmatprep.subr.mxu0 0.0
    %v1880 = vand.u32 %v288, 4294901760
    %v1881 = vsub.f32 %v288, %v1880
    %v1882 = vand.u32 %v1881, 4294901760
    %1883 = vmatpush1.xpose.msra.mxu0 %v1882
    %1884 = vmatprep.subr.mxu0 0.0
    %v1885 = vand.u32 %v291, 4294901760
    %v1886 = vsub.f32 %v291, %v1885
    %v1887 = vand.u32 %v1886, 4294901760
    %1888 = vmatpush1.xpose.msra.mxu0 %v1887
    %1889 = vmatprep.subr.mxu0 0.0
    %v1890 = vand.u32 %v294, 4294901760
    %v1891 = vsub.f32 %v294, %v1890
    %v1892 = vand.u32 %v1891, 4294901760
    %1893 = vmatpush1.xpose.msra.mxu0 %v1892
    %1894 = vmatprep.mubr.f32.mxu0 0.0
    %v1895 = vand.u32 %v102, 4294901760
    %1896 = vmatmul.mubr.f32.gmra.mrb[0].mxu0 %v1895
    %v1897 = vpop.f32.mrb[0].mxu0
    %v1898 = vadd.f32 %v1730, %v1897
    %v1899 = vpop.f32.mrb[0].mxu0
    %v1900 = vadd.f32 %v1732, %v1899
    %1901 = vdwg.mxu0
    %1902 = vmatprep.subr.mxu0 0.0
    %v1903 = vand.u32 %v201, 4294901760
    %1904 = vmatpush1.xpose.msra.mxu0 %v1903
    %1905 = vmatprep.subr.mxu0 0.0
    %v1906 = vand.u32 %v204, 4294901760
    %1907 = vmatpush1.xpose.msra.mxu0 %v1906
    %1908 = vmatprep.subr.mxu0 0.0
    %v1909 = vand.u32 %v207, 4294901760
    %1910 = vmatpush1.xpose.msra.mxu0 %v1909
    %1911 = vmatprep.subr.mxu0 0.0
    %v1912 = vand.u32 %v210, 4294901760
    %1913 = vmatpush1.xpose.msra.mxu0 %v1912
    %1914 = vmatprep.subr.mxu0 0.0
    %v1915 = vand.u32 %v213, 4294901760
    %1916 = vmatpush1.xpose.msra.mxu0 %v1915
    %1917 = vmatprep.subr.mxu0 0.0
    %v1918 = vand.u32 %v216, 4294901760
    %1919 = vmatpush1.xpose.msra.mxu0 %v1918
    %1920 = vmatprep.subr.mxu0 0.0
    %v1921 = vand.u32 %v219, 4294901760
    %1922 = vmatpush1.xpose.msra.mxu0 %v1921
    %1923 = vmatprep.subr.mxu0 0.0
    %v1924 = vand.u32 %v222, 4294901760
    %1925 = vmatpush1.xpose.msra.mxu0 %v1924
    %1926 = vmatprep.subr.mxu0 0.0
    %v1927 = vand.u32 %v225, 4294901760
    %1928 = vmatpush1.xpose.msra.mxu0 %v1927
    %1929 = vmatprep.subr.mxu0 0.0
    %v1930 = vand.u32 %v228, 4294901760
    %1931 = vmatpush1.xpose.msra.mxu0 %v1930
    %1932 = vmatprep.subr.mxu0 0.0
    %v1933 = vand.u32 %v231, 4294901760
    %1934 = vmatpush1.xpose.msra.mxu0 %v1933
    %1935 = vmatprep.subr.mxu0 0.0
    %v1936 = vand.u32 %v234, 4294901760
    %1937 = vmatpush1.xpose.msra.mxu0 %v1936
    %1938 = vmatprep.subr.mxu0 0.0
    %v1939 = vand.u32 %v237, 4294901760
    %1940 = vmatpush1.xpose.msra.mxu0 %v1939
    %1941 = vmatprep.subr.mxu0 0.0
    %v1942 = vand.u32 %v240, 4294901760
    %1943 = vmatpush1.xpose.msra.mxu0 %v1942
    %1944 = vmatprep.subr.mxu0 0.0
    %v1945 = vand.u32 %v243, 4294901760
    %1946 = vmatpush1.xpose.msra.mxu0 %v1945
    %1947 = vmatprep.subr.mxu0 0.0
    %v1948 = vand.u32 %v246, 4294901760
    %1949 = vmatpush1.xpose.msra.mxu0 %v1948
    %1950 = vmatprep.subr.mxu0 0.0
    %v1951 = vand.u32 %v249, 4294901760
    %1952 = vmatpush1.xpose.msra.mxu0 %v1951
    %1953 = vmatprep.subr.mxu0 0.0
    %v1954 = vand.u32 %v252, 4294901760
    %1955 = vmatpush1.xpose.msra.mxu0 %v1954
    %1956 = vmatprep.subr.mxu0 0.0
    %v1957 = vand.u32 %v255, 4294901760
    %1958 = vmatpush1.xpose.msra.mxu0 %v1957
    %1959 = vmatprep.subr.mxu0 0.0
    %v1960 = vand.u32 %v258, 4294901760
    %1961 = vmatpush1.xpose.msra.mxu0 %v1960
    %1962 = vmatprep.subr.mxu0 0.0
    %v1963 = vand.u32 %v261, 4294901760
    %1964 = vmatpush1.xpose.msra.mxu0 %v1963
    %1965 = vmatprep.subr.mxu0 0.0
    %v1966 = vand.u32 %v264, 4294901760
    %1967 = vmatpush1.xpose.msra.mxu0 %v1966
    %1968 = vmatprep.subr.mxu0 0.0
    %v1969 = vand.u32 %v267, 4294901760
    %1970 = vmatpush1.xpose.msra.mxu0 %v1969
    %1971 = vmatprep.subr.mxu0 0.0
    %v1972 = vand.u32 %v270, 4294901760
    %1973 = vmatpush1.xpose.msra.mxu0 %v1972
    %1974 = vmatprep.subr.mxu0 0.0
    %v1975 = vand.u32 %v273, 4294901760
    %1976 = vmatpush1.xpose.msra.mxu0 %v1975
    %1977 = vmatprep.subr.mxu0 0.0
    %v1978 = vand.u32 %v276, 4294901760
    %1979 = vmatpush1.xpose.msra.mxu0 %v1978
    %1980 = vmatprep.subr.mxu0 0.0
    %v1981 = vand.u32 %v279, 4294901760
    %1982 = vmatpush1.xpose.msra.mxu0 %v1981
    %1983 = vmatprep.subr.mxu0 0.0
    %v1984 = vand.u32 %v282, 4294901760
    %1985 = vmatpush1.xpose.msra.mxu0 %v1984
    %1986 = vmatprep.subr.mxu0 0.0
    %v1987 = vand.u32 %v285, 4294901760
    %1988 = vmatpush1.xpose.msra.mxu0 %v1987
    %1989 = vmatprep.subr.mxu0 0.0
    %v1990 = vand.u32 %v288, 4294901760
    %1991 = vmatpush1.xpose.msra.mxu0 %v1990
    %1992 = vmatprep.subr.mxu0 0.0
    %v1993 = vand.u32 %v291, 4294901760
    %1994 = vmatpush1.xpose.msra.mxu0 %v1993
    %1995 = vmatprep.subr.mxu0 0.0
    %v1996 = vand.u32 %v294, 4294901760
    %1997 = vmatpush1.xpose.msra.mxu0 %v1996
    %1998 = vmatprep.mubr.f32.mxu0 0.0
    %v1999 = vand.u32 %v102, 4294901760
    %2000 = vmatmul.mubr.f32.gmra.mrb[0].mxu0 %v1999
    %v2001 = vpop.f32.mrb[0].mxu0
    %v2002 = vadd.f32 %v1898, %v2001
    %v2003 = vpop.f32.mrb[0].mxu0
    %v2004 = vadd.f32 %v1900, %v2003
    %2005 = vdwg.mxu0
    %v2006 = vxor.u32 %v1147, 2147483648
    %v2007 = vxor.u32 %v1149, 2147483648
    %v2008 = vxor.u32 %v2002, 2147483648
    %v2009 = vxor.u32 %v2004, 2147483648
    %v2010 = vmul.f32 %v2006, 1.442695
    %v2011 = vpow.pop %v2010
    %v2012 = vmul.f32 %v2007, 1.442695
    %v2013 = vpow.pop %v2012
    %v2014 = vmul.f32 %v2008, 1.442695
    %v2015 = vpow.pop %v2014
    %v2016 = vmul.f32 %v2009, 1.442695
    %v2017 = vpow.pop %v2016
    %v2018 = vadd.f32 %v2011, 1.0
    %v2019 = vadd.f32 %v2013, 1.0
    %v2020 = vadd.f32 %v2015, 1.0
    %v2021 = vadd.f32 %v2017, 1.0
    %v2022 = vrcp.pop %v2018
    %v2023 = vmul.f32 1.0, %v2022
    %v2024 = vrcp.pop %v2019
    %v2025 = vmul.f32 1.0, %v2024
    %v2026 = vrcp.pop %v2020
    %v2027 = vmul.f32 1.0, %v2026
    %v2028 = vrcp.pop %v2021
    %v2029 = vmul.f32 1.0, %v2028
    %v2030 = vld [vmem:[%s3] sm:$0xff]
    %v2031 = vld [vmem:[%s4] sm:$0xff]
    %2033 = vset.pattern.permute.xlu0 0
    %2034 = vperm.xlu0 %2033, %v2031
    %v2035 = vpop.permute.xlu0 %2034
    %vm2037 = vcmask 31744
    %v2039 = vsel %vm2037, %v2030, 0
    %vm2041 = vcmask 1043456
    %v2043 = vsel %vm2041, %v2023, 0
    %v2046 = vsel %vm2041, %v2025, 0
    %v2049 = vsel %vm2041, %v2027, 0
    %v2052 = vsel %vm2041, %v2029, 0
    %v2054 = vand.u32 %v2046, 4294901760
    %2055 = vmatprep.subr.mxu0 %v2054
    %v2056 = vand.u32 %v2043, 4294901760
    %2057 = vmatpush1.msra.mxu0 %v2056
    %2058 = vmatprep.subr.mxu0 0.0
    %2059 = vmatpush1.msra.mxu0 0.0
    %2060 = vmatprep.subr.mxu0 0.0
    %2061 = vmatpush1.msra.mxu0 0.0
    %2062 = vmatprep.subr.mxu0 0.0
    %2063 = vmatpush1.msra.mxu0 0.0
    %2064 = vmatprep.subr.mxu0 0.0
    %2065 = vmatpush1.msra.mxu0 0.0
    %2066 = vmatprep.subr.mxu0 0.0
    %2067 = vmatpush1.msra.mxu0 0.0
    %2068 = vmatprep.subr.mxu0 0.0
    %2069 = vmatpush1.msra.mxu0 0.0
    %2070 = vmatprep.subr.mxu0 0.0
    %2071 = vmatpush1.msra.mxu0 0.0
    %2072 = vmatprep.subr.mxu0 0.0
    %2073 = vmatpush1.msra.mxu0 0.0
    %2074 = vmatprep.subr.mxu0 0.0
    %2075 = vmatpush1.msra.mxu0 0.0
    %2076 = vmatprep.subr.mxu0 0.0
    %2077 = vmatpush1.msra.mxu0 0.0
    %2078 = vmatprep.subr.mxu0 0.0
    %2079 = vmatpush1.msra.mxu0 0.0
    %2080 = vmatprep.subr.mxu0 0.0
    %2081 = vmatpush1.msra.mxu0 0.0
    %2082 = vmatprep.subr.mxu0 0.0
    %2083 = vmatpush1.msra.mxu0 0.0
    %2084 = vmatprep.subr.mxu0 0.0
    %2085 = vmatpush1.msra.mxu0 0.0
    %2086 = vmatprep.subr.mxu0 0.0
    %2087 = vmatpush1.msra.mxu0 0.0
    %2088 = vmatprep.subr.mxu0 0.0
    %2089 = vmatpush1.msra.mxu0 0.0
    %2090 = vmatprep.subr.mxu0 0.0
    %2091 = vmatpush1.msra.mxu0 0.0
    %2092 = vmatprep.subr.mxu0 0.0
    %2093 = vmatpush1.msra.mxu0 0.0
    %2094 = vmatprep.subr.mxu0 0.0
    %2095 = vmatpush1.msra.mxu0 0.0
    %2096 = vmatprep.subr.mxu0 0.0
    %2097 = vmatpush1.msra.mxu0 0.0
    %2098 = vmatprep.subr.mxu0 0.0
    %2099 = vmatpush1.msra.mxu0 0.0
    %2100 = vmatprep.subr.mxu0 0.0
    %2101 = vmatpush1.msra.mxu0 0.0
    %2102 = vmatprep.subr.mxu0 0.0
    %2103 = vmatpush1.msra.mxu0 0.0
    %2104 = vmatprep.subr.mxu0 0.0
    %2105 = vmatpush1.msra.mxu0 0.0
    %2106 = vmatprep.subr.mxu0 0.0
    %2107 = vmatpush1.msra.mxu0 0.0
    %2108 = vmatprep.subr.mxu0 0.0
    %2109 = vmatpush1.msra.mxu0 0.0
    %2110 = vmatprep.subr.mxu0 0.0
    %2111 = vmatpush1.msra.mxu0 0.0
    %2112 = vmatprep.subr.mxu0 0.0
    %2113 = vmatpush1.msra.mxu0 0.0
    %2114 = vmatprep.subr.mxu0 0.0
    %2115 = vmatpush1.msra.mxu0 0.0
    %2116 = vmatprep.subr.mxu0 0.0
    %2117 = vmatpush1.msra.mxu0 0.0
    %2118 = vmatprep.subr.mxu0 0.0
    %2119 = vmatpush1.msra.mxu0 0.0
    %2120 = vmatprep.mubr.f32.mxu0 0.0
    %v2121 = vand.u32 %v2039, 4294901760
    %v2122 = vsub.f32 %v2039, %v2121
    %v2123 = vand.u32 %v2122, 4294901760
    %v2124 = vsub.f32 %v2122, %v2123
    %v2125 = vand.u32 %v2124, 4294901760
    %2126 = vmatmul.mubr.f32.gmra.mrb[0].mxu0 %v2125
    %v2127 = vpop.f32.mrb[0].mxu0
    %v2128 = vadd.f32 %v2035, %v2127
    %v2129 = vpop.f32.mrb[0].mxu0
    %v2130 = vadd.f32 %v2035, %v2129
    %2131 = vdwg.mxu0
    %v2132 = vand.u32 %v2046, 4294901760
    %v2133 = vsub.f32 %v2046, %v2132
    %v2134 = vand.u32 %v2133, 4294901760
    %v2135 = vsub.f32 %v2133, %v2134
    %v2136 = vand.u32 %v2135, 4294901760
    %2137 = vmatprep.subr.mxu0 %v2136
    %v2138 = vand.u32 %v2043, 4294901760
    %v2139 = vsub.f32 %v2043, %v2138
    %v2140 = vand.u32 %v2139, 4294901760
    %v2141 = vsub.f32 %v2139, %v2140
    %v2142 = vand.u32 %v2141, 4294901760
    %2143 = vmatpush1.msra.mxu0 %v2142
    %2144 = vmatprep.subr.mxu0 0.0
    %2145 = vmatpush1.msra.mxu0 0.0
    %2146 = vmatprep.subr.mxu0 0.0
    %2147 = vmatpush1.msra.mxu0 0.0
    %2148 = vmatprep.subr.mxu0 0.0
    %2149 = vmatpush1.msra.mxu0 0.0
    %2150 = vmatprep.subr.mxu0 0.0
    %2151 = vmatpush1.msra.mxu0 0.0
    %2152 = vmatprep.subr.mxu0 0.0
    %2153 = vmatpush1.msra.mxu0 0.0
    %2154 = vmatprep.subr.mxu0 0.0
    %2155 = vmatpush1.msra.mxu0 0.0
    %2156 = vmatprep.subr.mxu0 0.0
    %2157 = vmatpush1.msra.mxu0 0.0
    %2158 = vmatprep.subr.mxu0 0.0
    %2159 = vmatpush1.msra.mxu0 0.0
    %2160 = vmatprep.subr.mxu0 0.0
    %2161 = vmatpush1.msra.mxu0 0.0
    %2162 = vmatprep.subr.mxu0 0.0
    %2163 = vmatpush1.msra.mxu0 0.0
    %2164 = vmatprep.subr.mxu0 0.0
    %2165 = vmatpush1.msra.mxu0 0.0
    %2166 = vmatprep.subr.mxu0 0.0
    %2167 = vmatpush1.msra.mxu0 0.0
    %2168 = vmatprep.subr.mxu0 0.0
    %2169 = vmatpush1.msra.mxu0 0.0
    %2170 = vmatprep.subr.mxu0 0.0
    %2171 = vmatpush1.msra.mxu0 0.0
    %2172 = vmatprep.subr.mxu0 0.0
    %2173 = vmatpush1.msra.mxu0 0.0
    %2174 = vmatprep.subr.mxu0 0.0
    %2175 = vmatpush1.msra.mxu0 0.0
    %2176 = vmatprep.subr.mxu0 0.0
    %2177 = vmatpush1.msra.mxu0 0.0
    %2178 = vmatprep.subr.mxu0 0.0
    %2179 = vmatpush1.msra.mxu0 0.0
    %2180 = vmatprep.subr.mxu0 0.0
    %2181 = vmatpush1.msra.mxu0 0.0
    %2182 = vmatprep.subr.mxu0 0.0
    %2183 = vmatpush1.msra.mxu0 0.0
    %2184 = vmatprep.subr.mxu0 0.0
    %2185 = vmatpush1.msra.mxu0 0.0
    %2186 = vmatprep.subr.mxu0 0.0
    %2187 = vmatpush1.msra.mxu0 0.0
    %2188 = vmatprep.subr.mxu0 0.0
    %2189 = vmatpush1.msra.mxu0 0.0
    %2190 = vmatprep.subr.mxu0 0.0
    %2191 = vmatpush1.msra.mxu0 0.0
    %2192 = vmatprep.subr.mxu0 0.0
    %2193 = vmatpush1.msra.mxu0 0.0
    %2194 = vmatprep.subr.mxu0 0.0
    %2195 = vmatpush1.msra.mxu0 0.0
    %2196 = vmatprep.subr.mxu0 0.0
    %2197 = vmatpush1.msra.mxu0 0.0
    %2198 = vmatprep.subr.mxu0 0.0
    %2199 = vmatpush1.msra.mxu0 0.0
    %2200 = vmatprep.subr.mxu0 0.0
    %2201 = vmatpush1.msra.mxu0 0.0
    %2202 = vmatprep.subr.mxu0 0.0
    %2203 = vmatpush1.msra.mxu0 0.0
    %2204 = vmatprep.subr.mxu0 0.0
    %2205 = vmatpush1.msra.mxu0 0.0
    %2206 = vmatprep.mubr.f32.mxu0 0.0
    %v2207 = vand.u32 %v2039, 4294901760
    %2208 = vmatmul.mubr.f32.gmra.mrb[0].mxu0 %v2207
    %v2209 = vpop.f32.mrb[0].mxu0
    %v2210 = vadd.f32 %v2128, %v2209
    %v2211 = vpop.f32.mrb[0].mxu0
    %v2212 = vadd.f32 %v2130, %v2211
    %2213 = vdwg.mxu0
    %v2214 = vand.u32 %v2046, 4294901760
    %v2215 = vsub.f32 %v2046, %v2214
    %2216 = vmatprep.subr.mxu0 %v2215
    %v2217 = vand.u32 %v2043, 4294901760
    %v2218 = vsub.f32 %v2043, %v2217
    %2219 = vmatpush1.msra.mxu0 %v2218
    %2220 = vmatprep.subr.mxu0 0.0
    %2221 = vmatpush1.msra.mxu0 0.0
    %2222 = vmatprep.subr.mxu0 0.0
    %2223 = vmatpush1.msra.mxu0 0.0
    %2224 = vmatprep.subr.mxu0 0.0
    %2225 = vmatpush1.msra.mxu0 0.0
    %2226 = vmatprep.subr.mxu0 0.0
    %2227 = vmatpush1.msra.mxu0 0.0
    %2228 = vmatprep.subr.mxu0 0.0
    %2229 = vmatpush1.msra.mxu0 0.0
    %2230 = vmatprep.subr.mxu0 0.0
    %2231 = vmatpush1.msra.mxu0 0.0
    %2232 = vmatprep.subr.mxu0 0.0
    %2233 = vmatpush1.msra.mxu0 0.0
    %2234 = vmatprep.subr.mxu0 0.0
    %2235 = vmatpush1.msra.mxu0 0.0
    %2236 = vmatprep.subr.mxu0 0.0
    %2237 = vmatpush1.msra.mxu0 0.0
    %2238 = vmatprep.subr.mxu0 0.0
    %2239 = vmatpush1.msra.mxu0 0.0
    %2240 = vmatprep.subr.mxu0 0.0
    %2241 = vmatpush1.msra.mxu0 0.0
    %2242 = vmatprep.subr.mxu0 0.0
    %2243 = vmatpush1.msra.mxu0 0.0
    %2244 = vmatprep.subr.mxu0 0.0
    %2245 = vmatpush1.msra.mxu0 0.0
    %2246 = vmatprep.subr.mxu0 0.0
    %2247 = vmatpush1.msra.mxu0 0.0
    %2248 = vmatprep.subr.mxu0 0.0
    %2249 = vmatpush1.msra.mxu0 0.0
    %2250 = vmatprep.subr.mxu0 0.0
    %2251 = vmatpush1.msra.mxu0 0.0
    %2252 = vmatprep.subr.mxu0 0.0
    %2253 = vmatpush1.msra.mxu0 0.0
    %2254 = vmatprep.subr.mxu0 0.0
    %2255 = vmatpush1.msra.mxu0 0.0
    %2256 = vmatprep.subr.mxu0 0.0
    %2257 = vmatpush1.msra.mxu0 0.0
    %2258 = vmatprep.subr.mxu0 0.0
    %2259 = vmatpush1.msra.mxu0 0.0
    %2260 = vmatprep.subr.mxu0 0.0
    %2261 = vmatpush1.msra.mxu0 0.0
    %2262 = vmatprep.subr.mxu0 0.0
    %2263 = vmatpush1.msra.mxu0 0.0
    %2264 = vmatprep.subr.mxu0 0.0
    %2265 = vmatpush1.msra.mxu0 0.0
    %2266 = vmatprep.subr.mxu0 0.0
    %2267 = vmatpush1.msra.mxu0 0.0
    %2268 = vmatprep.subr.mxu0 0.0
    %2269 = vmatpush1.msra.mxu0 0.0
    %2270 = vmatprep.subr.mxu0 0.0
    %2271 = vmatpush1.msra.mxu0 0.0
    %2272 = vmatprep.subr.mxu0 0.0
    %2273 = vmatpush1.msra.mxu0 0.0
    %2274 = vmatprep.subr.mxu0 0.0
    %2275 = vmatpush1.msra.mxu0 0.0
    %2276 = vmatprep.subr.mxu0 0.0
    %2277 = vmatpush1.msra.mxu0 0.0
    %2278 = vmatprep.subr.mxu0 0.0
    %2279 = vmatpush1.msra.mxu0 0.0
    %2280 = vmatprep.subr.mxu0 0.0
    %2281 = vmatpush1.msra.mxu0 0.0
    %2282 = vmatprep.mubr.f32.mxu0 0.0
    %v2283 = vand.u32 %v2039, 4294901760
    %v2284 = vsub.f32 %v2039, %v2283
    %2285 = vmatmul.mubr.f32.gmra.mrb[0].mxu0 %v2284
    %v2286 = vpop.f32.mrb[0].mxu0
    %v2287 = vadd.f32 %v2210, %v2286
    %v2288 = vpop.f32.mrb[0].mxu0
    %v2289 = vadd.f32 %v2212, %v2288
    %2290 = vdwg.mxu0
    %v2291 = vand.u32 %v2046, 4294901760
    %2292 = vmatprep.subr.mxu0 %v2291
    %v2293 = vand.u32 %v2043, 4294901760
    %2294 = vmatpush1.msra.mxu0 %v2293
    %2295 = vmatprep.subr.mxu0 0.0
    %2296 = vmatpush1.msra.mxu0 0.0
    %2297 = vmatprep.subr.mxu0 0.0
    %2298 = vmatpush1.msra.mxu0 0.0
    %2299 = vmatprep.subr.mxu0 0.0
    %2300 = vmatpush1.msra.mxu0 0.0
    %2301 = vmatprep.subr.mxu0 0.0
    %2302 = vmatpush1.msra.mxu0 0.0
    %2303 = vmatprep.subr.mxu0 0.0
    %2304 = vmatpush1.msra.mxu0 0.0
    %2305 = vmatprep.subr.mxu0 0.0
    %2306 = vmatpush1.msra.mxu0 0.0
    %2307 = vmatprep.subr.mxu0 0.0
    %2308 = vmatpush1.msra.mxu0 0.0
    %2309 = vmatprep.subr.mxu0 0.0
    %2310 = vmatpush1.msra.mxu0 0.0
    %2311 = vmatprep.subr.mxu0 0.0
    %2312 = vmatpush1.msra.mxu0 0.0
    %2313 = vmatprep.subr.mxu0 0.0
    %2314 = vmatpush1.msra.mxu0 0.0
    %2315 = vmatprep.subr.mxu0 0.0
    %2316 = vmatpush1.msra.mxu0 0.0
    %2317 = vmatprep.subr.mxu0 0.0
    %2318 = vmatpush1.msra.mxu0 0.0
    %2319 = vmatprep.subr.mxu0 0.0
    %2320 = vmatpush1.msra.mxu0 0.0
    %2321 = vmatprep.subr.mxu0 0.0
    %2322 = vmatpush1.msra.mxu0 0.0
    %2323 = vmatprep.subr.mxu0 0.0
    %2324 = vmatpush1.msra.mxu0 0.0
    %2325 = vmatprep.subr.mxu0 0.0
    %2326 = vmatpush1.msra.mxu0 0.0
    %2327 = vmatprep.subr.mxu0 0.0
    %2328 = vmatpush1.msra.mxu0 0.0
    %2329 = vmatprep.subr.mxu0 0.0
    %2330 = vmatpush1.msra.mxu0 0.0
    %2331 = vmatprep.subr.mxu0 0.0
    %2332 = vmatpush1.msra.mxu0 0.0
    %2333 = vmatprep.subr.mxu0 0.0
    %2334 = vmatpush1.msra.mxu0 0.0
    %2335 = vmatprep.subr.mxu0 0.0
    %2336 = vmatpush1.msra.mxu0 0.0
    %2337 = vmatprep.subr.mxu0 0.0
    %2338 = vmatpush1.msra.mxu0 0.0
    %2339 = vmatprep.subr.mxu0 0.0
    %2340 = vmatpush1.msra.mxu0 0.0
    %2341 = vmatprep.subr.mxu0 0.0
    %2342 = vmatpush1.msra.mxu0 0.0
    %2343 = vmatprep.subr.mxu0 0.0
    %2344 = vmatpush1.msra.mxu0 0.0
    %2345 = vmatprep.subr.mxu0 0.0
    %2346 = vmatpush1.msra.mxu0 0.0
    %2347 = vmatprep.subr.mxu0 0.0
    %2348 = vmatpush1.msra.mxu0 0.0
    %2349 = vmatprep.subr.mxu0 0.0
    %2350 = vmatpush1.msra.mxu0 0.0
    %2351 = vmatprep.subr.mxu0 0.0
    %2352 = vmatpush1.msra.mxu0 0.0
    %2353 = vmatprep.subr.mxu0 0.0
    %2354 = vmatpush1.msra.mxu0 0.0
    %2355 = vmatprep.subr.mxu0 0.0
    %2356 = vmatpush1.msra.mxu0 0.0
    %2357 = vmatprep.mubr.f32.mxu0 0.0
    %v2358 = vand.u32 %v2039, 4294901760
    %v2359 = vsub.f32 %v2039, %v2358
    %v2360 = vand.u32 %v2359, 4294901760
    %2361 = vmatmul.mubr.f32.gmra.mrb[0].mxu0 %v2360
    %v2362 = vpop.f32.mrb[0].mxu0
    %v2363 = vadd.f32 %v2287, %v2362
    %v2364 = vpop.f32.mrb[0].mxu0
    %v2365 = vadd.f32 %v2289, %v2364
    %2366 = vdwg.mxu0
    %v2367 = vand.u32 %v2046, 4294901760
    %v2368 = vsub.f32 %v2046, %v2367
    %v2369 = vand.u32 %v2368, 4294901760
    %2370 = vmatprep.subr.mxu0 %v2369
    %v2371 = vand.u32 %v2043, 4294901760
    %v2372 = vsub.f32 %v2043, %v2371
    %v2373 = vand.u32 %v2372, 4294901760
    %2374 = vmatpush1.msra.mxu0 %v2373
    %2375 = vmatprep.subr.mxu0 0.0
    %2376 = vmatpush1.msra.mxu0 0.0
    %2377 = vmatprep.subr.mxu0 0.0
    %2378 = vmatpush1.msra.mxu0 0.0
    %2379 = vmatprep.subr.mxu0 0.0
    %2380 = vmatpush1.msra.mxu0 0.0
    %2381 = vmatprep.subr.mxu0 0.0
    %2382 = vmatpush1.msra.mxu0 0.0
    %2383 = vmatprep.subr.mxu0 0.0
    %2384 = vmatpush1.msra.mxu0 0.0
    %2385 = vmatprep.subr.mxu0 0.0
    %2386 = vmatpush1.msra.mxu0 0.0
    %2387 = vmatprep.subr.mxu0 0.0
    %2388 = vmatpush1.msra.mxu0 0.0
    %2389 = vmatprep.subr.mxu0 0.0
    %2390 = vmatpush1.msra.mxu0 0.0
    %2391 = vmatprep.subr.mxu0 0.0
    %2392 = vmatpush1.msra.mxu0 0.0
    %2393 = vmatprep.subr.mxu0 0.0
    %2394 = vmatpush1.msra.mxu0 0.0
    %2395 = vmatprep.subr.mxu0 0.0
    %2396 = vmatpush1.msra.mxu0 0.0
    %2397 = vmatprep.subr.mxu0 0.0
    %2398 = vmatpush1.msra.mxu0 0.0
    %2399 = vmatprep.subr.mxu0 0.0
    %2400 = vmatpush1.msra.mxu0 0.0
    %2401 = vmatprep.subr.mxu0 0.0
    %2402 = vmatpush1.msra.mxu0 0.0
    %2403 = vmatprep.subr.mxu0 0.0
    %2404 = vmatpush1.msra.mxu0 0.0
    %2405 = vmatprep.subr.mxu0 0.0
    %2406 = vmatpush1.msra.mxu0 0.0
    %2407 = vmatprep.subr.mxu0 0.0
    %2408 = vmatpush1.msra.mxu0 0.0
    %2409 = vmatprep.subr.mxu0 0.0
    %2410 = vmatpush1.msra.mxu0 0.0
    %2411 = vmatprep.subr.mxu0 0.0
    %2412 = vmatpush1.msra.mxu0 0.0
    %2413 = vmatprep.subr.mxu0 0.0
    %2414 = vmatpush1.msra.mxu0 0.0
    %2415 = vmatprep.subr.mxu0 0.0
    %2416 = vmatpush1.msra.mxu0 0.0
    %2417 = vmatprep.subr.mxu0 0.0
    %2418 = vmatpush1.msra.mxu0 0.0
    %2419 = vmatprep.subr.mxu0 0.0
    %2420 = vmatpush1.msra.mxu0 0.0
    %2421 = vmatprep.subr.mxu0 0.0
    %2422 = vmatpush1.msra.mxu0 0.0
    %2423 = vmatprep.subr.mxu0 0.0
    %2424 = vmatpush1.msra.mxu0 0.0
    %2425 = vmatprep.subr.mxu0 0.0
    %2426 = vmatpush1.msra.mxu0 0.0
    %2427 = vmatprep.subr.mxu0 0.0
    %2428 = vmatpush1.msra.mxu0 0.0
    %2429 = vmatprep.subr.mxu0 0.0
    %2430 = vmatpush1.msra.mxu0 0.0
    %2431 = vmatprep.subr.mxu0 0.0
    %2432 = vmatpush1.msra.mxu0 0.0
    %2433 = vmatprep.subr.mxu0 0.0
    %2434 = vmatpush1.msra.mxu0 0.0
    %2435 = vmatprep.subr.mxu0 0.0
    %2436 = vmatpush1.msra.mxu0 0.0
    %2437 = vmatprep.mubr.f32.mxu0 0.0
    %v2438 = vand.u32 %v2039, 4294901760
    %2439 = vmatmul.mubr.f32.gmra.mrb[0].mxu0 %v2438
    %v2440 = vpop.f32.mrb[0].mxu0
    %v2441 = vadd.f32 %v2363, %v2440
    %v2442 = vpop.f32.mrb[0].mxu0
    %v2443 = vadd.f32 %v2365, %v2442
    %2444 = vdwg.mxu0
    %v2445 = vand.u32 %v2046, 4294901760
    %2446 = vmatprep.subr.mxu0 %v2445
    %v2447 = vand.u32 %v2043, 4294901760
    %2448 = vmatpush1.msra.mxu0 %v2447
    %2449 = vmatprep.subr.mxu0 0.0
    %2450 = vmatpush1.msra.mxu0 0.0
    %2451 = vmatprep.subr.mxu0 0.0
    %2452 = vmatpush1.msra.mxu0 0.0
    %2453 = vmatprep.subr.mxu0 0.0
    %2454 = vmatpush1.msra.mxu0 0.0
    %2455 = vmatprep.subr.mxu0 0.0
    %2456 = vmatpush1.msra.mxu0 0.0
    %2457 = vmatprep.subr.mxu0 0.0
    %2458 = vmatpush1.msra.mxu0 0.0
    %2459 = vmatprep.subr.mxu0 0.0
    %2460 = vmatpush1.msra.mxu0 0.0
    %2461 = vmatprep.subr.mxu0 0.0
    %2462 = vmatpush1.msra.mxu0 0.0
    %2463 = vmatprep.subr.mxu0 0.0
    %2464 = vmatpush1.msra.mxu0 0.0
    %2465 = vmatprep.subr.mxu0 0.0
    %2466 = vmatpush1.msra.mxu0 0.0
    %2467 = vmatprep.subr.mxu0 0.0
    %2468 = vmatpush1.msra.mxu0 0.0
    %2469 = vmatprep.subr.mxu0 0.0
    %2470 = vmatpush1.msra.mxu0 0.0
    %2471 = vmatprep.subr.mxu0 0.0
    %2472 = vmatpush1.msra.mxu0 0.0
    %2473 = vmatprep.subr.mxu0 0.0
    %2474 = vmatpush1.msra.mxu0 0.0
    %2475 = vmatprep.subr.mxu0 0.0
    %2476 = vmatpush1.msra.mxu0 0.0
    %2477 = vmatprep.subr.mxu0 0.0
    %2478 = vmatpush1.msra.mxu0 0.0
    %2479 = vmatprep.subr.mxu0 0.0
    %2480 = vmatpush1.msra.mxu0 0.0
    %2481 = vmatprep.subr.mxu0 0.0
    %2482 = vmatpush1.msra.mxu0 0.0
    %2483 = vmatprep.subr.mxu0 0.0
    %2484 = vmatpush1.msra.mxu0 0.0
    %2485 = vmatprep.subr.mxu0 0.0
    %2486 = vmatpush1.msra.mxu0 0.0
    %2487 = vmatprep.subr.mxu0 0.0
    %2488 = vmatpush1.msra.mxu0 0.0
    %2489 = vmatprep.subr.mxu0 0.0
    %2490 = vmatpush1.msra.mxu0 0.0
    %2491 = vmatprep.subr.mxu0 0.0
    %2492 = vmatpush1.msra.mxu0 0.0
    %2493 = vmatprep.subr.mxu0 0.0
    %2494 = vmatpush1.msra.mxu0 0.0
    %2495 = vmatprep.subr.mxu0 0.0
    %2496 = vmatpush1.msra.mxu0 0.0
    %2497 = vmatprep.subr.mxu0 0.0
    %2498 = vmatpush1.msra.mxu0 0.0
    %2499 = vmatprep.subr.mxu0 0.0
    %2500 = vmatpush1.msra.mxu0 0.0
    %2501 = vmatprep.subr.mxu0 0.0
    %2502 = vmatpush1.msra.mxu0 0.0
    %2503 = vmatprep.subr.mxu0 0.0
    %2504 = vmatpush1.msra.mxu0 0.0
    %2505 = vmatprep.subr.mxu0 0.0
    %2506 = vmatpush1.msra.mxu0 0.0
    %2507 = vmatprep.subr.mxu0 0.0
    %2508 = vmatpush1.msra.mxu0 0.0
    %2509 = vmatprep.subr.mxu0 0.0
    %2510 = vmatpush1.msra.mxu0 0.0
    %2511 = vmatprep.mubr.f32.mxu0 0.0
    %v2512 = vand.u32 %v2039, 4294901760
    %2513 = vmatmul.mubr.f32.gmra.mrb[0].mxu0 %v2512
    %v2514 = vpop.f32.mrb[0].mxu0
    %v2515 = vadd.f32 %v2441, %v2514
    %v2516 = vpop.f32.mrb[0].mxu0
    %v2517 = vadd.f32 %v2443, %v2516
    %2518 = vdwg.mxu0
    %v2519 = vand.u32 %v2052, 4294901760
    %2520 = vmatprep.subr.mxu0 %v2519
    %v2521 = vand.u32 %v2049, 4294901760
    %2522 = vmatpush1.msra.mxu0 %v2521
    %2523 = vmatprep.subr.mxu0 0.0
    %2524 = vmatpush1.msra.mxu0 0.0
    %2525 = vmatprep.subr.mxu0 0.0
    %2526 = vmatpush1.msra.mxu0 0.0
    %2527 = vmatprep.subr.mxu0 0.0
    %2528 = vmatpush1.msra.mxu0 0.0
    %2529 = vmatprep.subr.mxu0 0.0
    %2530 = vmatpush1.msra.mxu0 0.0
    %2531 = vmatprep.subr.mxu0 0.0
    %2532 = vmatpush1.msra.mxu0 0.0
    %2533 = vmatprep.subr.mxu0 0.0
    %2534 = vmatpush1.msra.mxu0 0.0
    %2535 = vmatprep.subr.mxu0 0.0
    %2536 = vmatpush1.msra.mxu0 0.0
    %2537 = vmatprep.subr.mxu0 0.0
    %2538 = vmatpush1.msra.mxu0 0.0
    %2539 = vmatprep.subr.mxu0 0.0
    %2540 = vmatpush1.msra.mxu0 0.0
    %2541 = vmatprep.subr.mxu0 0.0
    %2542 = vmatpush1.msra.mxu0 0.0
    %2543 = vmatprep.subr.mxu0 0.0
    %2544 = vmatpush1.msra.mxu0 0.0
    %2545 = vmatprep.subr.mxu0 0.0
    %2546 = vmatpush1.msra.mxu0 0.0
    %2547 = vmatprep.subr.mxu0 0.0
    %2548 = vmatpush1.msra.mxu0 0.0
    %2549 = vmatprep.subr.mxu0 0.0
    %2550 = vmatpush1.msra.mxu0 0.0
    %2551 = vmatprep.subr.mxu0 0.0
    %2552 = vmatpush1.msra.mxu0 0.0
    %2553 = vmatprep.subr.mxu0 0.0
    %2554 = vmatpush1.msra.mxu0 0.0
    %2555 = vmatprep.subr.mxu0 0.0
    %2556 = vmatpush1.msra.mxu0 0.0
    %2557 = vmatprep.subr.mxu0 0.0
    %2558 = vmatpush1.msra.mxu0 0.0
    %2559 = vmatprep.subr.mxu0 0.0
    %2560 = vmatpush1.msra.mxu0 0.0
    %2561 = vmatprep.subr.mxu0 0.0
    %2562 = vmatpush1.msra.mxu0 0.0
    %2563 = vmatprep.subr.mxu0 0.0
    %2564 = vmatpush1.msra.mxu0 0.0
    %2565 = vmatprep.subr.mxu0 0.0
    %2566 = vmatpush1.msra.mxu0 0.0
    %2567 = vmatprep.subr.mxu0 0.0
    %2568 = vmatpush1.msra.mxu0 0.0
    %2569 = vmatprep.subr.mxu0 0.0
    %2570 = vmatpush1.msra.mxu0 0.0
    %2571 = vmatprep.subr.mxu0 0.0
    %2572 = vmatpush1.msra.mxu0 0.0
    %2573 = vmatprep.subr.mxu0 0.0
    %2574 = vmatpush1.msra.mxu0 0.0
    %2575 = vmatprep.subr.mxu0 0.0
    %2576 = vmatpush1.msra.mxu0 0.0
    %2577 = vmatprep.subr.mxu0 0.0
    %2578 = vmatpush1.msra.mxu0 0.0
    %2579 = vmatprep.subr.mxu0 0.0
    %2580 = vmatpush1.msra.mxu0 0.0
    %2581 = vmatprep.subr.mxu0 0.0
    %2582 = vmatpush1.msra.mxu0 0.0
    %2583 = vmatprep.subr.mxu0 0.0
    %2584 = vmatpush1.msra.mxu0 0.0
    %2585 = vmatprep.mubr.f32.mxu0 0.0
    %v2586 = vand.u32 %v2039, 4294901760
    %v2587 = vsub.f32 %v2039, %v2586
    %v2588 = vand.u32 %v2587, 4294901760
    %v2589 = vsub.f32 %v2587, %v2588
    %v2590 = vand.u32 %v2589, 4294901760
    %2591 = vmatmul.mubr.f32.gmra.mrb[0].mxu0 %v2590
    %v2592 = vpop.f32.mrb[0].mxu0
    %v2593 = vadd.f32 %v2035, %v2592
    %v2594 = vpop.f32.mrb[0].mxu0
    %v2595 = vadd.f32 %v2035, %v2594
    %2596 = vdwg.mxu0
    %v2597 = vand.u32 %v2052, 4294901760
    %v2598 = vsub.f32 %v2052, %v2597
    %v2599 = vand.u32 %v2598, 4294901760
    %v2600 = vsub.f32 %v2598, %v2599
    %v2601 = vand.u32 %v2600, 4294901760
    %2602 = vmatprep.subr.mxu0 %v2601
    %v2603 = vand.u32 %v2049, 4294901760
    %v2604 = vsub.f32 %v2049, %v2603
    %v2605 = vand.u32 %v2604, 4294901760
    %v2606 = vsub.f32 %v2604, %v2605
    %v2607 = vand.u32 %v2606, 4294901760
    %2608 = vmatpush1.msra.mxu0 %v2607
    %2609 = vmatprep.subr.mxu0 0.0
    %2610 = vmatpush1.msra.mxu0 0.0
    %2611 = vmatprep.subr.mxu0 0.0
    %2612 = vmatpush1.msra.mxu0 0.0
    %2613 = vmatprep.subr.mxu0 0.0
    %2614 = vmatpush1.msra.mxu0 0.0
    %2615 = vmatprep.subr.mxu0 0.0
    %2616 = vmatpush1.msra.mxu0 0.0
    %2617 = vmatprep.subr.mxu0 0.0
    %2618 = vmatpush1.msra.mxu0 0.0
    %2619 = vmatprep.subr.mxu0 0.0
    %2620 = vmatpush1.msra.mxu0 0.0
    %2621 = vmatprep.subr.mxu0 0.0
    %2622 = vmatpush1.msra.mxu0 0.0
    %2623 = vmatprep.subr.mxu0 0.0
    %2624 = vmatpush1.msra.mxu0 0.0
    %2625 = vmatprep.subr.mxu0 0.0
    %2626 = vmatpush1.msra.mxu0 0.0
    %2627 = vmatprep.subr.mxu0 0.0
    %2628 = vmatpush1.msra.mxu0 0.0
    %2629 = vmatprep.subr.mxu0 0.0
    %2630 = vmatpush1.msra.mxu0 0.0
    %2631 = vmatprep.subr.mxu0 0.0
    %2632 = vmatpush1.msra.mxu0 0.0
    %2633 = vmatprep.subr.mxu0 0.0
    %2634 = vmatpush1.msra.mxu0 0.0
    %2635 = vmatprep.subr.mxu0 0.0
    %2636 = vmatpush1.msra.mxu0 0.0
    %2637 = vmatprep.subr.mxu0 0.0
    %2638 = vmatpush1.msra.mxu0 0.0
    %2639 = vmatprep.subr.mxu0 0.0
    %2640 = vmatpush1.msra.mxu0 0.0
    %2641 = vmatprep.subr.mxu0 0.0
    %2642 = vmatpush1.msra.mxu0 0.0
    %2643 = vmatprep.subr.mxu0 0.0
    %2644 = vmatpush1.msra.mxu0 0.0
    %2645 = vmatprep.subr.mxu0 0.0
    %2646 = vmatpush1.msra.mxu0 0.0
    %2647 = vmatprep.subr.mxu0 0.0
    %2648 = vmatpush1.msra.mxu0 0.0
    %2649 = vmatprep.subr.mxu0 0.0
    %2650 = vmatpush1.msra.mxu0 0.0
    %2651 = vmatprep.subr.mxu0 0.0
    %2652 = vmatpush1.msra.mxu0 0.0
    %2653 = vmatprep.subr.mxu0 0.0
    %2654 = vmatpush1.msra.mxu0 0.0
    %2655 = vmatprep.subr.mxu0 0.0
    %2656 = vmatpush1.msra.mxu0 0.0
    %2657 = vmatprep.subr.mxu0 0.0
    %2658 = vmatpush1.msra.mxu0 0.0
    %2659 = vmatprep.subr.mxu0 0.0
    %2660 = vmatpush1.msra.mxu0 0.0
    %2661 = vmatprep.subr.mxu0 0.0
    %2662 = vmatpush1.msra.mxu0 0.0
    %2663 = vmatprep.subr.mxu0 0.0
    %2664 = vmatpush1.msra.mxu0 0.0
    %2665 = vmatprep.subr.mxu0 0.0
    %2666 = vmatpush1.msra.mxu0 0.0
    %2667 = vmatprep.subr.mxu0 0.0
    %2668 = vmatpush1.msra.mxu0 0.0
    %2669 = vmatprep.subr.mxu0 0.0
    %2670 = vmatpush1.msra.mxu0 0.0
    %2671 = vmatprep.mubr.f32.mxu0 0.0
    %v2672 = vand.u32 %v2039, 4294901760
    %2673 = vmatmul.mubr.f32.gmra.mrb[0].mxu0 %v2672
    %v2674 = vpop.f32.mrb[0].mxu0
    %v2675 = vadd.f32 %v2593, %v2674
    %v2676 = vpop.f32.mrb[0].mxu0
    %v2677 = vadd.f32 %v2595, %v2676
    %2678 = vdwg.mxu0
    %v2679 = vand.u32 %v2052, 4294901760
    %v2680 = vsub.f32 %v2052, %v2679
    %2681 = vmatprep.subr.mxu0 %v2680
    %v2682 = vand.u32 %v2049, 4294901760
    %v2683 = vsub.f32 %v2049, %v2682
    %2684 = vmatpush1.msra.mxu0 %v2683
    %2685 = vmatprep.subr.mxu0 0.0
    %2686 = vmatpush1.msra.mxu0 0.0
    %2687 = vmatprep.subr.mxu0 0.0
    %2688 = vmatpush1.msra.mxu0 0.0
    %2689 = vmatprep.subr.mxu0 0.0
    %2690 = vmatpush1.msra.mxu0 0.0
    %2691 = vmatprep.subr.mxu0 0.0
    %2692 = vmatpush1.msra.mxu0 0.0
    %2693 = vmatprep.subr.mxu0 0.0
    %2694 = vmatpush1.msra.mxu0 0.0
    %2695 = vmatprep.subr.mxu0 0.0
    %2696 = vmatpush1.msra.mxu0 0.0
    %2697 = vmatprep.subr.mxu0 0.0
    %2698 = vmatpush1.msra.mxu0 0.0
    %2699 = vmatprep.subr.mxu0 0.0
    %2700 = vmatpush1.msra.mxu0 0.0
    %2701 = vmatprep.subr.mxu0 0.0
    %2702 = vmatpush1.msra.mxu0 0.0
    %2703 = vmatprep.subr.mxu0 0.0
    %2704 = vmatpush1.msra.mxu0 0.0
    %2705 = vmatprep.subr.mxu0 0.0
    %2706 = vmatpush1.msra.mxu0 0.0
    %2707 = vmatprep.subr.mxu0 0.0
    %2708 = vmatpush1.msra.mxu0 0.0
    %2709 = vmatprep.subr.mxu0 0.0
    %2710 = vmatpush1.msra.mxu0 0.0
    %2711 = vmatprep.subr.mxu0 0.0
    %2712 = vmatpush1.msra.mxu0 0.0
    %2713 = vmatprep.subr.mxu0 0.0
    %2714 = vmatpush1.msra.mxu0 0.0
    %2715 = vmatprep.subr.mxu0 0.0
    %2716 = vmatpush1.msra.mxu0 0.0
    %2717 = vmatprep.subr.mxu0 0.0
    %2718 = vmatpush1.msra.mxu0 0.0
    %2719 = vmatprep.subr.mxu0 0.0
    %2720 = vmatpush1.msra.mxu0 0.0
    %2721 = vmatprep.subr.mxu0 0.0
    %2722 = vmatpush1.msra.mxu0 0.0
    %2723 = vmatprep.subr.mxu0 0.0
    %2724 = vmatpush1.msra.mxu0 0.0
    %2725 = vmatprep.subr.mxu0 0.0
    %2726 = vmatpush1.msra.mxu0 0.0
    %2727 = vmatprep.subr.mxu0 0.0
    %2728 = vmatpush1.msra.mxu0 0.0
    %2729 = vmatprep.subr.mxu0 0.0
    %2730 = vmatpush1.msra.mxu0 0.0
    %2731 = vmatprep.subr.mxu0 0.0
    %2732 = vmatpush1.msra.mxu0 0.0
    %2733 = vmatprep.subr.mxu0 0.0
    %2734 = vmatpush1.msra.mxu0 0.0
    %2735 = vmatprep.subr.mxu0 0.0
    %2736 = vmatpush1.msra.mxu0 0.0
    %2737 = vmatprep.subr.mxu0 0.0
    %2738 = vmatpush1.msra.mxu0 0.0
    %2739 = vmatprep.subr.mxu0 0.0
    %2740 = vmatpush1.msra.mxu0 0.0
    %2741 = vmatprep.subr.mxu0 0.0
    %2742 = vmatpush1.msra.mxu0 0.0
    %2743 = vmatprep.subr.mxu0 0.0
    %2744 = vmatpush1.msra.mxu0 0.0
    %2745 = vmatprep.subr.mxu0 0.0
    %2746 = vmatpush1.msra.mxu0 0.0
    %2747 = vmatprep.mubr.f32.mxu0 0.0
    %v2748 = vand.u32 %v2039, 4294901760
    %v2749 = vsub.f32 %v2039, %v2748
    %2750 = vmatmul.mubr.f32.gmra.mrb[0].mxu0 %v2749
    %v2751 = vpop.f32.mrb[0].mxu0
    %v2752 = vadd.f32 %v2675, %v2751
    %v2753 = vpop.f32.mrb[0].mxu0
    %v2754 = vadd.f32 %v2677, %v2753
    %2755 = vdwg.mxu0
    %v2756 = vand.u32 %v2052, 4294901760
    %2757 = vmatprep.subr.mxu0 %v2756
    %v2758 = vand.u32 %v2049, 4294901760
    %2759 = vmatpush1.msra.mxu0 %v2758
    %2760 = vmatprep.subr.mxu0 0.0
    %2761 = vmatpush1.msra.mxu0 0.0
    %2762 = vmatprep.subr.mxu0 0.0
    %2763 = vmatpush1.msra.mxu0 0.0
    %2764 = vmatprep.subr.mxu0 0.0
    %2765 = vmatpush1.msra.mxu0 0.0
    %2766 = vmatprep.subr.mxu0 0.0
    %2767 = vmatpush1.msra.mxu0 0.0
    %2768 = vmatprep.subr.mxu0 0.0
    %2769 = vmatpush1.msra.mxu0 0.0
    %2770 = vmatprep.subr.mxu0 0.0
    %2771 = vmatpush1.msra.mxu0 0.0
    %2772 = vmatprep.subr.mxu0 0.0
    %2773 = vmatpush1.msra.mxu0 0.0
    %2774 = vmatprep.subr.mxu0 0.0
    %2775 = vmatpush1.msra.mxu0 0.0
    %2776 = vmatprep.subr.mxu0 0.0
    %2777 = vmatpush1.msra.mxu0 0.0
    %2778 = vmatprep.subr.mxu0 0.0
    %2779 = vmatpush1.msra.mxu0 0.0
    %2780 = vmatprep.subr.mxu0 0.0
    %2781 = vmatpush1.msra.mxu0 0.0
    %2782 = vmatprep.subr.mxu0 0.0
    %2783 = vmatpush1.msra.mxu0 0.0
    %2784 = vmatprep.subr.mxu0 0.0
    %2785 = vmatpush1.msra.mxu0 0.0
    %2786 = vmatprep.subr.mxu0 0.0
    %2787 = vmatpush1.msra.mxu0 0.0
    %2788 = vmatprep.subr.mxu0 0.0
    %2789 = vmatpush1.msra.mxu0 0.0
    %2790 = vmatprep.subr.mxu0 0.0
    %2791 = vmatpush1.msra.mxu0 0.0
    %2792 = vmatprep.subr.mxu0 0.0
    %2793 = vmatpush1.msra.mxu0 0.0
    %2794 = vmatprep.subr.mxu0 0.0
    %2795 = vmatpush1.msra.mxu0 0.0
    %2796 = vmatprep.subr.mxu0 0.0
    %2797 = vmatpush1.msra.mxu0 0.0
    %2798 = vmatprep.subr.mxu0 0.0
    %2799 = vmatpush1.msra.mxu0 0.0
    %2800 = vmatprep.subr.mxu0 0.0
    %2801 = vmatpush1.msra.mxu0 0.0
    %2802 = vmatprep.subr.mxu0 0.0
    %2803 = vmatpush1.msra.mxu0 0.0
    %2804 = vmatprep.subr.mxu0 0.0
    %2805 = vmatpush1.msra.mxu0 0.0
    %2806 = vmatprep.subr.mxu0 0.0
    %2807 = vmatpush1.msra.mxu0 0.0
    %2808 = vmatprep.subr.mxu0 0.0
    %2809 = vmatpush1.msra.mxu0 0.0
    %2810 = vmatprep.subr.mxu0 0.0
    %2811 = vmatpush1.msra.mxu0 0.0
    %2812 = vmatprep.subr.mxu0 0.0
    %2813 = vmatpush1.msra.mxu0 0.0
    %2814 = vmatprep.subr.mxu0 0.0
    %2815 = vmatpush1.msra.mxu0 0.0
    %2816 = vmatprep.subr.mxu0 0.0
    %2817 = vmatpush1.msra.mxu0 0.0
    %2818 = vmatprep.subr.mxu0 0.0
    %2819 = vmatpush1.msra.mxu0 0.0
    %2820 = vmatprep.subr.mxu0 0.0
    %2821 = vmatpush1.msra.mxu0 0.0
    %2822 = vmatprep.mubr.f32.mxu0 0.0
    %v2823 = vand.u32 %v2039, 4294901760
    %v2824 = vsub.f32 %v2039, %v2823
    %v2825 = vand.u32 %v2824, 4294901760
    %2826 = vmatmul.mubr.f32.gmra.mrb[0].mxu0 %v2825
    %v2827 = vpop.f32.mrb[0].mxu0
    %v2828 = vadd.f32 %v2752, %v2827
    %v2829 = vpop.f32.mrb[0].mxu0
    %v2830 = vadd.f32 %v2754, %v2829
    %2831 = vdwg.mxu0
    %v2832 = vand.u32 %v2052, 4294901760
    %v2833 = vsub.f32 %v2052, %v2832
    %v2834 = vand.u32 %v2833, 4294901760
    %2835 = vmatprep.subr.mxu0 %v2834
    %v2836 = vand.u32 %v2049, 4294901760
    %v2837 = vsub.f32 %v2049, %v2836
    %v2838 = vand.u32 %v2837, 4294901760
    %2839 = vmatpush1.msra.mxu0 %v2838
    %2840 = vmatprep.subr.mxu0 0.0
    %2841 = vmatpush1.msra.mxu0 0.0
    %2842 = vmatprep.subr.mxu0 0.0
    %2843 = vmatpush1.msra.mxu0 0.0
    %2844 = vmatprep.subr.mxu0 0.0
    %2845 = vmatpush1.msra.mxu0 0.0
    %2846 = vmatprep.subr.mxu0 0.0
    %2847 = vmatpush1.msra.mxu0 0.0
    %2848 = vmatprep.subr.mxu0 0.0
    %2849 = vmatpush1.msra.mxu0 0.0
    %2850 = vmatprep.subr.mxu0 0.0
    %2851 = vmatpush1.msra.mxu0 0.0
    %2852 = vmatprep.subr.mxu0 0.0
    %2853 = vmatpush1.msra.mxu0 0.0
    %2854 = vmatprep.subr.mxu0 0.0
    %2855 = vmatpush1.msra.mxu0 0.0
    %2856 = vmatprep.subr.mxu0 0.0
    %2857 = vmatpush1.msra.mxu0 0.0
    %2858 = vmatprep.subr.mxu0 0.0
    %2859 = vmatpush1.msra.mxu0 0.0
    %2860 = vmatprep.subr.mxu0 0.0
    %2861 = vmatpush1.msra.mxu0 0.0
    %2862 = vmatprep.subr.mxu0 0.0
    %2863 = vmatpush1.msra.mxu0 0.0
    %2864 = vmatprep.subr.mxu0 0.0
    %2865 = vmatpush1.msra.mxu0 0.0
    %2866 = vmatprep.subr.mxu0 0.0
    %2867 = vmatpush1.msra.mxu0 0.0
    %2868 = vmatprep.subr.mxu0 0.0
    %2869 = vmatpush1.msra.mxu0 0.0
    %2870 = vmatprep.subr.mxu0 0.0
    %2871 = vmatpush1.msra.mxu0 0.0
    %2872 = vmatprep.subr.mxu0 0.0
    %2873 = vmatpush1.msra.mxu0 0.0
    %2874 = vmatprep.subr.mxu0 0.0
    %2875 = vmatpush1.msra.mxu0 0.0
    %2876 = vmatprep.subr.mxu0 0.0
    %2877 = vmatpush1.msra.mxu0 0.0
    %2878 = vmatprep.subr.mxu0 0.0
    %2879 = vmatpush1.msra.mxu0 0.0
    %2880 = vmatprep.subr.mxu0 0.0
    %2881 = vmatpush1.msra.mxu0 0.0
    %2882 = vmatprep.subr.mxu0 0.0
    %2883 = vmatpush1.msra.mxu0 0.0
    %2884 = vmatprep.subr.mxu0 0.0
    %2885 = vmatpush1.msra.mxu0 0.0
    %2886 = vmatprep.subr.mxu0 0.0
    %2887 = vmatpush1.msra.mxu0 0.0
    %2888 = vmatprep.subr.mxu0 0.0
    %2889 = vmatpush1.msra.mxu0 0.0
    %2890 = vmatprep.subr.mxu0 0.0
    %2891 = vmatpush1.msra.mxu0 0.0
    %2892 = vmatprep.subr.mxu0 0.0
    %2893 = vmatpush1.msra.mxu0 0.0
    %2894 = vmatprep.subr.mxu0 0.0
    %2895 = vmatpush1.msra.mxu0 0.0
    %2896 = vmatprep.subr.mxu0 0.0
    %2897 = vmatpush1.msra.mxu0 0.0
    %2898 = vmatprep.subr.mxu0 0.0
    %2899 = vmatpush1.msra.mxu0 0.0
    %2900 = vmatprep.subr.mxu0 0.0
    %2901 = vmatpush1.msra.mxu0 0.0
    %2902 = vmatprep.mubr.f32.mxu0 0.0
    %v2903 = vand.u32 %v2039, 4294901760
    %2904 = vmatmul.mubr.f32.gmra.mrb[0].mxu0 %v2903
    %v2905 = vpop.f32.mrb[0].mxu0
    %v2906 = vadd.f32 %v2828, %v2905
    %v2907 = vpop.f32.mrb[0].mxu0
    %v2908 = vadd.f32 %v2830, %v2907
    %2909 = vdwg.mxu0
    %v2910 = vand.u32 %v2052, 4294901760
    %2911 = vmatprep.subr.mxu0 %v2910
    %v2912 = vand.u32 %v2049, 4294901760
    %2913 = vmatpush1.msra.mxu0 %v2912
    %2914 = vmatprep.subr.mxu0 0.0
    %2915 = vmatpush1.msra.mxu0 0.0
    %2916 = vmatprep.subr.mxu0 0.0
    %2917 = vmatpush1.msra.mxu0 0.0
    %2918 = vmatprep.subr.mxu0 0.0
    %2919 = vmatpush1.msra.mxu0 0.0
    %2920 = vmatprep.subr.mxu0 0.0
    %2921 = vmatpush1.msra.mxu0 0.0
    %2922 = vmatprep.subr.mxu0 0.0
    %2923 = vmatpush1.msra.mxu0 0.0
    %2924 = vmatprep.subr.mxu0 0.0
    %2925 = vmatpush1.msra.mxu0 0.0
    %2926 = vmatprep.subr.mxu0 0.0
    %2927 = vmatpush1.msra.mxu0 0.0
    %2928 = vmatprep.subr.mxu0 0.0
    %2929 = vmatpush1.msra.mxu0 0.0
    %2930 = vmatprep.subr.mxu0 0.0
    %2931 = vmatpush1.msra.mxu0 0.0
    %2932 = vmatprep.subr.mxu0 0.0
    %2933 = vmatpush1.msra.mxu0 0.0
    %2934 = vmatprep.subr.mxu0 0.0
    %2935 = vmatpush1.msra.mxu0 0.0
    %2936 = vmatprep.subr.mxu0 0.0
    %2937 = vmatpush1.msra.mxu0 0.0
    %2938 = vmatprep.subr.mxu0 0.0
    %2939 = vmatpush1.msra.mxu0 0.0
    %2940 = vmatprep.subr.mxu0 0.0
    %2941 = vmatpush1.msra.mxu0 0.0
    %2942 = vmatprep.subr.mxu0 0.0
    %2943 = vmatpush1.msra.mxu0 0.0
    %2944 = vmatprep.subr.mxu0 0.0
    %2945 = vmatpush1.msra.mxu0 0.0
    %2946 = vmatprep.subr.mxu0 0.0
    %2947 = vmatpush1.msra.mxu0 0.0
    %2948 = vmatprep.subr.mxu0 0.0
    %2949 = vmatpush1.msra.mxu0 0.0
    %2950 = vmatprep.subr.mxu0 0.0
    %2951 = vmatpush1.msra.mxu0 0.0
    %2952 = vmatprep.subr.mxu0 0.0
    %2953 = vmatpush1.msra.mxu0 0.0
    %2954 = vmatprep.subr.mxu0 0.0
    %2955 = vmatpush1.msra.mxu0 0.0
    %2956 = vmatprep.subr.mxu0 0.0
    %2957 = vmatpush1.msra.mxu0 0.0
    %2958 = vmatprep.subr.mxu0 0.0
    %2959 = vmatpush1.msra.mxu0 0.0
    %2960 = vmatprep.subr.mxu0 0.0
    %2961 = vmatpush1.msra.mxu0 0.0
    %2962 = vmatprep.subr.mxu0 0.0
    %2963 = vmatpush1.msra.mxu0 0.0
    %2964 = vmatprep.subr.mxu0 0.0
    %2965 = vmatpush1.msra.mxu0 0.0
    %2966 = vmatprep.subr.mxu0 0.0
    %2967 = vmatpush1.msra.mxu0 0.0
    %2968 = vmatprep.subr.mxu0 0.0
    %2969 = vmatpush1.msra.mxu0 0.0
    %2970 = vmatprep.subr.mxu0 0.0
    %2971 = vmatpush1.msra.mxu0 0.0
    %2972 = vmatprep.subr.mxu0 0.0
    %2973 = vmatpush1.msra.mxu0 0.0
    %2974 = vmatprep.subr.mxu0 0.0
    %2975 = vmatpush1.msra.mxu0 0.0
    %2976 = vmatprep.mubr.f32.mxu0 0.0
    %v2977 = vand.u32 %v2039, 4294901760
    %2978 = vmatmul.mubr.f32.gmra.mrb[0].mxu0 %v2977
    %v2979 = vpop.f32.mrb[0].mxu0
    %v2980 = vadd.f32 %v2906, %v2979
    %v2981 = vpop.f32.mrb[0].mxu0
    %v2982 = vadd.f32 %v2908, %v2981
    %2983 = vdwg.mxu0
    %v2984 = vxor.u32 %v2515, 2147483648
    %v2985 = vxor.u32 %v2517, 2147483648
    %v2986 = vxor.u32 %v2980, 2147483648
    %v2987 = vxor.u32 %v2982, 2147483648
    %v2988 = vmul.f32 %v2984, 1.442695
    %v2989 = vpow.pop %v2988
    %v2990 = vmul.f32 %v2985, 1.442695
    %v2991 = vpow.pop %v2990
    %v2992 = vmul.f32 %v2986, 1.442695
    %v2993 = vpow.pop %v2992
    %v2994 = vmul.f32 %v2987, 1.442695
    %v2995 = vpow.pop %v2994
    %v2996 = vadd.f32 %v2989, 1.0
    %v2997 = vadd.f32 %v2991, 1.0
    %v2998 = vadd.f32 %v2993, 1.0
    %v2999 = vadd.f32 %v2995, 1.0
    %v3000 = vrcp.pop %v2996
    %v3001 = vmul.f32 1.0, %v3000
    %v3002 = vrcp.pop %v2997
    %v3003 = vmul.f32 1.0, %v3002
    %v3004 = vrcp.pop %v2998
    %v3005 = vmul.f32 1.0, %v3004
    %v3006 = vrcp.pop %v2999
    %v3007 = vmul.f32 1.0, %v3006
    %v3008 = vld [vmem:[%s5] sm:$0x1]
    %v3009 = vld [vmem:[#allocation2] sm:$0x1]
    %3011 = vset.pattern.permute.xlu0 0
    %3012 = vperm.xlu0 %3011, %v3009
    %v3013 = vpop.permute.xlu0 %3012
    %v3015 = vlaneseq
    %v3016 = vshrl.u32 %v3015, 7
    %v3017 = vsub.s32 0, %v3016
    %v3018 = vrot.slane %v3013, %v3017
    %vm3019 = vcmask 64512
    %v3021 = vsel %vm3019, %v3008, 0
    %v3023 = vand.u32 %v3003, 4294901760
    %3024 = vmatprep.subr.mxu0 %v3023
    %v3025 = vand.u32 %v3001, 4294901760
    %3026 = vmatpush1.msra.mxu0 %v3025
    %3027 = vmatprep.subr.mxu0 0.0
    %3028 = vmatpush1.msra.mxu0 0.0
    %3029 = vmatprep.subr.mxu0 0.0
    %3030 = vmatpush1.msra.mxu0 0.0
    %3031 = vmatprep.subr.mxu0 0.0
    %3032 = vmatpush1.msra.mxu0 0.0
    %3033 = vmatprep.subr.mxu0 0.0
    %3034 = vmatpush1.msra.mxu0 0.0
    %3035 = vmatprep.subr.mxu0 0.0
    %3036 = vmatpush1.msra.mxu0 0.0
    %3037 = vmatprep.subr.mxu0 0.0
    %3038 = vmatpush1.msra.mxu0 0.0
    %3039 = vmatprep.subr.mxu0 0.0
    %3040 = vmatpush1.msra.mxu0 0.0
    %3041 = vmatprep.subr.mxu0 0.0
    %3042 = vmatpush1.msra.mxu0 0.0
    %3043 = vmatprep.subr.mxu0 0.0
    %3044 = vmatpush1.msra.mxu0 0.0
    %3045 = vmatprep.subr.mxu0 0.0
    %3046 = vmatpush1.msra.mxu0 0.0
    %3047 = vmatprep.subr.mxu0 0.0
    %3048 = vmatpush1.msra.mxu0 0.0
    %3049 = vmatprep.subr.mxu0 0.0
    %3050 = vmatpush1.msra.mxu0 0.0
    %3051 = vmatprep.subr.mxu0 0.0
    %3052 = vmatpush1.msra.mxu0 0.0
    %3053 = vmatprep.subr.mxu0 0.0
    %3054 = vmatpush1.msra.mxu0 0.0
    %3055 = vmatprep.subr.mxu0 0.0
    %3056 = vmatpush1.msra.mxu0 0.0
    %3057 = vmatprep.subr.mxu0 0.0
    %3058 = vmatpush1.msra.mxu0 0.0
    %3059 = vmatprep.subr.mxu0 0.0
    %3060 = vmatpush1.msra.mxu0 0.0
    %3061 = vmatprep.subr.mxu0 0.0
    %3062 = vmatpush1.msra.mxu0 0.0
    %3063 = vmatprep.subr.mxu0 0.0
    %3064 = vmatpush1.msra.mxu0 0.0
    %3065 = vmatprep.subr.mxu0 0.0
    %3066 = vmatpush1.msra.mxu0 0.0
    %3067 = vmatprep.subr.mxu0 0.0
    %3068 = vmatpush1.msra.mxu0 0.0
    %3069 = vmatprep.subr.mxu0 0.0
    %3070 = vmatpush1.msra.mxu0 0.0
    %3071 = vmatprep.subr.mxu0 0.0
    %3072 = vmatpush1.msra.mxu0 0.0
    %3073 = vmatprep.subr.mxu0 0.0
    %3074 = vmatpush1.msra.mxu0 0.0
    %3075 = vmatprep.subr.mxu0 0.0
    %3076 = vmatpush1.msra.mxu0 0.0
    %3077 = vmatprep.subr.mxu0 0.0
    %3078 = vmatpush1.msra.mxu0 0.0
    %3079 = vmatprep.subr.mxu0 0.0
    %3080 = vmatpush1.msra.mxu0 0.0
    %3081 = vmatprep.subr.mxu0 0.0
    %3082 = vmatpush1.msra.mxu0 0.0
    %3083 = vmatprep.subr.mxu0 0.0
    %3084 = vmatpush1.msra.mxu0 0.0
    %3085 = vmatprep.subr.mxu0 0.0
    %3086 = vmatpush1.msra.mxu0 0.0
    %3087 = vmatprep.subr.mxu0 0.0
    %3088 = vmatpush1.msra.mxu0 0.0
    %3089 = vmatprep.mubr.f32.mxu0 0.0
    %v3090 = vand.u32 %v3021, 4294901760
    %v3091 = vsub.f32 %v3021, %v3090
    %v3092 = vand.u32 %v3091, 4294901760
    %v3093 = vsub.f32 %v3091, %v3092
    %v3094 = vand.u32 %v3093, 4294901760
    %3095 = vmatmul.mubr.f32.gmra.mrb[0].mxu0 %v3094
    %v3096 = vpop.f32.mrb[0].mxu0
    %v3097 = vadd.f32 %v3018, %v3096
    %v3098 = vpop.f32.mrb[0].mxu0
    %v3099 = vadd.f32 %v3018, %v3098
    %3100 = vdwg.mxu0
    %v3101 = vand.u32 %v3003, 4294901760
    %v3102 = vsub.f32 %v3003, %v3101
    %v3103 = vand.u32 %v3102, 4294901760
    %v3104 = vsub.f32 %v3102, %v3103
    %v3105 = vand.u32 %v3104, 4294901760
    %3106 = vmatprep.subr.mxu0 %v3105
    %v3107 = vand.u32 %v3001, 4294901760
    %v3108 = vsub.f32 %v3001, %v3107
    %v3109 = vand.u32 %v3108, 4294901760
    %v3110 = vsub.f32 %v3108, %v3109
    %v3111 = vand.u32 %v3110, 4294901760
    %3112 = vmatpush1.msra.mxu0 %v3111
    %3113 = vmatprep.subr.mxu0 0.0
    %3114 = vmatpush1.msra.mxu0 0.0
    %3115 = vmatprep.subr.mxu0 0.0
    %3116 = vmatpush1.msra.mxu0 0.0
    %3117 = vmatprep.subr.mxu0 0.0
    %3118 = vmatpush1.msra.mxu0 0.0
    %3119 = vmatprep.subr.mxu0 0.0
    %3120 = vmatpush1.msra.mxu0 0.0
    %3121 = vmatprep.subr.mxu0 0.0
    %3122 = vmatpush1.msra.mxu0 0.0
    %3123 = vmatprep.subr.mxu0 0.0
    %3124 = vmatpush1.msra.mxu0 0.0
    %3125 = vmatprep.subr.mxu0 0.0
    %3126 = vmatpush1.msra.mxu0 0.0
    %3127 = vmatprep.subr.mxu0 0.0
    %3128 = vmatpush1.msra.mxu0 0.0
    %3129 = vmatprep.subr.mxu0 0.0
    %3130 = vmatpush1.msra.mxu0 0.0
    %3131 = vmatprep.subr.mxu0 0.0
    %3132 = vmatpush1.msra.mxu0 0.0
    %3133 = vmatprep.subr.mxu0 0.0
    %3134 = vmatpush1.msra.mxu0 0.0
    %3135 = vmatprep.subr.mxu0 0.0
    %3136 = vmatpush1.msra.mxu0 0.0
    %3137 = vmatprep.subr.mxu0 0.0
    %3138 = vmatpush1.msra.mxu0 0.0
    %3139 = vmatprep.subr.mxu0 0.0
    %3140 = vmatpush1.msra.mxu0 0.0
    %3141 = vmatprep.subr.mxu0 0.0
    %3142 = vmatpush1.msra.mxu0 0.0
    %3143 = vmatprep.subr.mxu0 0.0
    %3144 = vmatpush1.msra.mxu0 0.0
    %3145 = vmatprep.subr.mxu0 0.0
    %3146 = vmatpush1.msra.mxu0 0.0
    %3147 = vmatprep.subr.mxu0 0.0
    %3148 = vmatpush1.msra.mxu0 0.0
    %3149 = vmatprep.subr.mxu0 0.0
    %3150 = vmatpush1.msra.mxu0 0.0
    %3151 = vmatprep.subr.mxu0 0.0
    %3152 = vmatpush1.msra.mxu0 0.0
    %3153 = vmatprep.subr.mxu0 0.0
    %3154 = vmatpush1.msra.mxu0 0.0
    %3155 = vmatprep.subr.mxu0 0.0
    %3156 = vmatpush1.msra.mxu0 0.0
    %3157 = vmatprep.subr.mxu0 0.0
    %3158 = vmatpush1.msra.mxu0 0.0
    %3159 = vmatprep.subr.mxu0 0.0
    %3160 = vmatpush1.msra.mxu0 0.0
    %3161 = vmatprep.subr.mxu0 0.0
    %3162 = vmatpush1.msra.mxu0 0.0
    %3163 = vmatprep.subr.mxu0 0.0
    %3164 = vmatpush1.msra.mxu0 0.0
    %3165 = vmatprep.subr.mxu0 0.0
    %3166 = vmatpush1.msra.mxu0 0.0
    %3167 = vmatprep.subr.mxu0 0.0
    %3168 = vmatpush1.msra.mxu0 0.0
    %3169 = vmatprep.subr.mxu0 0.0
    %3170 = vmatpush1.msra.mxu0 0.0
    %3171 = vmatprep.subr.mxu0 0.0
    %3172 = vmatpush1.msra.mxu0 0.0
    %3173 = vmatprep.subr.mxu0 0.0
    %3174 = vmatpush1.msra.mxu0 0.0
    %3175 = vmatprep.mubr.f32.mxu0 0.0
    %v3176 = vand.u32 %v3021, 4294901760
    %3177 = vmatmul.mubr.f32.gmra.mrb[0].mxu0 %v3176
    %v3178 = vpop.f32.mrb[0].mxu0
    %v3179 = vadd.f32 %v3097, %v3178
    %v3180 = vpop.f32.mrb[0].mxu0
    %v3181 = vadd.f32 %v3099, %v3180
    %3182 = vdwg.mxu0
    %v3183 = vand.u32 %v3003, 4294901760
    %v3184 = vsub.f32 %v3003, %v3183
    %3185 = vmatprep.subr.mxu0 %v3184
    %v3186 = vand.u32 %v3001, 4294901760
    %v3187 = vsub.f32 %v3001, %v3186
    %3188 = vmatpush1.msra.mxu0 %v3187
    %3189 = vmatprep.subr.mxu0 0.0
    %3190 = vmatpush1.msra.mxu0 0.0
    %3191 = vmatprep.subr.mxu0 0.0
    %3192 = vmatpush1.msra.mxu0 0.0
    %3193 = vmatprep.subr.mxu0 0.0
    %3194 = vmatpush1.msra.mxu0 0.0
    %3195 = vmatprep.subr.mxu0 0.0
    %3196 = vmatpush1.msra.mxu0 0.0
    %3197 = vmatprep.subr.mxu0 0.0
    %3198 = vmatpush1.msra.mxu0 0.0
    %3199 = vmatprep.subr.mxu0 0.0
    %3200 = vmatpush1.msra.mxu0 0.0
    %3201 = vmatprep.subr.mxu0 0.0
    %3202 = vmatpush1.msra.mxu0 0.0
    %3203 = vmatprep.subr.mxu0 0.0
    %3204 = vmatpush1.msra.mxu0 0.0
    %3205 = vmatprep.subr.mxu0 0.0
    %3206 = vmatpush1.msra.mxu0 0.0
    %3207 = vmatprep.subr.mxu0 0.0
    %3208 = vmatpush1.msra.mxu0 0.0
    %3209 = vmatprep.subr.mxu0 0.0
    %3210 = vmatpush1.msra.mxu0 0.0
    %3211 = vmatprep.subr.mxu0 0.0
    %3212 = vmatpush1.msra.mxu0 0.0
    %3213 = vmatprep.subr.mxu0 0.0
    %3214 = vmatpush1.msra.mxu0 0.0
    %3215 = vmatprep.subr.mxu0 0.0
    %3216 = vmatpush1.msra.mxu0 0.0
    %3217 = vmatprep.subr.mxu0 0.0
    %3218 = vmatpush1.msra.mxu0 0.0
    %3219 = vmatprep.subr.mxu0 0.0
    %3220 = vmatpush1.msra.mxu0 0.0
    %3221 = vmatprep.subr.mxu0 0.0
    %3222 = vmatpush1.msra.mxu0 0.0
    %3223 = vmatprep.subr.mxu0 0.0
    %3224 = vmatpush1.msra.mxu0 0.0
    %3225 = vmatprep.subr.mxu0 0.0
    %3226 = vmatpush1.msra.mxu0 0.0
    %3227 = vmatprep.subr.mxu0 0.0
    %3228 = vmatpush1.msra.mxu0 0.0
    %3229 = vmatprep.subr.mxu0 0.0
    %3230 = vmatpush1.msra.mxu0 0.0
    %3231 = vmatprep.subr.mxu0 0.0
    %3232 = vmatpush1.msra.mxu0 0.0
    %3233 = vmatprep.subr.mxu0 0.0
    %3234 = vmatpush1.msra.mxu0 0.0
    %3235 = vmatprep.subr.mxu0 0.0
    %3236 = vmatpush1.msra.mxu0 0.0
    %3237 = vmatprep.subr.mxu0 0.0
    %3238 = vmatpush1.msra.mxu0 0.0
    %3239 = vmatprep.subr.mxu0 0.0
    %3240 = vmatpush1.msra.mxu0 0.0
    %3241 = vmatprep.subr.mxu0 0.0
    %3242 = vmatpush1.msra.mxu0 0.0
    %3243 = vmatprep.subr.mxu0 0.0
    %3244 = vmatpush1.msra.mxu0 0.0
    %3245 = vmatprep.subr.mxu0 0.0
    %3246 = vmatpush1.msra.mxu0 0.0
    %3247 = vmatprep.subr.mxu0 0.0
    %3248 = vmatpush1.msra.mxu0 0.0
    %3249 = vmatprep.subr.mxu0 0.0
    %3250 = vmatpush1.msra.mxu0 0.0
    %3251 = vmatprep.mubr.f32.mxu0 0.0
    %v3252 = vand.u32 %v3021, 4294901760
    %v3253 = vsub.f32 %v3021, %v3252
    %3254 = vmatmul.mubr.f32.gmra.mrb[0].mxu0 %v3253
    %v3255 = vpop.f32.mrb[0].mxu0
    %v3256 = vadd.f32 %v3179, %v3255
    %v3257 = vpop.f32.mrb[0].mxu0
    %v3258 = vadd.f32 %v3181, %v3257
    %3259 = vdwg.mxu0
    %v3260 = vand.u32 %v3003, 4294901760
    %3261 = vmatprep.subr.mxu0 %v3260
    %v3262 = vand.u32 %v3001, 4294901760
    %3263 = vmatpush1.msra.mxu0 %v3262
    %3264 = vmatprep.subr.mxu0 0.0
    %3265 = vmatpush1.msra.mxu0 0.0
    %3266 = vmatprep.subr.mxu0 0.0
    %3267 = vmatpush1.msra.mxu0 0.0
    %3268 = vmatprep.subr.mxu0 0.0
    %3269 = vmatpush1.msra.mxu0 0.0
    %3270 = vmatprep.subr.mxu0 0.0
    %3271 = vmatpush1.msra.mxu0 0.0
    %3272 = vmatprep.subr.mxu0 0.0
    %3273 = vmatpush1.msra.mxu0 0.0
    %3274 = vmatprep.subr.mxu0 0.0
    %3275 = vmatpush1.msra.mxu0 0.0
    %3276 = vmatprep.subr.mxu0 0.0
    %3277 = vmatpush1.msra.mxu0 0.0
    %3278 = vmatprep.subr.mxu0 0.0
    %3279 = vmatpush1.msra.mxu0 0.0
    %3280 = vmatprep.subr.mxu0 0.0
    %3281 = vmatpush1.msra.mxu0 0.0
    %3282 = vmatprep.subr.mxu0 0.0
    %3283 = vmatpush1.msra.mxu0 0.0
    %3284 = vmatprep.subr.mxu0 0.0
    %3285 = vmatpush1.msra.mxu0 0.0
    %3286 = vmatprep.subr.mxu0 0.0
    %3287 = vmatpush1.msra.mxu0 0.0
    %3288 = vmatprep.subr.mxu0 0.0
    %3289 = vmatpush1.msra.mxu0 0.0
    %3290 = vmatprep.subr.mxu0 0.0
    %3291 = vmatpush1.msra.mxu0 0.0
    %3292 = vmatprep.subr.mxu0 0.0
    %3293 = vmatpush1.msra.mxu0 0.0
    %3294 = vmatprep.subr.mxu0 0.0
    %3295 = vmatpush1.msra.mxu0 0.0
    %3296 = vmatprep.subr.mxu0 0.0
    %3297 = vmatpush1.msra.mxu0 0.0
    %3298 = vmatprep.subr.mxu0 0.0
    %3299 = vmatpush1.msra.mxu0 0.0
    %3300 = vmatprep.subr.mxu0 0.0
    %3301 = vmatpush1.msra.mxu0 0.0
    %3302 = vmatprep.subr.mxu0 0.0
    %3303 = vmatpush1.msra.mxu0 0.0
    %3304 = vmatprep.subr.mxu0 0.0
    %3305 = vmatpush1.msra.mxu0 0.0
    %3306 = vmatprep.subr.mxu0 0.0
    %3307 = vmatpush1.msra.mxu0 0.0
    %3308 = vmatprep.subr.mxu0 0.0
    %3309 = vmatpush1.msra.mxu0 0.0
    %3310 = vmatprep.subr.mxu0 0.0
    %3311 = vmatpush1.msra.mxu0 0.0
    %3312 = vmatprep.subr.mxu0 0.0
    %3313 = vmatpush1.msra.mxu0 0.0
    %3314 = vmatprep.subr.mxu0 0.0
    %3315 = vmatpush1.msra.mxu0 0.0
    %3316 = vmatprep.subr.mxu0 0.0
    %3317 = vmatpush1.msra.mxu0 0.0
    %3318 = vmatprep.subr.mxu0 0.0
    %3319 = vmatpush1.msra.mxu0 0.0
    %3320 = vmatprep.subr.mxu0 0.0
    %3321 = vmatpush1.msra.mxu0 0.0
    %3322 = vmatprep.subr.mxu0 0.0
    %3323 = vmatpush1.msra.mxu0 0.0
    %3324 = vmatprep.subr.mxu0 0.0
    %3325 = vmatpush1.msra.mxu0 0.0
    %3326 = vmatprep.mubr.f32.mxu0 0.0
    %v3327 = vand.u32 %v3021, 4294901760
    %v3328 = vsub.f32 %v3021, %v3327
    %v3329 = vand.u32 %v3328, 4294901760
    %3330 = vmatmul.mubr.f32.gmra.mrb[0].mxu0 %v3329
    %v3331 = vpop.f32.mrb[0].mxu0
    %v3332 = vadd.f32 %v3256, %v3331
    %v3333 = vpop.f32.mrb[0].mxu0
    %v3334 = vadd.f32 %v3258, %v3333
    %3335 = vdwg.mxu0
    %v3336 = vand.u32 %v3003, 4294901760
    %v3337 = vsub.f32 %v3003, %v3336
    %v3338 = vand.u32 %v3337, 4294901760
    %3339 = vmatprep.subr.mxu0 %v3338
    %v3340 = vand.u32 %v3001, 4294901760
    %v3341 = vsub.f32 %v3001, %v3340
    %v3342 = vand.u32 %v3341, 4294901760
    %3343 = vmatpush1.msra.mxu0 %v3342
    %3344 = vmatprep.subr.mxu0 0.0
    %3345 = vmatpush1.msra.mxu0 0.0
    %3346 = vmatprep.subr.mxu0 0.0
    %3347 = vmatpush1.msra.mxu0 0.0
    %3348 = vmatprep.subr.mxu0 0.0
    %3349 = vmatpush1.msra.mxu0 0.0
    %3350 = vmatprep.subr.mxu0 0.0
    %3351 = vmatpush1.msra.mxu0 0.0
    %3352 = vmatprep.subr.mxu0 0.0
    %3353 = vmatpush1.msra.mxu0 0.0
    %3354 = vmatprep.subr.mxu0 0.0
    %3355 = vmatpush1.msra.mxu0 0.0
    %3356 = vmatprep.subr.mxu0 0.0
    %3357 = vmatpush1.msra.mxu0 0.0
    %3358 = vmatprep.subr.mxu0 0.0
    %3359 = vmatpush1.msra.mxu0 0.0
    %3360 = vmatprep.subr.mxu0 0.0
    %3361 = vmatpush1.msra.mxu0 0.0
    %3362 = vmatprep.subr.mxu0 0.0
    %3363 = vmatpush1.msra.mxu0 0.0
    %3364 = vmatprep.subr.mxu0 0.0
    %3365 = vmatpush1.msra.mxu0 0.0
    %3366 = vmatprep.subr.mxu0 0.0
    %3367 = vmatpush1.msra.mxu0 0.0
    %3368 = vmatprep.subr.mxu0 0.0
    %3369 = vmatpush1.msra.mxu0 0.0
    %3370 = vmatprep.subr.mxu0 0.0
    %3371 = vmatpush1.msra.mxu0 0.0
    %3372 = vmatprep.subr.mxu0 0.0
    %3373 = vmatpush1.msra.mxu0 0.0
    %3374 = vmatprep.subr.mxu0 0.0
    %3375 = vmatpush1.msra.mxu0 0.0
    %3376 = vmatprep.subr.mxu0 0.0
    %3377 = vmatpush1.msra.mxu0 0.0
    %3378 = vmatprep.subr.mxu0 0.0
    %3379 = vmatpush1.msra.mxu0 0.0
    %3380 = vmatprep.subr.mxu0 0.0
    %3381 = vmatpush1.msra.mxu0 0.0
    %3382 = vmatprep.subr.mxu0 0.0
    %3383 = vmatpush1.msra.mxu0 0.0
    %3384 = vmatprep.subr.mxu0 0.0
    %3385 = vmatpush1.msra.mxu0 0.0
    %3386 = vmatprep.subr.mxu0 0.0
    %3387 = vmatpush1.msra.mxu0 0.0
    %3388 = vmatprep.subr.mxu0 0.0
    %3389 = vmatpush1.msra.mxu0 0.0
    %3390 = vmatprep.subr.mxu0 0.0
    %3391 = vmatpush1.msra.mxu0 0.0
    %3392 = vmatprep.subr.mxu0 0.0
    %3393 = vmatpush1.msra.mxu0 0.0
    %3394 = vmatprep.subr.mxu0 0.0
    %3395 = vmatpush1.msra.mxu0 0.0
    %3396 = vmatprep.subr.mxu0 0.0
    %3397 = vmatpush1.msra.mxu0 0.0
    %3398 = vmatprep.subr.mxu0 0.0
    %3399 = vmatpush1.msra.mxu0 0.0
    %3400 = vmatprep.subr.mxu0 0.0
    %3401 = vmatpush1.msra.mxu0 0.0
    %3402 = vmatprep.subr.mxu0 0.0
    %3403 = vmatpush1.msra.mxu0 0.0
    %3404 = vmatprep.subr.mxu0 0.0
    %3405 = vmatpush1.msra.mxu0 0.0
    %3406 = vmatprep.mubr.f32.mxu0 0.0
    %v3407 = vand.u32 %v3021, 4294901760
    %3408 = vmatmul.mubr.f32.gmra.mrb[0].mxu0 %v3407
    %v3409 = vpop.f32.mrb[0].mxu0
    %v3410 = vadd.f32 %v3332, %v3409
    %v3411 = vpop.f32.mrb[0].mxu0
    %v3412 = vadd.f32 %v3334, %v3411
    %3413 = vdwg.mxu0
    %v3414 = vand.u32 %v3003, 4294901760
    %3415 = vmatprep.subr.mxu0 %v3414
    %v3416 = vand.u32 %v3001, 4294901760
    %3417 = vmatpush1.msra.mxu0 %v3416
    %3418 = vmatprep.subr.mxu0 0.0
    %3419 = vmatpush1.msra.mxu0 0.0
    %3420 = vmatprep.subr.mxu0 0.0
    %3421 = vmatpush1.msra.mxu0 0.0
    %3422 = vmatprep.subr.mxu0 0.0
    %3423 = vmatpush1.msra.mxu0 0.0
    %3424 = vmatprep.subr.mxu0 0.0
    %3425 = vmatpush1.msra.mxu0 0.0
    %3426 = vmatprep.subr.mxu0 0.0
    %3427 = vmatpush1.msra.mxu0 0.0
    %3428 = vmatprep.subr.mxu0 0.0
    %3429 = vmatpush1.msra.mxu0 0.0
    %3430 = vmatprep.subr.mxu0 0.0
    %3431 = vmatpush1.msra.mxu0 0.0
    %3432 = vmatprep.subr.mxu0 0.0
    %3433 = vmatpush1.msra.mxu0 0.0
    %3434 = vmatprep.subr.mxu0 0.0
    %3435 = vmatpush1.msra.mxu0 0.0
    %3436 = vmatprep.subr.mxu0 0.0
    %3437 = vmatpush1.msra.mxu0 0.0
    %3438 = vmatprep.subr.mxu0 0.0
    %3439 = vmatpush1.msra.mxu0 0.0
    %3440 = vmatprep.subr.mxu0 0.0
    %3441 = vmatpush1.msra.mxu0 0.0
    %3442 = vmatprep.subr.mxu0 0.0
    %3443 = vmatpush1.msra.mxu0 0.0
    %3444 = vmatprep.subr.mxu0 0.0
    %3445 = vmatpush1.msra.mxu0 0.0
    %3446 = vmatprep.subr.mxu0 0.0
    %3447 = vmatpush1.msra.mxu0 0.0
    %3448 = vmatprep.subr.mxu0 0.0
    %3449 = vmatpush1.msra.mxu0 0.0
    %3450 = vmatprep.subr.mxu0 0.0
    %3451 = vmatpush1.msra.mxu0 0.0
    %3452 = vmatprep.subr.mxu0 0.0
    %3453 = vmatpush1.msra.mxu0 0.0
    %3454 = vmatprep.subr.mxu0 0.0
    %3455 = vmatpush1.msra.mxu0 0.0
    %3456 = vmatprep.subr.mxu0 0.0
    %3457 = vmatpush1.msra.mxu0 0.0
    %3458 = vmatprep.subr.mxu0 0.0
    %3459 = vmatpush1.msra.mxu0 0.0
    %3460 = vmatprep.subr.mxu0 0.0
    %3461 = vmatpush1.msra.mxu0 0.0
    %3462 = vmatprep.subr.mxu0 0.0
    %3463 = vmatpush1.msra.mxu0 0.0
    %3464 = vmatprep.subr.mxu0 0.0
    %3465 = vmatpush1.msra.mxu0 0.0
    %3466 = vmatprep.subr.mxu0 0.0
    %3467 = vmatpush1.msra.mxu0 0.0
    %3468 = vmatprep.subr.mxu0 0.0
    %3469 = vmatpush1.msra.mxu0 0.0
    %3470 = vmatprep.subr.mxu0 0.0
    %3471 = vmatpush1.msra.mxu0 0.0
    %3472 = vmatprep.subr.mxu0 0.0
    %3473 = vmatpush1.msra.mxu0 0.0
    %3474 = vmatprep.subr.mxu0 0.0
    %3475 = vmatpush1.msra.mxu0 0.0
    %3476 = vmatprep.subr.mxu0 0.0
    %3477 = vmatpush1.msra.mxu0 0.0
    %3478 = vmatprep.subr.mxu0 0.0
    %3479 = vmatpush1.msra.mxu0 0.0
    %3480 = vmatprep.mubr.f32.mxu0 0.0
    %v3481 = vand.u32 %v3021, 4294901760
    %3482 = vmatmul.mubr.f32.gmra.mrb[0].mxu0 %v3481
    %v3483 = vpop.f32.mrb[0].mxu0
    %v3484 = vadd.f32 %v3410, %v3483
    %v3485 = vpop.f32.mrb[0].mxu0
    %v3486 = vadd.f32 %v3412, %v3485
    %3487 = vdwg.mxu0
    %v3488 = vand.u32 %v3007, 4294901760
    %3489 = vmatprep.subr.mxu0 %v3488
    %v3490 = vand.u32 %v3005, 4294901760
    %3491 = vmatpush1.msra.mxu0 %v3490
    %3492 = vmatprep.subr.mxu0 0.0
    %3493 = vmatpush1.msra.mxu0 0.0
    %3494 = vmatprep.subr.mxu0 0.0
    %3495 = vmatpush1.msra.mxu0 0.0
    %3496 = vmatprep.subr.mxu0 0.0
    %3497 = vmatpush1.msra.mxu0 0.0
    %3498 = vmatprep.subr.mxu0 0.0
    %3499 = vmatpush1.msra.mxu0 0.0
    %3500 = vmatprep.subr.mxu0 0.0
    %3501 = vmatpush1.msra.mxu0 0.0
    %3502 = vmatprep.subr.mxu0 0.0
    %3503 = vmatpush1.msra.mxu0 0.0
    %3504 = vmatprep.subr.mxu0 0.0
    %3505 = vmatpush1.msra.mxu0 0.0
    %3506 = vmatprep.subr.mxu0 0.0
    %3507 = vmatpush1.msra.mxu0 0.0
    %3508 = vmatprep.subr.mxu0 0.0
    %3509 = vmatpush1.msra.mxu0 0.0
    %3510 = vmatprep.subr.mxu0 0.0
    %3511 = vmatpush1.msra.mxu0 0.0
    %3512 = vmatprep.subr.mxu0 0.0
    %3513 = vmatpush1.msra.mxu0 0.0
    %3514 = vmatprep.subr.mxu0 0.0
    %3515 = vmatpush1.msra.mxu0 0.0
    %3516 = vmatprep.subr.mxu0 0.0
    %3517 = vmatpush1.msra.mxu0 0.0
    %3518 = vmatprep.subr.mxu0 0.0
    %3519 = vmatpush1.msra.mxu0 0.0
    %3520 = vmatprep.subr.mxu0 0.0
    %3521 = vmatpush1.msra.mxu0 0.0
    %3522 = vmatprep.subr.mxu0 0.0
    %3523 = vmatpush1.msra.mxu0 0.0
    %3524 = vmatprep.subr.mxu0 0.0
    %3525 = vmatpush1.msra.mxu0 0.0
    %3526 = vmatprep.subr.mxu0 0.0
    %3527 = vmatpush1.msra.mxu0 0.0
    %3528 = vmatprep.subr.mxu0 0.0
    %3529 = vmatpush1.msra.mxu0 0.0
    %3530 = vmatprep.subr.mxu0 0.0
    %3531 = vmatpush1.msra.mxu0 0.0
    %3532 = vmatprep.subr.mxu0 0.0
    %3533 = vmatpush1.msra.mxu0 0.0
    %3534 = vmatprep.subr.mxu0 0.0
    %3535 = vmatpush1.msra.mxu0 0.0
    %3536 = vmatprep.subr.mxu0 0.0
    %3537 = vmatpush1.msra.mxu0 0.0
    %3538 = vmatprep.subr.mxu0 0.0
    %3539 = vmatpush1.msra.mxu0 0.0
    %3540 = vmatprep.subr.mxu0 0.0
    %3541 = vmatpush1.msra.mxu0 0.0
    %3542 = vmatprep.subr.mxu0 0.0
    %3543 = vmatpush1.msra.mxu0 0.0
    %3544 = vmatprep.subr.mxu0 0.0
    %3545 = vmatpush1.msra.mxu0 0.0
    %3546 = vmatprep.subr.mxu0 0.0
    %3547 = vmatpush1.msra.mxu0 0.0
    %3548 = vmatprep.subr.mxu0 0.0
    %3549 = vmatpush1.msra.mxu0 0.0
    %3550 = vmatprep.subr.mxu0 0.0
    %3551 = vmatpush1.msra.mxu0 0.0
    %3552 = vmatprep.subr.mxu0 0.0
    %3553 = vmatpush1.msra.mxu0 0.0
    %3554 = vmatprep.mubr.f32.mxu0 0.0
    %v3555 = vand.u32 %v3021, 4294901760
    %v3556 = vsub.f32 %v3021, %v3555
    %v3557 = vand.u32 %v3556, 4294901760
    %v3558 = vsub.f32 %v3556, %v3557
    %v3559 = vand.u32 %v3558, 4294901760
    %3560 = vmatmul.mubr.f32.gmra.mrb[0].mxu0 %v3559
    %v3561 = vpop.f32.mrb[0].mxu0
    %v3562 = vadd.f32 %v3018, %v3561
    %v3563 = vpop.f32.mrb[0].mxu0
    %v3564 = vadd.f32 %v3018, %v3563
    %3565 = vdwg.mxu0
    %v3566 = vand.u32 %v3007, 4294901760
    %v3567 = vsub.f32 %v3007, %v3566
    %v3568 = vand.u32 %v3567, 4294901760
    %v3569 = vsub.f32 %v3567, %v3568
    %v3570 = vand.u32 %v3569, 4294901760
    %3571 = vmatprep.subr.mxu0 %v3570
    %v3572 = vand.u32 %v3005, 4294901760
    %v3573 = vsub.f32 %v3005, %v3572
    %v3574 = vand.u32 %v3573, 4294901760
    %v3575 = vsub.f32 %v3573, %v3574
    %v3576 = vand.u32 %v3575, 4294901760
    %3577 = vmatpush1.msra.mxu0 %v3576
    %3578 = vmatprep.subr.mxu0 0.0
    %3579 = vmatpush1.msra.mxu0 0.0
    %3580 = vmatprep.subr.mxu0 0.0
    %3581 = vmatpush1.msra.mxu0 0.0
    %3582 = vmatprep.subr.mxu0 0.0
    %3583 = vmatpush1.msra.mxu0 0.0
    %3584 = vmatprep.subr.mxu0 0.0
    %3585 = vmatpush1.msra.mxu0 0.0
    %3586 = vmatprep.subr.mxu0 0.0
    %3587 = vmatpush1.msra.mxu0 0.0
    %3588 = vmatprep.subr.mxu0 0.0
    %3589 = vmatpush1.msra.mxu0 0.0
    %3590 = vmatprep.subr.mxu0 0.0
    %3591 = vmatpush1.msra.mxu0 0.0
    %3592 = vmatprep.subr.mxu0 0.0
    %3593 = vmatpush1.msra.mxu0 0.0
    %3594 = vmatprep.subr.mxu0 0.0
    %3595 = vmatpush1.msra.mxu0 0.0
    %3596 = vmatprep.subr.mxu0 0.0
    %3597 = vmatpush1.msra.mxu0 0.0
    %3598 = vmatprep.subr.mxu0 0.0
    %3599 = vmatpush1.msra.mxu0 0.0
    %3600 = vmatprep.subr.mxu0 0.0
    %3601 = vmatpush1.msra.mxu0 0.0
    %3602 = vmatprep.subr.mxu0 0.0
    %3603 = vmatpush1.msra.mxu0 0.0
    %3604 = vmatprep.subr.mxu0 0.0
    %3605 = vmatpush1.msra.mxu0 0.0
    %3606 = vmatprep.subr.mxu0 0.0
    %3607 = vmatpush1.msra.mxu0 0.0
    %3608 = vmatprep.subr.mxu0 0.0
    %3609 = vmatpush1.msra.mxu0 0.0
    %3610 = vmatprep.subr.mxu0 0.0
    %3611 = vmatpush1.msra.mxu0 0.0
    %3612 = vmatprep.subr.mxu0 0.0
    %3613 = vmatpush1.msra.mxu0 0.0
    %3614 = vmatprep.subr.mxu0 0.0
    %3615 = vmatpush1.msra.mxu0 0.0
    %3616 = vmatprep.subr.mxu0 0.0
    %3617 = vmatpush1.msra.mxu0 0.0
    %3618 = vmatprep.subr.mxu0 0.0
    %3619 = vmatpush1.msra.mxu0 0.0
    %3620 = vmatprep.subr.mxu0 0.0
    %3621 = vmatpush1.msra.mxu0 0.0
    %3622 = vmatprep.subr.mxu0 0.0
    %3623 = vmatpush1.msra.mxu0 0.0
    %3624 = vmatprep.subr.mxu0 0.0
    %3625 = vmatpush1.msra.mxu0 0.0
    %3626 = vmatprep.subr.mxu0 0.0
    %3627 = vmatpush1.msra.mxu0 0.0
    %3628 = vmatprep.subr.mxu0 0.0
    %3629 = vmatpush1.msra.mxu0 0.0
    %3630 = vmatprep.subr.mxu0 0.0
    %3631 = vmatpush1.msra.mxu0 0.0
    %3632 = vmatprep.subr.mxu0 0.0
    %3633 = vmatpush1.msra.mxu0 0.0
    %3634 = vmatprep.subr.mxu0 0.0
    %3635 = vmatpush1.msra.mxu0 0.0
    %3636 = vmatprep.subr.mxu0 0.0
    %3637 = vmatpush1.msra.mxu0 0.0
    %3638 = vmatprep.subr.mxu0 0.0
    %3639 = vmatpush1.msra.mxu0 0.0
    %3640 = vmatprep.mubr.f32.mxu0 0.0
    %v3641 = vand.u32 %v3021, 4294901760
    %3642 = vmatmul.mubr.f32.gmra.mrb[0].mxu0 %v3641
    %v3643 = vpop.f32.mrb[0].mxu0
    %v3644 = vadd.f32 %v3562, %v3643
    %v3645 = vpop.f32.mrb[0].mxu0
    %v3646 = vadd.f32 %v3564, %v3645
    %3647 = vdwg.mxu0
    %v3648 = vand.u32 %v3007, 4294901760
    %v3649 = vsub.f32 %v3007, %v3648
    %3650 = vmatprep.subr.mxu0 %v3649
    %v3651 = vand.u32 %v3005, 4294901760
    %v3652 = vsub.f32 %v3005, %v3651
    %3653 = vmatpush1.msra.mxu0 %v3652
    %3654 = vmatprep.subr.mxu0 0.0
    %3655 = vmatpush1.msra.mxu0 0.0
    %3656 = vmatprep.subr.mxu0 0.0
    %3657 = vmatpush1.msra.mxu0 0.0
    %3658 = vmatprep.subr.mxu0 0.0
    %3659 = vmatpush1.msra.mxu0 0.0
    %3660 = vmatprep.subr.mxu0 0.0
    %3661 = vmatpush1.msra.mxu0 0.0
    %3662 = vmatprep.subr.mxu0 0.0
    %3663 = vmatpush1.msra.mxu0 0.0
    %3664 = vmatprep.subr.mxu0 0.0
    %3665 = vmatpush1.msra.mxu0 0.0
    %3666 = vmatprep.subr.mxu0 0.0
    %3667 = vmatpush1.msra.mxu0 0.0
    %3668 = vmatprep.subr.mxu0 0.0
    %3669 = vmatpush1.msra.mxu0 0.0
    %3670 = vmatprep.subr.mxu0 0.0
    %3671 = vmatpush1.msra.mxu0 0.0
    %3672 = vmatprep.subr.mxu0 0.0
    %3673 = vmatpush1.msra.mxu0 0.0
    %3674 = vmatprep.subr.mxu0 0.0
    %3675 = vmatpush1.msra.mxu0 0.0
    %3676 = vmatprep.subr.mxu0 0.0
    %3677 = vmatpush1.msra.mxu0 0.0
    %3678 = vmatprep.subr.mxu0 0.0
    %3679 = vmatpush1.msra.mxu0 0.0
    %3680 = vmatprep.subr.mxu0 0.0
    %3681 = vmatpush1.msra.mxu0 0.0
    %3682 = vmatprep.subr.mxu0 0.0
    %3683 = vmatpush1.msra.mxu0 0.0
    %3684 = vmatprep.subr.mxu0 0.0
    %3685 = vmatpush1.msra.mxu0 0.0
    %3686 = vmatprep.subr.mxu0 0.0
    %3687 = vmatpush1.msra.mxu0 0.0
    %3688 = vmatprep.subr.mxu0 0.0
    %3689 = vmatpush1.msra.mxu0 0.0
    %3690 = vmatprep.subr.mxu0 0.0
    %3691 = vmatpush1.msra.mxu0 0.0
    %3692 = vmatprep.subr.mxu0 0.0
    %3693 = vmatpush1.msra.mxu0 0.0
    %3694 = vmatprep.subr.mxu0 0.0
    %3695 = vmatpush1.msra.mxu0 0.0
    %3696 = vmatprep.subr.mxu0 0.0
    %3697 = vmatpush1.msra.mxu0 0.0
    %3698 = vmatprep.subr.mxu0 0.0
    %3699 = vmatpush1.msra.mxu0 0.0
    %3700 = vmatprep.subr.mxu0 0.0
    %3701 = vmatpush1.msra.mxu0 0.0
    %3702 = vmatprep.subr.mxu0 0.0
    %3703 = vmatpush1.msra.mxu0 0.0
    %3704 = vmatprep.subr.mxu0 0.0
    %3705 = vmatpush1.msra.mxu0 0.0
    %3706 = vmatprep.subr.mxu0 0.0
    %3707 = vmatpush1.msra.mxu0 0.0
    %3708 = vmatprep.subr.mxu0 0.0
    %3709 = vmatpush1.msra.mxu0 0.0
    %3710 = vmatprep.subr.mxu0 0.0
    %3711 = vmatpush1.msra.mxu0 0.0
    %3712 = vmatprep.subr.mxu0 0.0
    %3713 = vmatpush1.msra.mxu0 0.0
    %3714 = vmatprep.subr.mxu0 0.0
    %3715 = vmatpush1.msra.mxu0 0.0
    %3716 = vmatprep.mubr.f32.mxu0 0.0
    %v3717 = vand.u32 %v3021, 4294901760
    %v3718 = vsub.f32 %v3021, %v3717
    %3719 = vmatmul.mubr.f32.gmra.mrb[0].mxu0 %v3718
    %v3720 = vpop.f32.mrb[0].mxu0
    %v3721 = vadd.f32 %v3644, %v3720
    %v3722 = vpop.f32.mrb[0].mxu0
    %v3723 = vadd.f32 %v3646, %v3722
    %3724 = vdwg.mxu0
    %v3725 = vand.u32 %v3007, 4294901760
    %3726 = vmatprep.subr.mxu0 %v3725
    %v3727 = vand.u32 %v3005, 4294901760
    %3728 = vmatpush1.msra.mxu0 %v3727
    %3729 = vmatprep.subr.mxu0 0.0
    %3730 = vmatpush1.msra.mxu0 0.0
    %3731 = vmatprep.subr.mxu0 0.0
    %3732 = vmatpush1.msra.mxu0 0.0
    %3733 = vmatprep.subr.mxu0 0.0
    %3734 = vmatpush1.msra.mxu0 0.0
    %3735 = vmatprep.subr.mxu0 0.0
    %3736 = vmatpush1.msra.mxu0 0.0
    %3737 = vmatprep.subr.mxu0 0.0
    %3738 = vmatpush1.msra.mxu0 0.0
    %3739 = vmatprep.subr.mxu0 0.0
    %3740 = vmatpush1.msra.mxu0 0.0
    %3741 = vmatprep.subr.mxu0 0.0
    %3742 = vmatpush1.msra.mxu0 0.0
    %3743 = vmatprep.subr.mxu0 0.0
    %3744 = vmatpush1.msra.mxu0 0.0
    %3745 = vmatprep.subr.mxu0 0.0
    %3746 = vmatpush1.msra.mxu0 0.0
    %3747 = vmatprep.subr.mxu0 0.0
    %3748 = vmatpush1.msra.mxu0 0.0
    %3749 = vmatprep.subr.mxu0 0.0
    %3750 = vmatpush1.msra.mxu0 0.0
    %3751 = vmatprep.subr.mxu0 0.0
    %3752 = vmatpush1.msra.mxu0 0.0
    %3753 = vmatprep.subr.mxu0 0.0
    %3754 = vmatpush1.msra.mxu0 0.0
    %3755 = vmatprep.subr.mxu0 0.0
    %3756 = vmatpush1.msra.mxu0 0.0
    %3757 = vmatprep.subr.mxu0 0.0
    %3758 = vmatpush1.msra.mxu0 0.0
    %3759 = vmatprep.subr.mxu0 0.0
    %3760 = vmatpush1.msra.mxu0 0.0
    %3761 = vmatprep.subr.mxu0 0.0
    %3762 = vmatpush1.msra.mxu0 0.0
    %3763 = vmatprep.subr.mxu0 0.0
    %3764 = vmatpush1.msra.mxu0 0.0
    %3765 = vmatprep.subr.mxu0 0.0
    %3766 = vmatpush1.msra.mxu0 0.0
    %3767 = vmatprep.subr.mxu0 0.0
    %3768 = vmatpush1.msra.mxu0 0.0
    %3769 = vmatprep.subr.mxu0 0.0
    %3770 = vmatpush1.msra.mxu0 0.0
    %3771 = vmatprep.subr.mxu0 0.0
    %3772 = vmatpush1.msra.mxu0 0.0
    %3773 = vmatprep.subr.mxu0 0.0
    %3774 = vmatpush1.msra.mxu0 0.0
    %3775 = vmatprep.subr.mxu0 0.0
    %3776 = vmatpush1.msra.mxu0 0.0
    %3777 = vmatprep.subr.mxu0 0.0
    %3778 = vmatpush1.msra.mxu0 0.0
    %3779 = vmatprep.subr.mxu0 0.0
    %3780 = vmatpush1.msra.mxu0 0.0
    %3781 = vmatprep.subr.mxu0 0.0
    %3782 = vmatpush1.msra.mxu0 0.0
    %3783 = vmatprep.subr.mxu0 0.0
    %3784 = vmatpush1.msra.mxu0 0.0
    %3785 = vmatprep.subr.mxu0 0.0
    %3786 = vmatpush1.msra.mxu0 0.0
    %3787 = vmatprep.subr.mxu0 0.0
    %3788 = vmatpush1.msra.mxu0 0.0
    %3789 = vmatprep.subr.mxu0 0.0
    %3790 = vmatpush1.msra.mxu0 0.0
    %3791 = vmatprep.mubr.f32.mxu0 0.0
    %v3792 = vand.u32 %v3021, 4294901760
    %v3793 = vsub.f32 %v3021, %v3792
    %v3794 = vand.u32 %v3793, 4294901760
    %3795 = vmatmul.mubr.f32.gmra.mrb[0].mxu0 %v3794
    %v3796 = vpop.f32.mrb[0].mxu0
    %v3797 = vadd.f32 %v3721, %v3796
    %v3798 = vpop.f32.mrb[0].mxu0
    %v3799 = vadd.f32 %v3723, %v3798
    %3800 = vdwg.mxu0
    %v3801 = vand.u32 %v3007, 4294901760
    %v3802 = vsub.f32 %v3007, %v3801
    %v3803 = vand.u32 %v3802, 4294901760
    %3804 = vmatprep.subr.mxu0 %v3803
    %v3805 = vand.u32 %v3005, 4294901760
    %v3806 = vsub.f32 %v3005, %v3805
    %v3807 = vand.u32 %v3806, 4294901760
    %3808 = vmatpush1.msra.mxu0 %v3807
    %3809 = vmatprep.subr.mxu0 0.0
    %3810 = vmatpush1.msra.mxu0 0.0
    %3811 = vmatprep.subr.mxu0 0.0
    %3812 = vmatpush1.msra.mxu0 0.0
    %3813 = vmatprep.subr.mxu0 0.0
    %3814 = vmatpush1.msra.mxu0 0.0
    %3815 = vmatprep.subr.mxu0 0.0
    %3816 = vmatpush1.msra.mxu0 0.0
    %3817 = vmatprep.subr.mxu0 0.0
    %3818 = vmatpush1.msra.mxu0 0.0
    %3819 = vmatprep.subr.mxu0 0.0
    %3820 = vmatpush1.msra.mxu0 0.0
    %3821 = vmatprep.subr.mxu0 0.0
    %3822 = vmatpush1.msra.mxu0 0.0
    %3823 = vmatprep.subr.mxu0 0.0
    %3824 = vmatpush1.msra.mxu0 0.0
    %3825 = vmatprep.subr.mxu0 0.0
    %3826 = vmatpush1.msra.mxu0 0.0
    %3827 = vmatprep.subr.mxu0 0.0
    %3828 = vmatpush1.msra.mxu0 0.0
    %3829 = vmatprep.subr.mxu0 0.0
    %3830 = vmatpush1.msra.mxu0 0.0
    %3831 = vmatprep.subr.mxu0 0.0
    %3832 = vmatpush1.msra.mxu0 0.0
    %3833 = vmatprep.subr.mxu0 0.0
    %3834 = vmatpush1.msra.mxu0 0.0
    %3835 = vmatprep.subr.mxu0 0.0
    %3836 = vmatpush1.msra.mxu0 0.0
    %3837 = vmatprep.subr.mxu0 0.0
    %3838 = vmatpush1.msra.mxu0 0.0
    %3839 = vmatprep.subr.mxu0 0.0
    %3840 = vmatpush1.msra.mxu0 0.0
    %3841 = vmatprep.subr.mxu0 0.0
    %3842 = vmatpush1.msra.mxu0 0.0
    %3843 = vmatprep.subr.mxu0 0.0
    %3844 = vmatpush1.msra.mxu0 0.0
    %3845 = vmatprep.subr.mxu0 0.0
    %3846 = vmatpush1.msra.mxu0 0.0
    %3847 = vmatprep.subr.mxu0 0.0
    %3848 = vmatpush1.msra.mxu0 0.0
    %3849 = vmatprep.subr.mxu0 0.0
    %3850 = vmatpush1.msra.mxu0 0.0
    %3851 = vmatprep.subr.mxu0 0.0
    %3852 = vmatpush1.msra.mxu0 0.0
    %3853 = vmatprep.subr.mxu0 0.0
    %3854 = vmatpush1.msra.mxu0 0.0
    %3855 = vmatprep.subr.mxu0 0.0
    %3856 = vmatpush1.msra.mxu0 0.0
    %3857 = vmatprep.subr.mxu0 0.0
    %3858 = vmatpush1.msra.mxu0 0.0
    %3859 = vmatprep.subr.mxu0 0.0
    %3860 = vmatpush1.msra.mxu0 0.0
    %3861 = vmatprep.subr.mxu0 0.0
    %3862 = vmatpush1.msra.mxu0 0.0
    %3863 = vmatprep.subr.mxu0 0.0
    %3864 = vmatpush1.msra.mxu0 0.0
    %3865 = vmatprep.subr.mxu0 0.0
    %3866 = vmatpush1.msra.mxu0 0.0
    %3867 = vmatprep.subr.mxu0 0.0
    %3868 = vmatpush1.msra.mxu0 0.0
    %3869 = vmatprep.subr.mxu0 0.0
    %3870 = vmatpush1.msra.mxu0 0.0
    %3871 = vmatprep.mubr.f32.mxu0 0.0
    %v3872 = vand.u32 %v3021, 4294901760
    %3873 = vmatmul.mubr.f32.gmra.mrb[0].mxu0 %v3872
    %v3874 = vpop.f32.mrb[0].mxu0
    %v3875 = vadd.f32 %v3797, %v3874
    %v3876 = vpop.f32.mrb[0].mxu0
    %v3877 = vadd.f32 %v3799, %v3876
    %3878 = vdwg.mxu0
    %v3879 = vand.u32 %v3007, 4294901760
    %3880 = vmatprep.subr.mxu0 %v3879
    %v3881 = vand.u32 %v3005, 4294901760
    %3882 = vmatpush1.msra.mxu0 %v3881
    %3883 = vmatprep.subr.mxu0 0.0
    %3884 = vmatpush1.msra.mxu0 0.0
    %3885 = vmatprep.subr.mxu0 0.0
    %3886 = vmatpush1.msra.mxu0 0.0
    %3887 = vmatprep.subr.mxu0 0.0
    %3888 = vmatpush1.msra.mxu0 0.0
    %3889 = vmatprep.subr.mxu0 0.0
    %3890 = vmatpush1.msra.mxu0 0.0
    %3891 = vmatprep.subr.mxu0 0.0
    %3892 = vmatpush1.msra.mxu0 0.0
    %3893 = vmatprep.subr.mxu0 0.0
    %3894 = vmatpush1.msra.mxu0 0.0
    %3895 = vmatprep.subr.mxu0 0.0
    %3896 = vmatpush1.msra.mxu0 0.0
    %3897 = vmatprep.subr.mxu0 0.0
    %3898 = vmatpush1.msra.mxu0 0.0
    %3899 = vmatprep.subr.mxu0 0.0
    %3900 = vmatpush1.msra.mxu0 0.0
    %3901 = vmatprep.subr.mxu0 0.0
    %3902 = vmatpush1.msra.mxu0 0.0
    %3903 = vmatprep.subr.mxu0 0.0
    %3904 = vmatpush1.msra.mxu0 0.0
    %3905 = vmatprep.subr.mxu0 0.0
    %3906 = vmatpush1.msra.mxu0 0.0
    %3907 = vmatprep.subr.mxu0 0.0
    %3908 = vmatpush1.msra.mxu0 0.0
    %3909 = vmatprep.subr.mxu0 0.0
    %3910 = vmatpush1.msra.mxu0 0.0
    %3911 = vmatprep.subr.mxu0 0.0
    %3912 = vmatpush1.msra.mxu0 0.0
    %3913 = vmatprep.subr.mxu0 0.0
    %3914 = vmatpush1.msra.mxu0 0.0
    %3915 = vmatprep.subr.mxu0 0.0
    %3916 = vmatpush1.msra.mxu0 0.0
    %3917 = vmatprep.subr.mxu0 0.0
    %3918 = vmatpush1.msra.mxu0 0.0
    %3919 = vmatprep.subr.mxu0 0.0
    %3920 = vmatpush1.msra.mxu0 0.0
    %3921 = vmatprep.subr.mxu0 0.0
    %3922 = vmatpush1.msra.mxu0 0.0
    %3923 = vmatprep.subr.mxu0 0.0
    %3924 = vmatpush1.msra.mxu0 0.0
    %3925 = vmatprep.subr.mxu0 0.0
    %3926 = vmatpush1.msra.mxu0 0.0
    %3927 = vmatprep.subr.mxu0 0.0
    %3928 = vmatpush1.msra.mxu0 0.0
    %3929 = vmatprep.subr.mxu0 0.0
    %3930 = vmatpush1.msra.mxu0 0.0
    %3931 = vmatprep.subr.mxu0 0.0
    %3932 = vmatpush1.msra.mxu0 0.0
    %3933 = vmatprep.subr.mxu0 0.0
    %3934 = vmatpush1.msra.mxu0 0.0
    %3935 = vmatprep.subr.mxu0 0.0
    %3936 = vmatpush1.msra.mxu0 0.0
    %3937 = vmatprep.subr.mxu0 0.0
    %3938 = vmatpush1.msra.mxu0 0.0
    %3939 = vmatprep.subr.mxu0 0.0
    %3940 = vmatpush1.msra.mxu0 0.0
    %3941 = vmatprep.subr.mxu0 0.0
    %3942 = vmatpush1.msra.mxu0 0.0
    %3943 = vmatprep.subr.mxu0 0.0
    %3944 = vmatpush1.msra.mxu0 0.0
    %3945 = vmatprep.mubr.f32.mxu0 0.0
    %v3946 = vand.u32 %v3021, 4294901760
    %3947 = vmatmul.mubr.f32.gmra.mrb[0].mxu0 %v3946
    %v3948 = vpop.f32.mrb[0].mxu0
    %v3949 = vadd.f32 %v3875, %v3948
    %v3950 = vpop.f32.mrb[0].mxu0
    %v3951 = vadd.f32 %v3877, %v3950
    %3952 = vdwg.mxu0
    %v3953 = vxor.u32 %v3484, 2147483648
    %v3954 = vxor.u32 %v3486, 2147483648
    %v3955 = vxor.u32 %v3949, 2147483648
    %v3956 = vxor.u32 %v3951, 2147483648
    %v3957 = vmul.f32 %v3953, 1.442695
    %v3958 = vpow.pop %v3957
    %v3959 = vmul.f32 %v3954, 1.442695
    %v3960 = vpow.pop %v3959
    %v3961 = vmul.f32 %v3955, 1.442695
    %v3962 = vpow.pop %v3961
    %v3963 = vmul.f32 %v3956, 1.442695
    %v3964 = vpow.pop %v3963
    %v3965 = vadd.f32 %v3958, 1.0
    %v3966 = vadd.f32 %v3960, 1.0
    %v3967 = vadd.f32 %v3962, 1.0
    %v3968 = vadd.f32 %v3964, 1.0
    %v3969 = vrcp.pop %v3965
    %v3970 = vmul.f32 1.0, %v3969
    %v3971 = vrcp.pop %v3966
    %v3972 = vmul.f32 1.0, %v3971
    %v3973 = vrcp.pop %v3967
    %v3974 = vmul.f32 1.0, %v3973
    %v3975 = vrcp.pop %v3968
    %v3976 = vmul.f32 1.0, %v3975
    %v3981 = vcombine.low %v3970, %v3972
    %v3982 = vcombine.low %v3974, %v3976
    %v3984 = vunpack.c.l.s4 1966171168
    %v3985 = vunpack.c.0.s8 %v3984
    %v3986 = vlaneseq
    %v3987 = vshrl.u32 %v3986, 7
    %v3988 = vsub.s32 %v3985, %v3987
    %v3989 = vrot.slane %v3981, %v3988
    %v3991 = vunpack.c.l.s4 1966171168
    %v3992 = vunpack.c.0.s8 %v3991
    %v3993 = vlaneseq
    %v3994 = vshrl.u32 %v3993, 7
    %v3995 = vsub.s32 %v3992, %v3994
    %v3996 = vrot.slane %v3982, %v3995
    %v3997 = vcombine.low %v3989, %v3996
    %v3999 = vunpack.c.l.s4 1966171168
    %v4000 = vunpack.c.0.s8 %v3999
    %v4001 = vlaneseq
    %v4002 = vshrl.u32 %v4001, 7
    %v4003 = vsub.s32 %v4000, %v4002
    %v4004 = vrot.slane %v3997, %v4003
    %v4006 = vlaneseq
    %vm4007 = vcmp.ge.s32.totalorder %v4006, 0
    %vm4008 = vcmp.lt.s32.totalorder %v4006, 512
    %vm4009 = vmand %vm4007, %vm4008
    %4010 = vst.msk [vmem:[#allocation3] sm:$0xf] %vm4009, %v4004
    // Predicated region
    $region30: #{mlp_forward.1} parent=1 // pred_check
      _
    $region31: #{mlp_forward.1} parent=1 // pred_check_branch
      %4012 = sbr.rel (0) target = $region33
    $region32: #{mlp_forward.1} parent=1 // pred_region
      %s4014 = ssub.s32 64, 64
      %4015 = vsyncadd [#allocation4], %s4014
      %s4017 = sshll.u32 [#allocation3], 4
      %s4018 = int_to_ptr.vmem [resolvable:$true] %s4017
      %4020 = dma.vmem_to_hbm [thread:$0]  %s4018, 64, %s7, [#allocation4]
    $region33: #{mlp_forward.1} parent=1 // pred_fallthru
      _
    // Predicated region
    $region34: #{mlp_forward.1} parent=1 // pred_check
      _
    $region35: #{mlp_forward.1} parent=1 // pred_check_branch
      %4022 = sbr.rel (0) target = $region37
    $region36: #{mlp_forward.1} parent=1 // pred_region
      %4023 = dma.done [#allocation4], 64
    $region37: #{mlp_forward.1} parent=1 // pred_fallthru
      _
    %4024 = vsyncpa [#allocation4], 1

</llo_original>
